<compile_context>
chip_gen: v7x
topology: tpu7x:2x2x1
jax: 0.10.0
libtpu: 0.0.40
codegen_flags: <defaults>
</compile_context>

<pallas_src>
import functools

import numpy as np
import jax
import jax.numpy as jnp
from jax import lax
from jax.experimental import pallas as pl
from jax.experimental.pallas import tpu as pltpu

_VMEM_LIMIT = 64 * 1024 * 1024


# ---------------------------------------------------------------------------
# Kernel 1: fused  AvgPool2d(r2,1,r2//2) -> Conv3x3(dil=r1, pad=r1, no bias)
#                  -> folded BatchNorm -> ReLU            (one batch per step)
# ---------------------------------------------------------------------------
def _level_kernel(x_ref, q_ref, w_ref, scale_ref, shift_ref, out_ref,
                  rs_ref, pp_ref, acc_ref, *, dil, r2, H, W):
    # x_ref:  (H, W, Cin) bf16      input feature map
    # q_ref:  (3W, W) bf16          stacked, kx-shifted 0/1 window-sum matrices
    # w_ref:  (3, 3, Cin, Cout) bf16
    # scale/shift: (1, Cout) f32    folded BN affine (1/r2^2 folded into scale)
    # rs_ref: (W, Cin) f32          vertical sliding-window running sum
    # pp_ref: (3, H+2*dil, W, Cin) bf16  per-kx pooled planes with row halo only
    # acc_ref:(H*W, Cout) f32       conv accumulator
    Cin = x_ref.shape[-1]
    Cout = w_ref.shape[-1]
    p = r2 // 2

    # zero only the vertical conv halo rows (interior is fully overwritten)
    zrow = jnp.zeros((dil, W, Cin), pp_ref.dtype)
    for kx in range(3):
        pp_ref[kx, 0:dil] = zrow
        pp_ref[kx, dil + H:dil + H + dil] = zrow

    # vertical sliding-window running sum, window for output row 0
    rs_ref[...] = jnp.zeros_like(rs_ref)

    def _init(r, c):
        rs_ref[...] += x_ref[r].astype(jnp.float32)
        return c
    lax.fori_loop(0, min(p + 1, H), _init, 0)

    q = q_ref[...]                       # (3W, W) bf16, exact 0/1 entries

    def _emit(i):
        # horizontal window-sum for all three kx shifts in ONE MXU matmul
        stacked = jnp.dot(q, rs_ref[...].astype(jnp.bfloat16),
                          preferred_element_type=jnp.float32)
        st = stacked.astype(pp_ref.dtype)        # (3W, Cin)
        for kx in range(3):                      # aligned sublane slices (W-multiples)
            pp_ref[kx, dil + i] = st[kx * W:(kx + 1) * W]

    _emit(0)

    def _row(i, c):                              # slide the vertical window
        @pl.when(i + p < H)
        def _():
            rs_ref[...] += x_ref[i + p].astype(jnp.float32)

        @pl.when(i - p - 1 >= 0)
        def _():
            rs_ref[...] -= x_ref[i - p - 1].astype(jnp.float32)

        _emit(i)
        return c
    lax.fori_loop(1, H, _row, 0)

    # dilated 3x3 conv: 9 aligned (H*W, Cin) @ (Cin, Cout) MXU matmuls
    acc_ref[...] = jnp.zeros_like(acc_ref)
    for ky in range(3):
        for kx in range(3):
            patch = pp_ref[kx, ky * dil:ky * dil + H]   # leading-axis slice only
            acc_ref[...] += jnp.dot(patch.reshape(H * W, Cin), w_ref[ky, kx],
                                    preferred_element_type=jnp.float32)

    y = jnp.maximum(acc_ref[...] * scale_ref[...] + shift_ref[...], 0.0)
    out_ref[...] = y.reshape(H, W, Cout).astype(out_ref.dtype)


def _pool_shift_matrix(width, k, dil):
    """Stacked (3W, W) 0/1 matrices: horizontal window-sum for
    AvgPool2d(k, stride=1, pad=k//2, count_include_pad=True) composed with the
    kx*dil horizontal shift of the dilated 3x3 conv (zero outside the image).
    The 1/k^2 factor is folded into the BN scale by the wrapper."""
    p = k // 2
    qpool = np.zeros((width, width), np.float32)
    for j in range(width):
        lo = max(0, j - p)
        hi = min(width - 1, j + p)
        qpool[j, lo:hi + 1] = 1.0
    mats = []
    for kx in range(3):
        dx = (kx - 1) * dil
        qs = np.zeros((width, width), np.float32)
        for j in range(width):
            jj = j + dx
            if 0 <= jj < width:
                qs[j] = qpool[jj]
        mats.append(qs)
    return np.concatenate(mats, axis=0)          # (3W, W), exact in bf16


def tfa_level(x, w, scale, shift, r1_i, r2_i):
    """One TFA pyramid level: fused AvgPool + dilated Conv3x3 + BN + ReLU (NHWC)."""
    assert r2_i % 2 == 1, "TKCNet configs use odd pooling kernels"
    B, H, W, Cin = x.shape
    Cout = w.shape[-1]
    q = jnp.asarray(_pool_shift_matrix(W, r2_i, r1_i), jnp.bfloat16)
    scale_eff = scale * (1.0 / float(r2_i * r2_i))      # fold AvgPool 1/k^2
    kern = functools.partial(_level_kernel, dil=r1_i, r2=r2_i, H=H, W=W)
    return pl.pallas_call(
        kern,
        out_shape=jax.ShapeDtypeStruct((B, H, W, Cout), jnp.bfloat16),
        grid=(B,),
        in_specs=[
            pl.BlockSpec((None, H, W, Cin), lambda b: (b, 0, 0, 0)),
            pl.BlockSpec((3 * W, W), lambda b: (0, 0)),
            pl.BlockSpec((3, 3, Cin, Cout), lambda b: (0, 0, 0, 0)),
            pl.BlockSpec((1, Cout), lambda b: (0, 0)),
            pl.BlockSpec((1, Cout), lambda b: (0, 0)),
        ],
        out_specs=pl.BlockSpec((None, H, W, Cout), lambda b: (b, 0, 0, 0)),
        scratch_shapes=[
            pltpu.VMEM((W, Cin), jnp.float32),
            pltpu.VMEM((3, H + 2 * r1_i, W, Cin), jnp.bfloat16),
            pltpu.VMEM((H * W, Cout), jnp.float32),
        ],
        compiler_params=pltpu.CompilerParams(
            dimension_semantics=("parallel",),
            vmem_limit_bytes=_VMEM_LIMIT),
    )(x, q, w, scale_eff, shift)


# ---------------------------------------------------------------------------
# Kernel 2: concat-free conv51 (3x3, pad=1) accumulated over the 4 sources
#           + BN + ReLU + Dropout(identity) + fused 1x1 classifier conv + bias
#           (row shift on the output side; column shift applied exactly twice)
# ---------------------------------------------------------------------------
def _head_kernel(*refs, H, W, n_src):
    srcs = refs[:n_src]                                   # (H, W, Cs) bf16 each
    ws = refs[n_src:2 * n_src]                            # (3, 3, Cs, inter) bf16
    scale_ref, shift_ref, w6_ref, b6_ref = refs[2 * n_src:2 * n_src + 4]
    out_ref = refs[2 * n_src + 4]                         # (H, W, 128) f32
    acc_ref = refs[2 * n_src + 5]                         # (3, H, W, inter) f32
    sbuf_ref = refs[2 * n_src + 6]                        # (H, W+1, inter) f32

    inter = acc_ref.shape[-1]
    acc_ref[...] = jnp.zeros_like(acc_ref)

    for src, wr in zip(srcs, ws):
        Cs = src.shape[-1]
        xin = src[...].reshape(H * W, Cs)                 # free merge (W%16==0)
        for ky in range(3):
            for kx in range(3):
                y = jnp.dot(xin, wr[ky, kx],
                            preferred_element_type=jnp.float32
                            ).reshape(H, W, inter)
                if ky == 0:        # dy = -1: acc[i] += y[i-1]
                    acc_ref[kx, 1:H] += y[0:H - 1]
                elif ky == 1:      # dy = 0
                    acc_ref[kx] += y
                else:              # dy = +1: acc[i] += y[i+1]
                    acc_ref[kx, 0:H - 1] += y[1:H]

    # column (kx) shift, applied once per direction via a small staging buffer
    zcol = jnp.zeros((H, 1, inter), jnp.float32)
    ypre = acc_ref[1]
    # R0[:, j] = acc0[:, j-1], R0[:, 0] = 0
    sbuf_ref[:, 0:1] = zcol
    sbuf_ref[:, 1:W + 1] = acc_ref[0]
    ypre = ypre + sbuf_ref[:, 0:W]
    # R2[:, j] = acc2[:, j+1], R2[:, W-1] = 0
    sbuf_ref[:, 0:W] = acc_ref[2]
    sbuf_ref[:, W:W + 1] = zcol
    ypre = ypre + sbuf_ref[:, 1:W + 1]

    y = jnp.maximum(ypre * scale_ref[...] + shift_ref[...], 0.0)
    # Dropout2d(0.1) -> identity at inference; fused 1x1 classifier (lane-dense,
    # Cout padded to 128 so the output store is an unmasked vst).
    yl = y.reshape(H * W, inter).astype(jnp.bfloat16)
    out = jnp.dot(yl, w6_ref[...], preferred_element_type=jnp.float32) + b6_ref[...]
    out_ref[...] = out.reshape(H, W, out_ref.shape[-1]).astype(out_ref.dtype)


def tfa_fuse_head(feats, w_split, scale, shift, w6, b6, nclass_pad=128):
    B, H, W, _ = feats[0].shape
    inter = w_split[0].shape[-1]
    nclass = w6.shape[-1]
    n_src = len(feats)

    # pad the 1x1 classifier to 128 output lanes (sliced back below)
    w6p = jnp.zeros((inter, nclass_pad), jnp.bfloat16)
    w6p = w6p.at[:, :nclass].set(w6.astype(jnp.bfloat16))
    b6p = jnp.zeros((1, nclass_pad), jnp.float32).at[:, :nclass].set(b6)

    in_specs = []
    for f in feats:
        C = f.shape[-1]
        in_specs.append(pl.BlockSpec((None, H, W, C), lambda b: (b, 0, 0, 0)))
    for wsl in w_split:
        in_specs.append(pl.BlockSpec(wsl.shape, lambda b: (0, 0, 0, 0)))
    in_specs += [
        pl.BlockSpec((1, inter), lambda b: (0, 0)),
        pl.BlockSpec((1, inter), lambda b: (0, 0)),
        pl.BlockSpec((inter, nclass_pad), lambda b: (0, 0)),
        pl.BlockSpec((1, nclass_pad), lambda b: (0, 0)),
    ]

    scratch = [
        pltpu.VMEM((3, H, W, inter), jnp.float32),
        pltpu.VMEM((H, W + 1, inter), jnp.float32),
    ]

    kern = functools.partial(_head_kernel, H=H, W=W, n_src=n_src)
    out = pl.pallas_call(
        kern,
        out_shape=jax.ShapeDtypeStruct((B, H, W, nclass_pad), jnp.float32),
        grid=(B,),
        in_specs=in_specs,
        out_specs=pl.BlockSpec((None, H, W, nclass_pad), lambda b: (b, 0, 0, 0)),
        scratch_shapes=scratch,
        compiler_params=pltpu.CompilerParams(
            dimension_semantics=("parallel",),
            vmem_limit_bytes=_VMEM_LIMIT),
    )(*feats, *w_split, scale, shift, w6p, b6p)
    return out[..., :nclass]


# ---------------------------------------------------------------------------
# Kernel 3: bilinear upsample (align_corners=True), NHWC, row-tiled over Hout
# ---------------------------------------------------------------------------
def _bilinear_kernel(x_ref, ah_ref, awe_ref, out_ref):
    # x_ref: (h, w*C) bf16, ah: (th, h) bf16, awe: (w*C, Wout*C) bf16
    t = jnp.dot(ah_ref[...], x_ref[...], preferred_element_type=jnp.float32)
    out_ref[...] = jnp.dot(t.astype(jnp.bfloat16), awe_ref[...],
                           preferred_element_type=jnp.float32).astype(out_ref.dtype)


def _interp_matrix(n_out, n_in):
    """align_corners=True bilinear interpolation matrix (n_out x n_in)."""
    a = np.zeros((n_out, n_in), dtype=np.float32)
    if n_out == 1:
        a[0, 0] = 1.0
        return a
    scale = (n_in - 1) / (n_out - 1)
    for i in range(n_out):
        src = i * scale
        i0 = min(int(np.floor(src)), n_in - 1)
        i1 = min(i0 + 1, n_in - 1)
        f = src - i0
        a[i, i0] += 1.0 - f
        a[i, i1] += f
    return a


def bilinear_upsample_nhwc(y, out_hw):
    B, h, w, C = y.shape
    Hout, Wout = out_hw
    th = Hout
    for cand in (128, 64, 32, 16, 8):
        if Hout % cand == 0 and cand < Hout:
            th = cand
            break
    ah = jnp.asarray(_interp_matrix(Hout, h), jnp.bfloat16)            # (Hout, h)
    aw = _interp_matrix(Wout, w)                                       # (Wout, w)
    # kron(Aw^T, I_C): column interpolation on the flattened (w*C) lane axis.
    # TODO(synk): for large C, apply the W interpolation per row-tile without
    # the kron to avoid the C-fold zero inflation.
    awe = jnp.asarray(np.kron(aw.T, np.eye(C, dtype=np.float32)), jnp.bfloat16)
    y2 = y.astype(jnp.bfloat16).reshape(B, h, w * C)
    out2 = pl.pallas_call(
        _bilinear_kernel,
        out_shape=jax.ShapeDtypeStruct((B, Hout, Wout * C), jnp.float32),
        grid=(B, Hout // th),
        in_specs=[
            pl.BlockSpec((None, h, w * C), lambda b, r: (b, 0, 0)),
            pl.BlockSpec((th, h), lambda b, r: (r, 0)),
            pl.BlockSpec((w * C, Wout * C), lambda b, r: (0, 0)),
        ],
        out_specs=pl.BlockSpec((None, th, Wout * C), lambda b, r: (b, r, 0)),
        compiler_params=pltpu.CompilerParams(
            dimension_semantics=("parallel", "parallel"),
            vmem_limit_bytes=_VMEM_LIMIT),
    )(y2, ah, awe)
    return out2.reshape(B, Hout, Wout, C)


# ---------------------------------------------------------------------------
# Parameter initialization (matches the PyTorch module's init scheme)
# ---------------------------------------------------------------------------
def _kaiming_conv(key, kh, kw, cin, cout):
    # kaiming_normal_(mode='fan_out', nonlinearity='relu'): std = sqrt(2/fan_out)
    fan_out = cout * kh * kw
    std = float(np.sqrt(2.0 / fan_out))
    return std * jax.random.normal(key, (kh, kw, cin, cout), dtype=jnp.float32)


def _bn_affine(c, eps=1e-5):
    # SynchronizedBatchNorm2d folded for inference with default running stats
    # (gamma=1, beta=0, mean=0, var=1).  TODO(synk): fold real checkpoint stats.
    gamma = jnp.ones((1, c), jnp.float32)
    beta = jnp.zeros((1, c), jnp.float32)
    mean = jnp.zeros((1, c), jnp.float32)
    var = jnp.ones((1, c), jnp.float32)
    scale = gamma / jnp.sqrt(var + eps)
    shift = beta - mean * scale
    return scale, shift


def init_tfa_head_params(key, in_channels, nclass, r1):
    inter = in_channels // 4
    keys = jax.random.split(key, 9)
    params = {"level_w": [], "level_bn": []}
    cin = in_channels                      # reference hardcodes 2048 == in_channels
    for i in range(len(r1)):
        params["level_w"].append(
            _kaiming_conv(keys[i], 3, 3, cin, inter).astype(jnp.bfloat16))
        params["level_bn"].append(_bn_affine(inter))
        cin = inter
    # conv51 weight pre-split along Cin by concat source: [x, lvl1, lvl2, lvl3]
    cat_cins = [in_channels] + [inter] * len(r1)
    params["w51_split"] = [
        _kaiming_conv(keys[3 + s], 3, 3, c, inter).astype(jnp.bfloat16)
        for s, c in enumerate(cat_cins)]
    params["bn51"] = _bn_affine(inter)
    params["w6"] = _kaiming_conv(keys[7], 1, 1, inter, nclass).reshape(inter, nclass)
    bound = 1.0 / float(np.sqrt(inter))    # PyTorch default conv bias init
    params["b6"] = jax.random.uniform(keys[8], (1, nclass), jnp.float32,
                                      -bound, bound)
    return params


# ---------------------------------------------------------------------------
# Forward pass
# ---------------------------------------------------------------------------
def tfa_head_forward(params, x_nhwc, r1, r2):
    feats = [x_nhwc]
    cur = x_nhwc
    for i in range(len(r1)):
        scale, shift = params["level_bn"][i]
        cur = tfa_level(cur, params["level_w"][i], scale, shift, r1[i], r2[i])
        feats.append(cur)
    s51, sh51 = params["bn51"]
    return tfa_fuse_head(feats, params["w51_split"], s51, sh51,
                         params["w6"], params["b6"])


def tkcnet_forward(params, feat_nchw, imsize, r1, r2):
    # feat_nchw plays the role of backbone.get_layers()[-1]  (B, C, h, w)
    x = jnp.transpose(feat_nchw, (0, 2, 3, 1)).astype(jnp.bfloat16)   # -> NHWC bf16
    y = tfa_head_forward(params, x, r1, r2)                           # (B,h,w,ncls) f32
    up = bilinear_upsample_nhwc(y, imsize)                            # (B,H,W,ncls)
    return jnp.transpose(up, (0, 3, 1, 2))                            # -> NCHW


# ---------------------------------------------------------------------------
# Pure-JAX f32 reference (numerics check)
# ---------------------------------------------------------------------------
def reference_forward(params, feat_nchw, imsize, r1, r2):
    x = jnp.transpose(feat_nchw, (0, 2, 3, 1)).astype(jnp.float32)

    def ref_avgpool(v, k):
        p = k // 2
        s = jax.lax.reduce_window(v, 0.0, jax.lax.add, (1, k, k, 1),
                                  (1, 1, 1, 1),
                                  [(0, 0), (p, p), (p, p), (0, 0)])
        return s / float(k * k)

    def ref_conv_bn_relu(v, w, scale, shift, dil):
        y = jax.lax.conv_general_dilated(
            v, w.astype(jnp.float32), (1, 1), [(dil, dil), (dil, dil)],
            rhs_dilation=(dil, dil), dimension_numbers=("NHWC", "HWIO", "NHWC"))
        return jnp.maximum(y * scale + shift, 0.0)

    outs = [x]
    cur = x
    for i in range(len(r1)):
        cur = ref_conv_bn_relu(ref_avgpool(cur, r2[i]), params["level_w"][i],
                               *params["level_bn"][i], r1[i])
        outs.append(cur)
    cat = jnp.concatenate(outs, -1)
    w51 = jnp.concatenate([w.astype(jnp.float32) for w in params["w51_split"]],
                          axis=2)
    y = ref_conv_bn_relu(cat, w51, *params["bn51"], 1)
    y = jnp.einsum("bhwi,io->bhwo", y, params["w6"]) + params["b6"]
    ah = jnp.asarray(_interp_matrix(imsize[0], y.shape[1]))
    aw = jnp.asarray(_interp_matrix(imsize[1], y.shape[2]))
    out = jnp.einsum("Ih,bhwc->bIwc", ah, y)
    out = jnp.einsum("Jw,bIwc->bIJc", aw, out)
    return jnp.transpose(out, (0, 3, 1, 2))


# ---------------------------------------------------------------------------
if __name__ == "__main__":
    key = jax.random.PRNGKey(0)
    k_feat, k_par = jax.random.split(key)

    # Small synthetic config for correctness (the real model uses in_channels=2048,
    # stride-8 feature maps; that requires the production tiling noted above).
    B, C_in, h, w = 2, 32, 16, 16
    nclass = 4
    r1 = [10, 20, 30]        # TFA='l'
    r2 = [7, 15, 25]
    imsize = (32, 32)        # original image spatial size -> upsample target

    feat = jax.random.normal(k_feat, (B, C_in, h, w), dtype=jnp.float32)
    params = init_tfa_head_params(k_par, C_in, nclass, r1)

    out = jax.block_until_ready(tkcnet_forward(params, feat, imsize, r1, r2))
    assert out.shape == (B, nclass, imsize[0], imsize[1]), out.shape

    ref = jax.block_until_ready(reference_forward(params, feat, imsize, r1, r2))
    # The kernel path is bf16 end-to-end (activations, MXU operands, interp
    # matrices) with f32 accumulation; the reference is pure f32, hence the
    # relaxed tolerances (errors compound across the 3 chained levels).
    np.testing.assert_allclose(np.asarray(out), np.asarray(ref),
                               rtol=4e-2, atol=1.2e-1)
    print("KERNEL_OK")
</pallas_src>

<mosaic_0001>
module attributes {stable_mosaic.version = 11 : i64} {
  func.func @_level_kernel(%arg0: i32, %arg1: memref<1x16x16x32xbf16, #tpu.memory_space<vmem>>, %arg2: memref<48x16xbf16, #tpu.memory_space<vmem>>, %arg3: memref<3x3x32x8xbf16, #tpu.memory_space<vmem>>, %arg4: memref<1x8xf32, #tpu.memory_space<vmem>>, %arg5: memref<1x8xf32, #tpu.memory_space<vmem>>, %arg6: memref<1x16x16x8xbf16, #tpu.memory_space<vmem>>, %arg7: memref<16x32xf32, #tpu.memory_space<vmem>>, %arg8: memref<3x36x16x32xbf16, #tpu.memory_space<vmem>>, %arg9: memref<256x8xf32, #tpu.memory_space<vmem>>) attributes {dimension_semantics = [#tpu.dimension_semantics<parallel>], iteration_bounds = array<i64: 2>, scalar_prefetch = 0 : i64, scratch_operands = 3 : i64, tpu.core_type = #tpu.core_type<tc>, window_params = [{transform_indices = @transform_0, window_bounds = array<i64: 1, 16, 16, 32>}, {pipeline_mode = #tpu.pipeline_mode<synchronous>, transform_indices = @transform_1, window_bounds = array<i64: 48, 16>}, {pipeline_mode = #tpu.pipeline_mode<synchronous>, transform_indices = @transform_2, window_bounds = array<i64: 3, 3, 32, 8>}, {pipeline_mode = #tpu.pipeline_mode<synchronous>, transform_indices = @transform_3, window_bounds = array<i64: 1, 8>}, {pipeline_mode = #tpu.pipeline_mode<synchronous>, transform_indices = @transform_4, window_bounds = array<i64: 1, 8>}, {transform_indices = @transform_5, window_bounds = array<i64: 1, 16, 16, 8>}]} {
    %cst = arith.constant 0.000000e+00 : bf16
    %0 = vector.broadcast %cst : bf16 to vector<10x16x32xbf16>
    %c0 = arith.constant 0 : index
    %c0_0 = arith.constant 0 : index
    %c0_1 = arith.constant 0 : index
    %c0_2 = arith.constant 0 : index
    %1 = vector.load %arg8[%c0, %c0_0, %c0_1, %c0_2] : memref<3x36x16x32xbf16, #tpu.memory_space<vmem>>, vector<1x10x16x32xbf16>
    %2 = vector.shape_cast %1 : vector<1x10x16x32xbf16> to vector<10x16x32xbf16>
    %3 = vector.shape_cast %0 : vector<10x16x32xbf16> to vector<1x10x16x32xbf16>
    tpu.vector_store %arg8[%c0, %c0_0, %c0_1, %c0_2], %3 {strides = array<i32>} : memref<3x36x16x32xbf16, #tpu.memory_space<vmem>>, vector<1x10x16x32xbf16>,
    %c0_3 = arith.constant 0 : index
    %c26 = arith.constant 26 : index
    %c0_4 = arith.constant 0 : index
    %c0_5 = arith.constant 0 : index
    %4 = vector.load %arg8[%c0_3, %c26, %c0_4, %c0_5] : memref<3x36x16x32xbf16, #tpu.memory_space<vmem>>, vector<1x10x16x32xbf16>
    %5 = vector.shape_cast %4 : vector<1x10x16x32xbf16> to vector<10x16x32xbf16>
    %6 = vector.shape_cast %0 : vector<10x16x32xbf16> to vector<1x10x16x32xbf16>
    tpu.vector_store %arg8[%c0_3, %c26, %c0_4, %c0_5], %6 {strides = array<i32>} : memref<3x36x16x32xbf16, #tpu.memory_space<vmem>>, vector<1x10x16x32xbf16>,
    %c1 = arith.constant 1 : index
    %c0_6 = arith.constant 0 : index
    %c0_7 = arith.constant 0 : index
    %c0_8 = arith.constant 0 : index
    %7 = vector.load %arg8[%c1, %c0_6, %c0_7, %c0_8] : memref<3x36x16x32xbf16, #tpu.memory_space<vmem>>, vector<1x10x16x32xbf16>
    %8 = vector.shape_cast %7 : vector<1x10x16x32xbf16> to vector<10x16x32xbf16>
    %9 = vector.shape_cast %0 : vector<10x16x32xbf16> to vector<1x10x16x32xbf16>
    tpu.vector_store %arg8[%c1, %c0_6, %c0_7, %c0_8], %9 {strides = array<i32>} : memref<3x36x16x32xbf16, #tpu.memory_space<vmem>>, vector<1x10x16x32xbf16>,
    %c1_9 = arith.constant 1 : index
    %c26_10 = arith.constant 26 : index
    %c0_11 = arith.constant 0 : index
    %c0_12 = arith.constant 0 : index
    %10 = vector.load %arg8[%c1_9, %c26_10, %c0_11, %c0_12] : memref<3x36x16x32xbf16, #tpu.memory_space<vmem>>, vector<1x10x16x32xbf16>
    %11 = vector.shape_cast %10 : vector<1x10x16x32xbf16> to vector<10x16x32xbf16>
    %12 = vector.shape_cast %0 : vector<10x16x32xbf16> to vector<1x10x16x32xbf16>
    tpu.vector_store %arg8[%c1_9, %c26_10, %c0_11, %c0_12], %12 {strides = array<i32>} : memref<3x36x16x32xbf16, #tpu.memory_space<vmem>>, vector<1x10x16x32xbf16>,
    %c2 = arith.constant 2 : index
    %c0_13 = arith.constant 0 : index
    %c0_14 = arith.constant 0 : index
    %c0_15 = arith.constant 0 : index
    %13 = vector.load %arg8[%c2, %c0_13, %c0_14, %c0_15] : memref<3x36x16x32xbf16, #tpu.memory_space<vmem>>, vector<1x10x16x32xbf16>
    %14 = vector.shape_cast %13 : vector<1x10x16x32xbf16> to vector<10x16x32xbf16>
    %15 = vector.shape_cast %0 : vector<10x16x32xbf16> to vector<1x10x16x32xbf16>
    tpu.vector_store %arg8[%c2, %c0_13, %c0_14, %c0_15], %15 {strides = array<i32>} : memref<3x36x16x32xbf16, #tpu.memory_space<vmem>>, vector<1x10x16x32xbf16>,
    %c2_16 = arith.constant 2 : index
    %c26_17 = arith.constant 26 : index
    %c0_18 = arith.constant 0 : index
    %c0_19 = arith.constant 0 : index
    %16 = vector.load %arg8[%c2_16, %c26_17, %c0_18, %c0_19] : memref<3x36x16x32xbf16, #tpu.memory_space<vmem>>, vector<1x10x16x32xbf16>
    %17 = vector.shape_cast %16 : vector<1x10x16x32xbf16> to vector<10x16x32xbf16>
    %18 = vector.shape_cast %0 : vector<10x16x32xbf16> to vector<1x10x16x32xbf16>
    tpu.vector_store %arg8[%c2_16, %c26_17, %c0_18, %c0_19], %18 {strides = array<i32>} : memref<3x36x16x32xbf16, #tpu.memory_space<vmem>>, vector<1x10x16x32xbf16>,
    %cst_20 = arith.constant 0.000000e+00 : f32
    %19 = vector.broadcast %cst_20 : f32 to vector<16x32xf32>
    %c0_21 = arith.constant 0 : index
    %c0_22 = arith.constant 0 : index
    %20 = vector.load %arg7[%c0_21, %c0_22] : memref<16x32xf32, #tpu.memory_space<vmem>>, vector<16x32xf32>
    tpu.vector_store %arg7[%c0_21, %c0_22], %19 {strides = array<i32>} : memref<16x32xf32, #tpu.memory_space<vmem>>, vector<16x32xf32>,
    %c0_i32 = arith.constant 0 : i32
    %c4_i32 = arith.constant 4 : i32
    %21 = arith.addi %c0_i32, %c4_i32 : i32
    %c1_i32 = arith.constant 1 : i32
    scf.for %arg10 = %c0_i32 to %21 step %c1_i32  : i32 {
      %c0_173 = arith.constant 0 : index
      %c0_174 = arith.constant 0 : index
      %137 = vector.load %arg7[%c0_173, %c0_174] : memref<16x32xf32, #tpu.memory_space<vmem>>, vector<16x32xf32>
      %c0_175 = arith.constant 0 : index
      %138 = arith.index_cast %arg10 : i32 to index
      %c0_176 = arith.constant 0 : index
      %c0_177 = arith.constant 0 : index
      %139 = vector.load %arg1[%c0_175, %138, %c0_176, %c0_177] : memref<1x16x16x32xbf16, #tpu.memory_space<vmem>>, vector<1x1x16x32xbf16>
      %140 = vector.shape_cast %139 : vector<1x1x16x32xbf16> to vector<16x32xbf16>
      %141 = arith.extf %140 : vector<16x32xbf16> to vector<16x32xf32>
      %142 = arith.addf %137, %141 : vector<16x32xf32>
      %c0_178 = arith.constant 0 : index
      %c0_179 = arith.constant 0 : index
      %143 = vector.load %arg7[%c0_178, %c0_179] : memref<16x32xf32, #tpu.memory_space<vmem>>, vector<16x32xf32>
      tpu.vector_store %arg7[%c0_178, %c0_179], %142 {strides = array<i32>} : memref<16x32xf32, #tpu.memory_space<vmem>>, vector<16x32xf32>,
    }
    %c4_i32_23 = arith.constant 4 : i32
    %c0_24 = arith.constant 0 : index
    %c0_25 = arith.constant 0 : index
    %22 = vector.load %arg2[%c0_24, %c0_25] : memref<48x16xbf16, #tpu.memory_space<vmem>>, vector<48x16xbf16>
    %c0_26 = arith.constant 0 : index
    %c0_27 = arith.constant 0 : index
    %23 = vector.load %arg7[%c0_26, %c0_27] : memref<16x32xf32, #tpu.memory_space<vmem>>, vector<16x32xf32>
    %24 = arith.truncf %23 : vector<16x32xf32> to vector<16x32xbf16>
    %cst_28 = arith.constant dense<0.000000e+00> : vector<48x32xf32>
    %25 = tpu.matmul %22, %24, %cst_28 {dimension_numbers = #tpu.dot_dimension_numbers<[1], [0], [0], [1], [0, 0, 1, 1], [], []>} : vector<48x16xbf16>, vector<16x32xbf16>, vector<48x32xf32> -> vector<48x32xf32>
    %26 = arith.truncf %25 : vector<48x32xf32> to vector<48x32xbf16>
    %27 = vector.extract_strided_slice %26 {offsets = [0, 0], sizes = [16, 32], strides = [1, 1]} : vector<48x32xbf16> to vector<16x32xbf16>
    %c0_29 = arith.constant 0 : index
    %c10 = arith.constant 10 : index
    %c0_30 = arith.constant 0 : index
    %c0_31 = arith.constant 0 : index
    %28 = vector.load %arg8[%c0_29, %c10, %c0_30, %c0_31] : memref<3x36x16x32xbf16, #tpu.memory_space<vmem>>, vector<1x1x16x32xbf16>
    %29 = vector.shape_cast %28 : vector<1x1x16x32xbf16> to vector<16x32xbf16>
    %30 = vector.shape_cast %27 : vector<16x32xbf16> to vector<1x1x16x32xbf16>
    tpu.vector_store %arg8[%c0_29, %c10, %c0_30, %c0_31], %30 {strides = array<i32>} : memref<3x36x16x32xbf16, #tpu.memory_space<vmem>>, vector<1x1x16x32xbf16>,
    %31 = vector.extract_strided_slice %26 {offsets = [16, 0], sizes = [16, 32], strides = [1, 1]} : vector<48x32xbf16> to vector<16x32xbf16>
    %c1_32 = arith.constant 1 : index
    %c10_33 = arith.constant 10 : index
    %c0_34 = arith.constant 0 : index
    %c0_35 = arith.constant 0 : index
    %32 = vector.load %arg8[%c1_32, %c10_33, %c0_34, %c0_35] : memref<3x36x16x32xbf16, #tpu.memory_space<vmem>>, vector<1x1x16x32xbf16>
    %33 = vector.shape_cast %32 : vector<1x1x16x32xbf16> to vector<16x32xbf16>
    %34 = vector.shape_cast %31 : vector<16x32xbf16> to vector<1x1x16x32xbf16>
    tpu.vector_store %arg8[%c1_32, %c10_33, %c0_34, %c0_35], %34 {strides = array<i32>} : memref<3x36x16x32xbf16, #tpu.memory_space<vmem>>, vector<1x1x16x32xbf16>,
    %35 = vector.extract_strided_slice %26 {offsets = [32, 0], sizes = [16, 32], strides = [1, 1]} : vector<48x32xbf16> to vector<16x32xbf16>
    %c2_36 = arith.constant 2 : index
    %c10_37 = arith.constant 10 : index
    %c0_38 = arith.constant 0 : index
    %c0_39 = arith.constant 0 : index
    %36 = vector.load %arg8[%c2_36, %c10_37, %c0_38, %c0_39] : memref<3x36x16x32xbf16, #tpu.memory_space<vmem>>, vector<1x1x16x32xbf16>
    %37 = vector.shape_cast %36 : vector<1x1x16x32xbf16> to vector<16x32xbf16>
    %38 = vector.shape_cast %35 : vector<16x32xbf16> to vector<1x1x16x32xbf16>
    tpu.vector_store %arg8[%c2_36, %c10_37, %c0_38, %c0_39], %38 {strides = array<i32>} : memref<3x36x16x32xbf16, #tpu.memory_space<vmem>>, vector<1x1x16x32xbf16>,
    %c1_i32_40 = arith.constant 1 : i32
    %c15_i32 = arith.constant 15 : i32
    %39 = arith.addi %c1_i32_40, %c15_i32 : i32
    %c1_i32_41 = arith.constant 1 : i32
    scf.for %arg10 = %c1_i32_40 to %39 step %c1_i32_41  : i32 {
      %c3_i32 = arith.constant 3 : i32
      %137 = arith.addi %arg10, %c3_i32 : i32
      %c16_i32 = arith.constant 16 : i32
      %138 = arith.cmpi slt, %137, %c16_i32 : i32
      %139 = arith.extui %138 : i1 to i32
      %c0_i32_173 = arith.constant 0 : i32
      %140 = arith.cmpi ne, %139, %c0_i32_173 : i32
      scf.if %140 {
        %c0_192 = arith.constant 0 : index
        %c0_193 = arith.constant 0 : index
        %168 = vector.load %arg7[%c0_192, %c0_193] : memref<16x32xf32, #tpu.memory_space<vmem>>, vector<16x32xf32>
        %c3_i32_194 = arith.constant 3 : i32
        %169 = arith.addi %arg10, %c3_i32_194 : i32
        %c0_195 = arith.constant 0 : index
        %170 = arith.index_cast %169 : i32 to index
        %c0_196 = arith.constant 0 : index
        %c0_197 = arith.constant 0 : index
        %171 = vector.load %arg1[%c0_195, %170, %c0_196, %c0_197] : memref<1x16x16x32xbf16, #tpu.memory_space<vmem>>, vector<1x1x16x32xbf16>
        %172 = vector.shape_cast %171 : vector<1x1x16x32xbf16> to vector<16x32xbf16>
        %173 = arith.extf %172 : vector<16x32xbf16> to vector<16x32xf32>
        %174 = arith.addf %168, %173 : vector<16x32xf32>
        %c0_198 = arith.constant 0 : index
        %c0_199 = arith.constant 0 : index
        %175 = vector.load %arg7[%c0_198, %c0_199] : memref<16x32xf32, #tpu.memory_space<vmem>>, vector<16x32xf32>
        tpu.vector_store %arg7[%c0_198, %c0_199], %174 {strides = array<i32>} : memref<16x32xf32, #tpu.memory_space<vmem>>, vector<16x32xf32>,
      } else {
      }
      %c3_i32_174 = arith.constant 3 : i32
      %141 = arith.subi %arg10, %c3_i32_174 : i32
      %c1_i32_175 = arith.constant 1 : i32
      %142 = arith.subi %141, %c1_i32_175 : i32
      %c0_i32_176 = arith.constant 0 : i32
      %143 = arith.cmpi sge, %142, %c0_i32_176 : i32
      %144 = arith.extui %143 : i1 to i32
      %c0_i32_177 = arith.constant 0 : i32
      %145 = arith.cmpi ne, %144, %c0_i32_177 : i32
      scf.if %145 {
        %c0_192 = arith.constant 0 : index
        %c0_193 = arith.constant 0 : index
        %168 = vector.load %arg7[%c0_192, %c0_193] : memref<16x32xf32, #tpu.memory_space<vmem>>, vector<16x32xf32>
        %c3_i32_194 = arith.constant 3 : i32
        %169 = arith.subi %arg10, %c3_i32_194 : i32
        %c1_i32_195 = arith.constant 1 : i32
        %170 = arith.subi %169, %c1_i32_195 : i32
        %c0_196 = arith.constant 0 : index
        %171 = arith.index_cast %170 : i32 to index
        %c0_197 = arith.constant 0 : index
        %c0_198 = arith.constant 0 : index
        %172 = vector.load %arg1[%c0_196, %171, %c0_197, %c0_198] : memref<1x16x16x32xbf16, #tpu.memory_space<vmem>>, vector<1x1x16x32xbf16>
        %173 = vector.shape_cast %172 : vector<1x1x16x32xbf16> to vector<16x32xbf16>
        %174 = arith.extf %173 : vector<16x32xbf16> to vector<16x32xf32>
        %175 = arith.subf %168, %174 : vector<16x32xf32>
        %c0_199 = arith.constant 0 : index
        %c0_200 = arith.constant 0 : index
        %176 = vector.load %arg7[%c0_199, %c0_200] : memref<16x32xf32, #tpu.memory_space<vmem>>, vector<16x32xf32>
        tpu.vector_store %arg7[%c0_199, %c0_200], %175 {strides = array<i32>} : memref<16x32xf32, #tpu.memory_space<vmem>>, vector<16x32xf32>,
      } else {
      }
      %c0_178 = arith.constant 0 : index
      %c0_179 = arith.constant 0 : index
      %146 = vector.load %arg7[%c0_178, %c0_179] : memref<16x32xf32, #tpu.memory_space<vmem>>, vector<16x32xf32>
      %147 = arith.truncf %146 : vector<16x32xf32> to vector<16x32xbf16>
      %cst_180 = arith.constant dense<0.000000e+00> : vector<48x32xf32>
      %148 = tpu.matmul %22, %147, %cst_180 {dimension_numbers = #tpu.dot_dimension_numbers<[1], [0], [0], [1], [0, 0, 1, 1], [], []>} : vector<48x16xbf16>, vector<16x32xbf16>, vector<48x32xf32> -> vector<48x32xf32>
      %149 = arith.truncf %148 : vector<48x32xf32> to vector<48x32xbf16>
      %150 = vector.extract_strided_slice %149 {offsets = [0, 0], sizes = [16, 32], strides = [1, 1]} : vector<48x32xbf16> to vector<16x32xbf16>
      %c10_i32 = arith.constant 10 : i32
      %151 = arith.addi %c10_i32, %arg10 : i32
      %c0_181 = arith.constant 0 : index
      %152 = arith.index_cast %151 : i32 to index
      %c0_182 = arith.constant 0 : index
      %c0_183 = arith.constant 0 : index
      %153 = vector.load %arg8[%c0_181, %152, %c0_182, %c0_183] : memref<3x36x16x32xbf16, #tpu.memory_space<vmem>>, vector<1x1x16x32xbf16>
      %154 = vector.shape_cast %153 : vector<1x1x16x32xbf16> to vector<16x32xbf16>
      %155 = vector.shape_cast %150 : vector<16x32xbf16> to vector<1x1x16x32xbf16>
      tpu.vector_store %arg8[%c0_181, %152, %c0_182, %c0_183], %155 {strides = array<i32>} : memref<3x36x16x32xbf16, #tpu.memory_space<vmem>>, vector<1x1x16x32xbf16>,
      %156 = vector.extract_strided_slice %149 {offsets = [16, 0], sizes = [16, 32], strides = [1, 1]} : vector<48x32xbf16> to vector<16x32xbf16>
      %c10_i32_184 = arith.constant 10 : i32
      %157 = arith.addi %c10_i32_184, %arg10 : i32
      %c1_185 = arith.constant 1 : index
      %158 = arith.index_cast %157 : i32 to index
      %c0_186 = arith.constant 0 : index
      %c0_187 = arith.constant 0 : index
      %159 = vector.load %arg8[%c1_185, %158, %c0_186, %c0_187] : memref<3x36x16x32xbf16, #tpu.memory_space<vmem>>, vector<1x1x16x32xbf16>
      %160 = vector.shape_cast %159 : vector<1x1x16x32xbf16> to vector<16x32xbf16>
      %161 = vector.shape_cast %156 : vector<16x32xbf16> to vector<1x1x16x32xbf16>
      tpu.vector_store %arg8[%c1_185, %158, %c0_186, %c0_187], %161 {strides = array<i32>} : memref<3x36x16x32xbf16, #tpu.memory_space<vmem>>, vector<1x1x16x32xbf16>,
      %162 = vector.extract_strided_slice %149 {offsets = [32, 0], sizes = [16, 32], strides = [1, 1]} : vector<48x32xbf16> to vector<16x32xbf16>
      %c10_i32_188 = arith.constant 10 : i32
      %163 = arith.addi %c10_i32_188, %arg10 : i32
      %c2_189 = arith.constant 2 : index
      %164 = arith.index_cast %163 : i32 to index
      %c0_190 = arith.constant 0 : index
      %c0_191 = arith.constant 0 : index
      %165 = vector.load %arg8[%c2_189, %164, %c0_190, %c0_191] : memref<3x36x16x32xbf16, #tpu.memory_space<vmem>>, vector<1x1x16x32xbf16>
      %166 = vector.shape_cast %165 : vector<1x1x16x32xbf16> to vector<16x32xbf16>
      %167 = vector.shape_cast %162 : vector<16x32xbf16> to vector<1x1x16x32xbf16>
      tpu.vector_store %arg8[%c2_189, %164, %c0_190, %c0_191], %167 {strides = array<i32>} : memref<3x36x16x32xbf16, #tpu.memory_space<vmem>>, vector<1x1x16x32xbf16>,
    }
    %c15_i32_42 = arith.constant 15 : i32
    %cst_43 = arith.constant 0.000000e+00 : f32
    %40 = vector.broadcast %cst_43 : f32 to vector<256x8xf32>
    %c0_44 = arith.constant 0 : index
    %c0_45 = arith.constant 0 : index
    %41 = vector.load %arg9[%c0_44, %c0_45] : memref<256x8xf32, #tpu.memory_space<vmem>>, vector<256x8xf32>
    tpu.vector_store %arg9[%c0_44, %c0_45], %40 {strides = array<i32>} : memref<256x8xf32, #tpu.memory_space<vmem>>, vector<256x8xf32>,
    %c0_46 = arith.constant 0 : index
    %c0_47 = arith.constant 0 : index
    %c0_48 = arith.constant 0 : index
    %c0_49 = arith.constant 0 : index
    %42 = vector.load %arg8[%c0_46, %c0_47, %c0_48, %c0_49] : memref<3x36x16x32xbf16, #tpu.memory_space<vmem>>, vector<1x16x16x32xbf16>
    %43 = vector.shape_cast %42 : vector<1x16x16x32xbf16> to vector<16x16x32xbf16>
    %c0_50 = arith.constant 0 : index
    %c0_51 = arith.constant 0 : index
    %44 = vector.load %arg9[%c0_50, %c0_51] : memref<256x8xf32, #tpu.memory_space<vmem>>, vector<256x8xf32>
    %45 = vector.shape_cast %43 : vector<16x16x32xbf16> to vector<256x32xbf16>
    %c0_52 = arith.constant 0 : index
    %c0_53 = arith.constant 0 : index
    %c0_54 = arith.constant 0 : index
    %c0_55 = arith.constant 0 : index
    %46 = vector.load %arg3[%c0_52, %c0_53, %c0_54, %c0_55] : memref<3x3x32x8xbf16, #tpu.memory_space<vmem>>, vector<1x1x32x8xbf16>
    %47 = vector.shape_cast %46 : vector<1x1x32x8xbf16> to vector<32x8xbf16>
    %cst_56 = arith.constant dense<0.000000e+00> : vector<256x8xf32>
    %48 = tpu.matmul %45, %47, %cst_56 {dimension_numbers = #tpu.dot_dimension_numbers<[1], [0], [0], [1], [0, 0, 1, 1], [], []>} : vector<256x32xbf16>, vector<32x8xbf16>, vector<256x8xf32> -> vector<256x8xf32>
    %49 = arith.addf %44, %48 : vector<256x8xf32>
    %c0_57 = arith.constant 0 : index
    %c0_58 = arith.constant 0 : index
    %50 = vector.load %arg9[%c0_57, %c0_58] : memref<256x8xf32, #tpu.memory_space<vmem>>, vector<256x8xf32>
    tpu.vector_store %arg9[%c0_57, %c0_58], %49 {strides = array<i32>} : memref<256x8xf32, #tpu.memory_space<vmem>>, vector<256x8xf32>,
    %c1_59 = arith.constant 1 : index
    %c0_60 = arith.constant 0 : index
    %c0_61 = arith.constant 0 : index
    %c0_62 = arith.constant 0 : index
    %51 = vector.load %arg8[%c1_59, %c0_60, %c0_61, %c0_62] : memref<3x36x16x32xbf16, #tpu.memory_space<vmem>>, vector<1x16x16x32xbf16>
    %52 = vector.shape_cast %51 : vector<1x16x16x32xbf16> to vector<16x16x32xbf16>
    %c0_63 = arith.constant 0 : index
    %c0_64 = arith.constant 0 : index
    %53 = vector.load %arg9[%c0_63, %c0_64] : memref<256x8xf32, #tpu.memory_space<vmem>>, vector<256x8xf32>
    %54 = vector.shape_cast %52 : vector<16x16x32xbf16> to vector<256x32xbf16>
    %c0_65 = arith.constant 0 : index
    %c1_66 = arith.constant 1 : index
    %c0_67 = arith.constant 0 : index
    %c0_68 = arith.constant 0 : index
    %55 = vector.load %arg3[%c0_65, %c1_66, %c0_67, %c0_68] : memref<3x3x32x8xbf16, #tpu.memory_space<vmem>>, vector<1x1x32x8xbf16>
    %56 = vector.shape_cast %55 : vector<1x1x32x8xbf16> to vector<32x8xbf16>
    %cst_69 = arith.constant dense<0.000000e+00> : vector<256x8xf32>
    %57 = tpu.matmul %54, %56, %cst_69 {dimension_numbers = #tpu.dot_dimension_numbers<[1], [0], [0], [1], [0, 0, 1, 1], [], []>} : vector<256x32xbf16>, vector<32x8xbf16>, vector<256x8xf32> -> vector<256x8xf32>
    %58 = arith.addf %53, %57 : vector<256x8xf32>
    %c0_70 = arith.constant 0 : index
    %c0_71 = arith.constant 0 : index
    %59 = vector.load %arg9[%c0_70, %c0_71] : memref<256x8xf32, #tpu.memory_space<vmem>>, vector<256x8xf32>
    tpu.vector_store %arg9[%c0_70, %c0_71], %58 {strides = array<i32>} : memref<256x8xf32, #tpu.memory_space<vmem>>, vector<256x8xf32>,
    %c2_72 = arith.constant 2 : index
    %c0_73 = arith.constant 0 : index
    %c0_74 = arith.constant 0 : index
    %c0_75 = arith.constant 0 : index
    %60 = vector.load %arg8[%c2_72, %c0_73, %c0_74, %c0_75] : memref<3x36x16x32xbf16, #tpu.memory_space<vmem>>, vector<1x16x16x32xbf16>
    %61 = vector.shape_cast %60 : vector<1x16x16x32xbf16> to vector<16x16x32xbf16>
    %c0_76 = arith.constant 0 : index
    %c0_77 = arith.constant 0 : index
    %62 = vector.load %arg9[%c0_76, %c0_77] : memref<256x8xf32, #tpu.memory_space<vmem>>, vector<256x8xf32>
    %63 = vector.shape_cast %61 : vector<16x16x32xbf16> to vector<256x32xbf16>
    %c0_78 = arith.constant 0 : index
    %c2_79 = arith.constant 2 : index
    %c0_80 = arith.constant 0 : index
    %c0_81 = arith.constant 0 : index
    %64 = vector.load %arg3[%c0_78, %c2_79, %c0_80, %c0_81] : memref<3x3x32x8xbf16, #tpu.memory_space<vmem>>, vector<1x1x32x8xbf16>
    %65 = vector.shape_cast %64 : vector<1x1x32x8xbf16> to vector<32x8xbf16>
    %cst_82 = arith.constant dense<0.000000e+00> : vector<256x8xf32>
    %66 = tpu.matmul %63, %65, %cst_82 {dimension_numbers = #tpu.dot_dimension_numbers<[1], [0], [0], [1], [0, 0, 1, 1], [], []>} : vector<256x32xbf16>, vector<32x8xbf16>, vector<256x8xf32> -> vector<256x8xf32>
    %67 = arith.addf %62, %66 : vector<256x8xf32>
    %c0_83 = arith.constant 0 : index
    %c0_84 = arith.constant 0 : index
    %68 = vector.load %arg9[%c0_83, %c0_84] : memref<256x8xf32, #tpu.memory_space<vmem>>, vector<256x8xf32>
    tpu.vector_store %arg9[%c0_83, %c0_84], %67 {strides = array<i32>} : memref<256x8xf32, #tpu.memory_space<vmem>>, vector<256x8xf32>,
    %c0_85 = arith.constant 0 : index
    %c10_86 = arith.constant 10 : index
    %c0_87 = arith.constant 0 : index
    %c0_88 = arith.constant 0 : index
    %69 = vector.load %arg8[%c0_85, %c10_86, %c0_87, %c0_88] : memref<3x36x16x32xbf16, #tpu.memory_space<vmem>>, vector<1x16x16x32xbf16>
    %70 = vector.shape_cast %69 : vector<1x16x16x32xbf16> to vector<16x16x32xbf16>
    %c0_89 = arith.constant 0 : index
    %c0_90 = arith.constant 0 : index
    %71 = vector.load %arg9[%c0_89, %c0_90] : memref<256x8xf32, #tpu.memory_space<vmem>>, vector<256x8xf32>
    %72 = vector.shape_cast %70 : vector<16x16x32xbf16> to vector<256x32xbf16>
    %c1_91 = arith.constant 1 : index
    %c0_92 = arith.constant 0 : index
    %c0_93 = arith.constant 0 : index
    %c0_94 = arith.constant 0 : index
    %73 = vector.load %arg3[%c1_91, %c0_92, %c0_93, %c0_94] : memref<3x3x32x8xbf16, #tpu.memory_space<vmem>>, vector<1x1x32x8xbf16>
    %74 = vector.shape_cast %73 : vector<1x1x32x8xbf16> to vector<32x8xbf16>
    %cst_95 = arith.constant dense<0.000000e+00> : vector<256x8xf32>
    %75 = tpu.matmul %72, %74, %cst_95 {dimension_numbers = #tpu.dot_dimension_numbers<[1], [0], [0], [1], [0, 0, 1, 1], [], []>} : vector<256x32xbf16>, vector<32x8xbf16>, vector<256x8xf32> -> vector<256x8xf32>
    %76 = arith.addf %71, %75 : vector<256x8xf32>
    %c0_96 = arith.constant 0 : index
    %c0_97 = arith.constant 0 : index
    %77 = vector.load %arg9[%c0_96, %c0_97] : memref<256x8xf32, #tpu.memory_space<vmem>>, vector<256x8xf32>
    tpu.vector_store %arg9[%c0_96, %c0_97], %76 {strides = array<i32>} : memref<256x8xf32, #tpu.memory_space<vmem>>, vector<256x8xf32>,
    %c1_98 = arith.constant 1 : index
    %c10_99 = arith.constant 10 : index
    %c0_100 = arith.constant 0 : index
    %c0_101 = arith.constant 0 : index
    %78 = vector.load %arg8[%c1_98, %c10_99, %c0_100, %c0_101] : memref<3x36x16x32xbf16, #tpu.memory_space<vmem>>, vector<1x16x16x32xbf16>
    %79 = vector.shape_cast %78 : vector<1x16x16x32xbf16> to vector<16x16x32xbf16>
    %c0_102 = arith.constant 0 : index
    %c0_103 = arith.constant 0 : index
    %80 = vector.load %arg9[%c0_102, %c0_103] : memref<256x8xf32, #tpu.memory_space<vmem>>, vector<256x8xf32>
    %81 = vector.shape_cast %79 : vector<16x16x32xbf16> to vector<256x32xbf16>
    %c1_104 = arith.constant 1 : index
    %c1_105 = arith.constant 1 : index
    %c0_106 = arith.constant 0 : index
    %c0_107 = arith.constant 0 : index
    %82 = vector.load %arg3[%c1_104, %c1_105, %c0_106, %c0_107] : memref<3x3x32x8xbf16, #tpu.memory_space<vmem>>, vector<1x1x32x8xbf16>
    %83 = vector.shape_cast %82 : vector<1x1x32x8xbf16> to vector<32x8xbf16>
    %cst_108 = arith.constant dense<0.000000e+00> : vector<256x8xf32>
    %84 = tpu.matmul %81, %83, %cst_108 {dimension_numbers = #tpu.dot_dimension_numbers<[1], [0], [0], [1], [0, 0, 1, 1], [], []>} : vector<256x32xbf16>, vector<32x8xbf16>, vector<256x8xf32> -> vector<256x8xf32>
    %85 = arith.addf %80, %84 : vector<256x8xf32>
    %c0_109 = arith.constant 0 : index
    %c0_110 = arith.constant 0 : index
    %86 = vector.load %arg9[%c0_109, %c0_110] : memref<256x8xf32, #tpu.memory_space<vmem>>, vector<256x8xf32>
    tpu.vector_store %arg9[%c0_109, %c0_110], %85 {strides = array<i32>} : memref<256x8xf32, #tpu.memory_space<vmem>>, vector<256x8xf32>,
    %c2_111 = arith.constant 2 : index
    %c10_112 = arith.constant 10 : index
    %c0_113 = arith.constant 0 : index
    %c0_114 = arith.constant 0 : index
    %87 = vector.load %arg8[%c2_111, %c10_112, %c0_113, %c0_114] : memref<3x36x16x32xbf16, #tpu.memory_space<vmem>>, vector<1x16x16x32xbf16>
    %88 = vector.shape_cast %87 : vector<1x16x16x32xbf16> to vector<16x16x32xbf16>
    %c0_115 = arith.constant 0 : index
    %c0_116 = arith.constant 0 : index
    %89 = vector.load %arg9[%c0_115, %c0_116] : memref<256x8xf32, #tpu.memory_space<vmem>>, vector<256x8xf32>
    %90 = vector.shape_cast %88 : vector<16x16x32xbf16> to vector<256x32xbf16>
    %c1_117 = arith.constant 1 : index
    %c2_118 = arith.constant 2 : index
    %c0_119 = arith.constant 0 : index
    %c0_120 = arith.constant 0 : index
    %91 = vector.load %arg3[%c1_117, %c2_118, %c0_119, %c0_120] : memref<3x3x32x8xbf16, #tpu.memory_space<vmem>>, vector<1x1x32x8xbf16>
    %92 = vector.shape_cast %91 : vector<1x1x32x8xbf16> to vector<32x8xbf16>
    %cst_121 = arith.constant dense<0.000000e+00> : vector<256x8xf32>
    %93 = tpu.matmul %90, %92, %cst_121 {dimension_numbers = #tpu.dot_dimension_numbers<[1], [0], [0], [1], [0, 0, 1, 1], [], []>} : vector<256x32xbf16>, vector<32x8xbf16>, vector<256x8xf32> -> vector<256x8xf32>
    %94 = arith.addf %89, %93 : vector<256x8xf32>
    %c0_122 = arith.constant 0 : index
    %c0_123 = arith.constant 0 : index
    %95 = vector.load %arg9[%c0_122, %c0_123] : memref<256x8xf32, #tpu.memory_space<vmem>>, vector<256x8xf32>
    tpu.vector_store %arg9[%c0_122, %c0_123], %94 {strides = array<i32>} : memref<256x8xf32, #tpu.memory_space<vmem>>, vector<256x8xf32>,
    %c0_124 = arith.constant 0 : index
    %c20 = arith.constant 20 : index
    %c0_125 = arith.constant 0 : index
    %c0_126 = arith.constant 0 : index
    %96 = vector.load %arg8[%c0_124, %c20, %c0_125, %c0_126] : memref<3x36x16x32xbf16, #tpu.memory_space<vmem>>, vector<1x16x16x32xbf16>
    %97 = vector.shape_cast %96 : vector<1x16x16x32xbf16> to vector<16x16x32xbf16>
    %c0_127 = arith.constant 0 : index
    %c0_128 = arith.constant 0 : index
    %98 = vector.load %arg9[%c0_127, %c0_128] : memref<256x8xf32, #tpu.memory_space<vmem>>, vector<256x8xf32>
    %99 = vector.shape_cast %97 : vector<16x16x32xbf16> to vector<256x32xbf16>
    %c2_129 = arith.constant 2 : index
    %c0_130 = arith.constant 0 : index
    %c0_131 = arith.constant 0 : index
    %c0_132 = arith.constant 0 : index
    %100 = vector.load %arg3[%c2_129, %c0_130, %c0_131, %c0_132] : memref<3x3x32x8xbf16, #tpu.memory_space<vmem>>, vector<1x1x32x8xbf16>
    %101 = vector.shape_cast %100 : vector<1x1x32x8xbf16> to vector<32x8xbf16>
    %cst_133 = arith.constant dense<0.000000e+00> : vector<256x8xf32>
    %102 = tpu.matmul %99, %101, %cst_133 {dimension_numbers = #tpu.dot_dimension_numbers<[1], [0], [0], [1], [0, 0, 1, 1], [], []>} : vector<256x32xbf16>, vector<32x8xbf16>, vector<256x8xf32> -> vector<256x8xf32>
    %103 = arith.addf %98, %102 : vector<256x8xf32>
    %c0_134 = arith.constant 0 : index
    %c0_135 = arith.constant 0 : index
    %104 = vector.load %arg9[%c0_134, %c0_135] : memref<256x8xf32, #tpu.memory_space<vmem>>, vector<256x8xf32>
    tpu.vector_store %arg9[%c0_134, %c0_135], %103 {strides = array<i32>} : memref<256x8xf32, #tpu.memory_space<vmem>>, vector<256x8xf32>,
    %c1_136 = arith.constant 1 : index
    %c20_137 = arith.constant 20 : index
    %c0_138 = arith.constant 0 : index
    %c0_139 = arith.constant 0 : index
    %105 = vector.load %arg8[%c1_136, %c20_137, %c0_138, %c0_139] : memref<3x36x16x32xbf16, #tpu.memory_space<vmem>>, vector<1x16x16x32xbf16>
    %106 = vector.shape_cast %105 : vector<1x16x16x32xbf16> to vector<16x16x32xbf16>
    %c0_140 = arith.constant 0 : index
    %c0_141 = arith.constant 0 : index
    %107 = vector.load %arg9[%c0_140, %c0_141] : memref<256x8xf32, #tpu.memory_space<vmem>>, vector<256x8xf32>
    %108 = vector.shape_cast %106 : vector<16x16x32xbf16> to vector<256x32xbf16>
    %c2_142 = arith.constant 2 : index
    %c1_143 = arith.constant 1 : index
    %c0_144 = arith.constant 0 : index
    %c0_145 = arith.constant 0 : index
    %109 = vector.load %arg3[%c2_142, %c1_143, %c0_144, %c0_145] : memref<3x3x32x8xbf16, #tpu.memory_space<vmem>>, vector<1x1x32x8xbf16>
    %110 = vector.shape_cast %109 : vector<1x1x32x8xbf16> to vector<32x8xbf16>
    %cst_146 = arith.constant dense<0.000000e+00> : vector<256x8xf32>
    %111 = tpu.matmul %108, %110, %cst_146 {dimension_numbers = #tpu.dot_dimension_numbers<[1], [0], [0], [1], [0, 0, 1, 1], [], []>} : vector<256x32xbf16>, vector<32x8xbf16>, vector<256x8xf32> -> vector<256x8xf32>
    %112 = arith.addf %107, %111 : vector<256x8xf32>
    %c0_147 = arith.constant 0 : index
    %c0_148 = arith.constant 0 : index
    %113 = vector.load %arg9[%c0_147, %c0_148] : memref<256x8xf32, #tpu.memory_space<vmem>>, vector<256x8xf32>
    tpu.vector_store %arg9[%c0_147, %c0_148], %112 {strides = array<i32>} : memref<256x8xf32, #tpu.memory_space<vmem>>, vector<256x8xf32>,
    %c2_149 = arith.constant 2 : index
    %c20_150 = arith.constant 20 : index
    %c0_151 = arith.constant 0 : index
    %c0_152 = arith.constant 0 : index
    %114 = vector.load %arg8[%c2_149, %c20_150, %c0_151, %c0_152] : memref<3x36x16x32xbf16, #tpu.memory_space<vmem>>, vector<1x16x16x32xbf16>
    %115 = vector.shape_cast %114 : vector<1x16x16x32xbf16> to vector<16x16x32xbf16>
    %c0_153 = arith.constant 0 : index
    %c0_154 = arith.constant 0 : index
    %116 = vector.load %arg9[%c0_153, %c0_154] : memref<256x8xf32, #tpu.memory_space<vmem>>, vector<256x8xf32>
    %117 = vector.shape_cast %115 : vector<16x16x32xbf16> to vector<256x32xbf16>
    %c2_155 = arith.constant 2 : index
    %c2_156 = arith.constant 2 : index
    %c0_157 = arith.constant 0 : index
    %c0_158 = arith.constant 0 : index
    %118 = vector.load %arg3[%c2_155, %c2_156, %c0_157, %c0_158] : memref<3x3x32x8xbf16, #tpu.memory_space<vmem>>, vector<1x1x32x8xbf16>
    %119 = vector.shape_cast %118 : vector<1x1x32x8xbf16> to vector<32x8xbf16>
    %cst_159 = arith.constant dense<0.000000e+00> : vector<256x8xf32>
    %120 = tpu.matmul %117, %119, %cst_159 {dimension_numbers = #tpu.dot_dimension_numbers<[1], [0], [0], [1], [0, 0, 1, 1], [], []>} : vector<256x32xbf16>, vector<32x8xbf16>, vector<256x8xf32> -> vector<256x8xf32>
    %121 = arith.addf %116, %120 : vector<256x8xf32>
    %c0_160 = arith.constant 0 : index
    %c0_161 = arith.constant 0 : index
    %122 = vector.load %arg9[%c0_160, %c0_161] : memref<256x8xf32, #tpu.memory_space<vmem>>, vector<256x8xf32>
    tpu.vector_store %arg9[%c0_160, %c0_161], %121 {strides = array<i32>} : memref<256x8xf32, #tpu.memory_space<vmem>>, vector<256x8xf32>,
    %c0_162 = arith.constant 0 : index
    %c0_163 = arith.constant 0 : index
    %123 = vector.load %arg9[%c0_162, %c0_163] : memref<256x8xf32, #tpu.memory_space<vmem>>, vector<256x8xf32>
    %c0_164 = arith.constant 0 : index
    %c0_165 = arith.constant 0 : index
    %124 = vector.load %arg4[%c0_164, %c0_165] : memref<1x8xf32, #tpu.memory_space<vmem>>, vector<1x8xf32>
    %125 = vector.broadcast %124 : vector<1x8xf32> to vector<256x8xf32>
    %126 = arith.mulf %123, %125 : vector<256x8xf32>
    %c0_166 = arith.constant 0 : index
    %c0_167 = arith.constant 0 : index
    %127 = vector.load %arg5[%c0_166, %c0_167] : memref<1x8xf32, #tpu.memory_space<vmem>>, vector<1x8xf32>
    %128 = vector.broadcast %127 : vector<1x8xf32> to vector<256x8xf32>
    %129 = arith.addf %126, %128 : vector<256x8xf32>
    %cst_168 = arith.constant 0.000000e+00 : f32
    %130 = vector.broadcast %cst_168 : f32 to vector<256x8xf32>
    %131 = arith.maximumf %129, %130 : vector<256x8xf32>
    %132 = vector.shape_cast %131 : vector<256x8xf32> to vector<16x16x8xf32>
    %133 = arith.truncf %132 : vector<16x16x8xf32> to vector<16x16x8xbf16>
    %c0_169 = arith.constant 0 : index
    %c0_170 = arith.constant 0 : index
    %c0_171 = arith.constant 0 : index
    %c0_172 = arith.constant 0 : index
    %134 = vector.load %arg6[%c0_169, %c0_170, %c0_171, %c0_172] : memref<1x16x16x8xbf16, #tpu.memory_space<vmem>>, vector<1x16x16x8xbf16>
    %135 = vector.shape_cast %134 : vector<1x16x16x8xbf16> to vector<16x16x8xbf16>
    %136 = vector.shape_cast %133 : vector<16x16x8xbf16> to vector<1x16x16x8xbf16>
    tpu.vector_store %arg6[%c0_169, %c0_170, %c0_171, %c0_172], %136 {strides = array<i32>} : memref<1x16x16x8xbf16, #tpu.memory_space<vmem>>, vector<1x16x16x8xbf16>,
    return
  }
  func.func @transform_0(%arg0: i32) -> (i32, i32, i32, i32) {
    %c0_i32 = arith.constant 0 : i32
    %c0_i32_0 = arith.constant 0 : i32
    %c0_i32_1 = arith.constant 0 : i32
    %c0_i32_2 = arith.constant 0 : i32
    return %arg0, %c0_i32, %c0_i32_0, %c0_i32_1 : i32, i32, i32, i32
  }
  func.func @transform_1(%arg0: i32) -> (i32, i32) {
    %c0_i32 = arith.constant 0 : i32
    %c0_i32_0 = arith.constant 0 : i32
    %c0_i32_1 = arith.constant 0 : i32
    return %c0_i32, %c0_i32_0 : i32, i32
  }
  func.func @transform_2(%arg0: i32) -> (i32, i32, i32, i32) {
    %c0_i32 = arith.constant 0 : i32
    %c0_i32_0 = arith.constant 0 : i32
    %c0_i32_1 = arith.constant 0 : i32
    %c0_i32_2 = arith.constant 0 : i32
    %c0_i32_3 = arith.constant 0 : i32
    return %c0_i32, %c0_i32_0, %c0_i32_1, %c0_i32_2 : i32, i32, i32, i32
  }
  func.func @transform_3(%arg0: i32) -> (i32, i32) {
    %c0_i32 = arith.constant 0 : i32
    %c0_i32_0 = arith.constant 0 : i32
    %c0_i32_1 = arith.constant 0 : i32
    return %c0_i32, %c0_i32_0 : i32, i32
  }
  func.func @transform_4(%arg0: i32) -> (i32, i32) {
    %c0_i32 = arith.constant 0 : i32
    %c0_i32_0 = arith.constant 0 : i32
    %c0_i32_1 = arith.constant 0 : i32
    return %c0_i32, %c0_i32_0 : i32, i32
  }
  func.func @transform_5(%arg0: i32) -> (i32, i32, i32, i32) {
    %c0_i32 = arith.constant 0 : i32
    %c0_i32_0 = arith.constant 0 : i32
    %c0_i32_1 = arith.constant 0 : i32
    %c0_i32_2 = arith.constant 0 : i32
    return %arg0, %c0_i32, %c0_i32_0, %c0_i32_1 : i32, i32, i32, i32
  }
}

</mosaic_0001>

<llo_original>
// kernel: tpu_custom_call.1
$region0: #{tpu_custom_call.1}
  #allocation0 [shape = 'u32[]', space=smem, size = 0x4, offset = 0x4, fixed_abs, tag = 'smem constant byte address 0x4 - core index']
  #allocation1 [shape = 'u32[144,128]{1,0:T(1,128)}', space=vmem, size = 0x12000, scoped, tag = 'internal scratch']
  #allocation2 [shape = 'f32[16,32]{1,0:T(8,128)}', space=vmem, size = 0x2000, scoped, tag = 'scratch operand']
  #allocation3 [shape = 'bf16[3,36,16,32]{3,2,1,0:T(16,128)(2,1)}', space=vmem, size = 0x6c000, scoped, tag = 'scratch operand']
  #allocation4 [shape = 'f32[256,8]{1,0:T(8,128)}', space=vmem, size = 0x20000, scoped, tag = 'scratch operand']
  %s0 = inlined_call_operand.hbm [shape: bf16[2,16,16,32], index: 0, kind: input, shape index: {}]
  %s1 = inlined_call_operand.hbm [shape: bf16[48,16], index: 1, kind: input, shape index: {}]
  %s2 = inlined_call_operand.hbm [shape: bf16[3,3,32,8], index: 2, kind: input, shape index: {}]
  %s3 = inlined_call_operand.hbm [shape: f32[1,8], index: 3, kind: input, shape index: {}]
  %s4 = inlined_call_operand.hbm [shape: f32[1,8], index: 4, kind: input, shape index: {}]
  %s5 = inlined_call_operand.hbm [shape: bf16[2,16,16,8], index: 5, kind: output, shape index: {}]
  %s6 = sld [smem:[#allocation0]]
  $region95: #{tpu_custom_call.1} parent=0
    _
  %s8 = ssub.s32 1, %s6
  %s9 = scalar_select 0, %s8, %s6
  $region1: #{tpu_custom_call.1} parent=0
    #allocation5 [shape = 'u8[131072]{0}', space=vmem, size = 0x20000, scoped, tag = 'input window, operand 0']
    #allocation6 [shape = 's32[2]{0}', space=sflag, size = 0x8, scoped, tag = 'scoped memory for tpu_custom_call.1']
    #allocation7 [shape = 's32[2]{0}', space=sflag, size = 0x8, scoped, tag = 'scoped memory for tpu_custom_call.1']
    #allocation8 [shape = 'u8[12288]{0}', space=vmem, size = 0x3000, scoped, tag = 'input window, operand 1, single buffered']
    #allocation9 [shape = 's32[1]{0}', space=sflag, size = 0x4, scoped, tag = 'scoped memory for tpu_custom_call.1']
    #allocation10 [shape = 'u8[73728]{0}', space=vmem, size = 0x12000, scoped, tag = 'input window, operand 2, single buffered']
    #allocation11 [shape = 'u8[512]{0}', space=vmem, size = 0x400, scoped, tag = 'input window, operand 3, single buffered']
    #allocation12 [shape = 's32[1]{0}', space=sflag, size = 0x4, scoped, tag = 'scoped memory for tpu_custom_call.1']
    #allocation13 [shape = 'u8[512]{0}', space=vmem, size = 0x400, scoped, tag = 'input window, operand 4, single buffered']
    #allocation14 [shape = 'u8[131072]{0}', space=vmem, size = 0x20000, scoped, tag = 'output window, operand 0']
    %10 = vsyncpa [#allocation6], 0
    %s11 = scalar_lea.sflag [#allocation6], 1
    %12 = vsyncpa %s11, 0
    %13 = vsyncpa [#allocation9], 0
    %14 = vsyncpa [#allocation12], 0
    %15 = vsyncpa [#allocation7], 0
    %s16 = scalar_lea.sflag [#allocation7], 1
    %17 = vsyncpa %s16, 0
    loop: start=0, step=1, limit=4
    $region2: #{tpu_custom_call.1} parent=1 // loop_pre_header
      _
    $region3: #{tpu_custom_call.1} parent=1 // loop_header
      %s19 = sphi 0, %s23
      %p20 = scmp.ge.s32.totalorder %s19, 4
      %s29 = sphi 0, %s31
      %s32 = sphi 0, %s29
      %s33 = sphi 0, %s32
      %s49 = sphi 0, %s33
      %s53 = sphi 0, %s53
      %s55 = sphi 0, %s53
      %s56 = sphi 0, %s55
      %s70 = sphi 0, %s56
      %s74 = sphi 0, %s74
      %s76 = sphi 0, %s74
      %s77 = sphi 0, %s76
      %s91 = sphi 0, %s77
      %s95 = sphi 0, %s95
      %s97 = sphi 0, %s95
      %s98 = sphi 0, %s97
      %s112 = sphi 0, %s98
      %s116 = sphi 0, %s116
      %s118 = sphi 0, %s116
      %s119 = sphi 0, %s118
      %s133 = sphi 0, %s119
      %s139 = sphi 0, %s141
      %s142 = sphi 0, %s139
      %s143 = sphi 0, %s142
      %s159 = sphi 0, %s143
    $region4: #{tpu_custom_call.1} parent=1 // loop_header_branch
      %22 = sbr.rel (%p20) target = $region8
    $region5: #{tpu_custom_call.1} parent=1 // loop_body
      %s24 = ssub.s32 %s19, 1
      %s25 = ssub.s32 %s19, 2
      %s26 = sadd.s32 %s19, 1
      %s27 = ssub.s32 %s19, %s26
      %p28 = scmp.eq.s32.totalorder %s27, 0
      %s30 = sadd.s32 %s29, 1
      %s31 = scalar_select %p28, %s29, %s30
      %p34 = pneg %p28
      %p35 = scmp.eq.s32.totalorder %s19, 1
      %p36 = por %p34, %p35
      %p37 = scmp.ne.s32.totalorder %s29, %s32
      %p38 = scmp.eq.s32.totalorder %s19, 0
      %p39 = por %p37, %p38
      %p40 = scmp.ne.s32.totalorder %s29, %s32
      %p41 = scmp.eq.s32.totalorder %s24, 1
      %p42 = por %p40, %p41
      %p43 = scmp.ne.s32.totalorder %s32, %s33
      %p44 = scmp.eq.s32.totalorder %s24, 0
      %p45 = por %p43, %p44
      %p46 = scmp.ne.s32.totalorder %s32, %s33
      %p47 = scmp.eq.s32.totalorder %s25, 1
      %p48 = por %p46, %p47
      %p50 = scmp.ne.s32.totalorder %s33, %s49
      %p51 = scmp.eq.s32.totalorder %s25, 0
      %p52 = por %p50, %p51
      %s54 = sadd.s32 %s53, 1
      %p57 = scmp.eq.s32.totalorder %s19, 1
      %p58 = scmp.ne.s32.totalorder %s53, %s55
      %p59 = scmp.eq.s32.totalorder %s19, 0
      %p60 = por %p58, %p59
      %p61 = scmp.ne.s32.totalorder %s53, %s55
      %p62 = scmp.eq.s32.totalorder %s24, 1
      %p63 = por %p61, %p62
      %p64 = scmp.ne.s32.totalorder %s55, %s56
      %p65 = scmp.eq.s32.totalorder %s24, 0
      %p66 = por %p64, %p65
      %p67 = scmp.ne.s32.totalorder %s55, %s56
      %p68 = scmp.eq.s32.totalorder %s25, 1
      %p69 = por %p67, %p68
      %p71 = scmp.ne.s32.totalorder %s56, %s70
      %p72 = scmp.eq.s32.totalorder %s25, 0
      %p73 = por %p71, %p72
      %s75 = sadd.s32 %s74, 1
      %p78 = scmp.eq.s32.totalorder %s19, 1
      %p79 = scmp.ne.s32.totalorder %s74, %s76
      %p80 = scmp.eq.s32.totalorder %s19, 0
      %p81 = por %p79, %p80
      %p82 = scmp.ne.s32.totalorder %s74, %s76
      %p83 = scmp.eq.s32.totalorder %s24, 1
      %p84 = por %p82, %p83
      %p85 = scmp.ne.s32.totalorder %s76, %s77
      %p86 = scmp.eq.s32.totalorder %s24, 0
      %p87 = por %p85, %p86
      %p88 = scmp.ne.s32.totalorder %s76, %s77
      %p89 = scmp.eq.s32.totalorder %s25, 1
      %p90 = por %p88, %p89
      %p92 = scmp.ne.s32.totalorder %s77, %s91
      %p93 = scmp.eq.s32.totalorder %s25, 0
      %p94 = por %p92, %p93
      %s96 = sadd.s32 %s95, 1
      %p99 = scmp.eq.s32.totalorder %s19, 1
      %p100 = scmp.ne.s32.totalorder %s95, %s97
      %p101 = scmp.eq.s32.totalorder %s19, 0
      %p102 = por %p100, %p101
      %p103 = scmp.ne.s32.totalorder %s95, %s97
      %p104 = scmp.eq.s32.totalorder %s24, 1
      %p105 = por %p103, %p104
      %p106 = scmp.ne.s32.totalorder %s97, %s98
      %p107 = scmp.eq.s32.totalorder %s24, 0
      %p108 = por %p106, %p107
      %p109 = scmp.ne.s32.totalorder %s97, %s98
      %p110 = scmp.eq.s32.totalorder %s25, 1
      %p111 = por %p109, %p110
      %p113 = scmp.ne.s32.totalorder %s98, %s112
      %p114 = scmp.eq.s32.totalorder %s25, 0
      %p115 = por %p113, %p114
      %s117 = sadd.s32 %s116, 1
      %p120 = scmp.eq.s32.totalorder %s19, 1
      %p121 = scmp.ne.s32.totalorder %s116, %s118
      %p122 = scmp.eq.s32.totalorder %s19, 0
      %p123 = por %p121, %p122
      %p124 = scmp.ne.s32.totalorder %s116, %s118
      %p125 = scmp.eq.s32.totalorder %s24, 1
      %p126 = por %p124, %p125
      %p127 = scmp.ne.s32.totalorder %s118, %s119
      %p128 = scmp.eq.s32.totalorder %s24, 0
      %p129 = por %p127, %p128
      %p130 = scmp.ne.s32.totalorder %s118, %s119
      %p131 = scmp.eq.s32.totalorder %s25, 1
      %p132 = por %p130, %p131
      %p134 = scmp.ne.s32.totalorder %s119, %s133
      %p135 = scmp.eq.s32.totalorder %s25, 0
      %p136 = por %p134, %p135
      %s137 = ssub.s32 %s19, %s26
      %p138 = scmp.eq.s32.totalorder %s137, 0
      %s140 = sadd.s32 %s139, 1
      %s141 = scalar_select %p138, %s139, %s140
      %p144 = pneg %p138
      %p145 = scmp.eq.s32.totalorder %s19, 1
      %p146 = por %p144, %p145
      %p147 = scmp.ne.s32.totalorder %s139, %s142
      %p148 = scmp.eq.s32.totalorder %s19, 0
      %p149 = por %p147, %p148
      %p150 = scmp.ne.s32.totalorder %s139, %s142
      %p151 = scmp.eq.s32.totalorder %s24, 1
      %p152 = por %p150, %p151
      %p153 = scmp.ne.s32.totalorder %s142, %s143
      %p154 = scmp.eq.s32.totalorder %s24, 0
      %p155 = por %p153, %p154
      %p156 = scmp.ne.s32.totalorder %s142, %s143
      %p157 = scmp.eq.s32.totalorder %s25, 1
      %p158 = por %p156, %p157
      %p160 = scmp.ne.s32.totalorder %s143, %s159
      %p161 = scmp.eq.s32.totalorder %s25, 0
      %p162 = por %p160, %p161
      %p163 = scmp.le.s32.totalorder 1, %s19
      %p164 = scmp.lt.s32.totalorder %s19, 3
      %p165 = pnand %p163, %p164
      %p166 = pneg %p165
      // Predicated region
      $region9: #{tpu_custom_call.1} parent=5 // pred_check
        _
      $region10: #{tpu_custom_call.1} parent=5 // pred_check_branch
        %168 = sbr.rel (%p165) target = $region12
      $region11: #{tpu_custom_call.1} parent=5 // pred_region
        %s169 = ssub.s32 %s19, 1
        // Predicated region
        $region13: #{tpu_custom_call.1} parent=11 // pred_check
          %p170 = pneg %p66
        $region14: #{tpu_custom_call.1} parent=11 // pred_check_branch
          %172 = sbr.rel (%p170) target = $region16
        $region15: #{tpu_custom_call.1} parent=11 // pred_region
          %s174 = ssub.s32 384, 384
          %175 = vsyncadd [#allocation9], %s174
          %s176 = sshll.u32 [#allocation8], 4
          %s177 = int_to_ptr.vmem [resolvable:$true] %s176
          %182 = dma.hbm_to_vmem [thread:$0]  %s1, 384, %s177, [#allocation9], 64, 64, 4
        $region16: #{tpu_custom_call.1} parent=11 // pred_fallthru
          _
        // Predicated region
        $region17: #{tpu_custom_call.1} parent=11 // pred_check
          %p183 = pneg %p87
        $region18: #{tpu_custom_call.1} parent=11 // pred_check_branch
          %185 = sbr.rel (%p183) target = $region20
        $region19: #{tpu_custom_call.1} parent=11 // pred_region
          %s187 = ssub.s32 2304, 2304
          %188 = vsyncadd [#allocation9], %s187
          %s189 = sshll.u32 [#allocation10], 4
          %s190 = int_to_ptr.vmem [resolvable:$true] %s189
          %195 = dma.hbm_to_vmem [thread:$0]  %s2, 2304, %s190, [#allocation9], 64, 64, 4
        $region20: #{tpu_custom_call.1} parent=11 // pred_fallthru
          _
        // Predicated region
        $region21: #{tpu_custom_call.1} parent=11 // pred_check
          %p196 = pneg %p108
        $region22: #{tpu_custom_call.1} parent=11 // pred_check_branch
          %198 = sbr.rel (%p196) target = $region24
        $region23: #{tpu_custom_call.1} parent=11 // pred_region
          %s200 = ssub.s32 16, 16
          %201 = vsyncadd [#allocation12], %s200
          %s203 = sshll.u32 [#allocation11], 4
          %s204 = int_to_ptr.vmem [resolvable:$true] %s203
          %206 = dma.hbm_to_vmem [thread:$0]  %s3, 16, %s204, [#allocation12]
        $region24: #{tpu_custom_call.1} parent=11 // pred_fallthru
          _
        // Predicated region
        $region25: #{tpu_custom_call.1} parent=11 // pred_check
          %p207 = pneg %p129
        $region26: #{tpu_custom_call.1} parent=11 // pred_check_branch
          %209 = sbr.rel (%p207) target = $region28
        $region27: #{tpu_custom_call.1} parent=11 // pred_region
          %s211 = ssub.s32 16, 16
          %212 = vsyncadd [#allocation12], %s211
          %s214 = sshll.u32 [#allocation13], 4
          %s215 = int_to_ptr.vmem [resolvable:$true] %s214
          %217 = dma.hbm_to_vmem [thread:$0]  %s4, 16, %s215, [#allocation12]
        $region28: #{tpu_custom_call.1} parent=11 // pred_fallthru
          _
      $region12: #{tpu_custom_call.1} parent=5 // pred_fallthru
        _
      %p218 = scmp.lt.s32.totalorder %s19, 2
      // Predicated region
      $region29: #{tpu_custom_call.1} parent=5 // pred_check
        %p219 = pneg %p218
      $region30: #{tpu_custom_call.1} parent=5 // pred_check_branch
        %221 = sbr.rel (%p219) target = $region32
      $region31: #{tpu_custom_call.1} parent=5 // pred_region
        // Predicated region
        $region33: #{tpu_custom_call.1} parent=31 // pred_check
          %p222 = pneg %p39
        $region34: #{tpu_custom_call.1} parent=31 // pred_check_branch
          %224 = sbr.rel (%p222) target = $region36
        $region35: #{tpu_custom_call.1} parent=31 // pred_region
          %s225 = sand.u32 %s29, 1
          %s226 = scalar_lea.sflag [#allocation6], %s225
          %s227 = sand.u32 %s29, 1
          %s228 = smul.addr %s227, 128
          %s229 = scalar_lea.vmem [#allocation5], %s228
          %s231 = ssub.s32 2048, 2048
          %232 = vsyncadd %s226, %s231
          %s233 = smul.addr %s19, 32
          %s234 = smul.addr %s233, 64
          %s235 = scalar_lea.hbm %s0, %s234
          %s236 = sshll.u32 %s229, 4
          %s237 = int_to_ptr.vmem [resolvable:$true] %s236
          %242 = dma.hbm_to_vmem [thread:$0]  %s235, 2048, %s237, %s226, 64, 64, 4
        $region36: #{tpu_custom_call.1} parent=31 // pred_fallthru
          _
      $region32: #{tpu_custom_call.1} parent=5 // pred_fallthru
        _
      %p243 = scmp.le.s32.totalorder 1, %s19
      %p244 = scmp.lt.s32.totalorder %s19, 3
      %p245 = pnand %p243, %p244
      %p246 = pneg %p245
      // Predicated region
      $region37: #{tpu_custom_call.1} parent=5 // pred_check
        _
      $region38: #{tpu_custom_call.1} parent=5 // pred_check_branch
        %248 = sbr.rel (%p245) target = $region40
      $region39: #{tpu_custom_call.1} parent=5 // pred_region
        %s249 = ssub.s32 %s19, 1
        %s250 = sand.u32 %s32, 1
        %s251 = scalar_lea.sflag [#allocation6], %s250
        %s252 = sand.u32 %s32, 1
        %s253 = smul.addr %s252, 128
        %s254 = scalar_lea.vmem [#allocation5], %s253
        // Predicated region
        $region41: #{tpu_custom_call.1} parent=39 // pred_check
          %p255 = pneg %p45
        $region42: #{tpu_custom_call.1} parent=39 // pred_check_branch
          %257 = sbr.rel (%p255) target = $region44
        $region43: #{tpu_custom_call.1} parent=39 // pred_region
          %258 = dma.done %s251, 2048
        $region44: #{tpu_custom_call.1} parent=39 // pred_fallthru
          _
        // Predicated region
        $region45: #{tpu_custom_call.1} parent=39 // pred_check
          %p259 = pneg %p66
        $region46: #{tpu_custom_call.1} parent=39 // pred_check_branch
          %261 = sbr.rel (%p259) target = $region48
        $region47: #{tpu_custom_call.1} parent=39 // pred_region
          %262 = dma.done [#allocation9], 384
        $region48: #{tpu_custom_call.1} parent=39 // pred_fallthru
          _
        // Predicated region
        $region49: #{tpu_custom_call.1} parent=39 // pred_check
          %p263 = pneg %p87
        $region50: #{tpu_custom_call.1} parent=39 // pred_check_branch
          %265 = sbr.rel (%p263) target = $region52
        $region51: #{tpu_custom_call.1} parent=39 // pred_region
          %266 = dma.done [#allocation9], 2304
        $region52: #{tpu_custom_call.1} parent=39 // pred_fallthru
          _
        // Predicated region
        $region53: #{tpu_custom_call.1} parent=39 // pred_check
          %p267 = pneg %p108
        $region54: #{tpu_custom_call.1} parent=39 // pred_check_branch
          %269 = sbr.rel (%p267) target = $region56
        $region55: #{tpu_custom_call.1} parent=39 // pred_region
          %270 = dma.done [#allocation12], 16
        $region56: #{tpu_custom_call.1} parent=39 // pred_fallthru
          _
        // Predicated region
        $region57: #{tpu_custom_call.1} parent=39 // pred_check
          %p271 = pneg %p129
        $region58: #{tpu_custom_call.1} parent=39 // pred_check_branch
          %273 = sbr.rel (%p271) target = $region60
        $region59: #{tpu_custom_call.1} parent=39 // pred_region
          %274 = dma.done [#allocation12], 16
        $region60: #{tpu_custom_call.1} parent=39 // pred_fallthru
          _
        %s275 = sand.u32 %s32, 1
        %s276 = scalar_lea.sflag [#allocation6], %s275
        %s277 = sand.u32 %s32, 1
        %s278 = smul.addr %s277, 128
        %s279 = scalar_lea.vmem [#allocation5], %s278
        %p280 = pneg %p45
        %p281 = pneg %p42
        %p282 = pneg %p66
        %p283 = pneg %p63
        %p284 = pneg %p87
        %p285 = pneg %p84
        %p286 = pneg %p108
        %p287 = pneg %p105
        %p288 = pneg %p129
        %p289 = pneg %p126
        %p290 = pneg %p155
        %p291 = pneg %p152
        %s292 = sand.u32 %s142, 1
        %s293 = scalar_lea.sflag [#allocation7], %s292
        %s294 = sand.u32 %s142, 1
        %s295 = smul.addr %s294, 128
        %s296 = scalar_lea.vmem [#allocation14], %s295
        %vm298 = vcmask 261120
        %299 = vst.msk [vmem:[#allocation3] sm:$0xff] %vm298, 0
        %300 = vst.msk [vmem:[#allocation3 + $0x8] sm:$0xff] %vm298, 0
        %301 = vst.msk [vmem:[#allocation3 + $0x10] sm:$0xff] %vm298, 0
        %302 = vst.msk [vmem:[#allocation3 + $0x18] sm:$0xff] %vm298, 0
        %303 = vst.msk [vmem:[#allocation3 + $0x20] sm:$0xff] %vm298, 0
        %304 = vst.msk [vmem:[#allocation3 + $0x28] sm:$0xff] %vm298, 0
        %305 = vst.msk [vmem:[#allocation3 + $0x30] sm:$0xff] %vm298, 0
        %306 = vst.msk [vmem:[#allocation3 + $0x38] sm:$0xff] %vm298, 0
        %307 = vst.msk [vmem:[#allocation3 + $0x40] sm:$0xff] %vm298, 0
        %308 = vst.msk [vmem:[#allocation3 + $0x48] sm:$0xff] %vm298, 0
        %s309 = scalar_lea.vmem [#allocation3], 208
        %310 = vst.msk [vmem:[%s309] sm:$0xff] %vm298, 0
        %311 = vst.msk [vmem:[%s309 + $0x8] sm:$0xff] %vm298, 0
        %312 = vst.msk [vmem:[%s309 + $0x10] sm:$0xff] %vm298, 0
        %313 = vst.msk [vmem:[%s309 + $0x18] sm:$0xff] %vm298, 0
        %314 = vst.msk [vmem:[%s309 + $0x20] sm:$0xff] %vm298, 0
        %315 = vst.msk [vmem:[%s309 + $0x28] sm:$0xff] %vm298, 0
        %316 = vst.msk [vmem:[%s309 + $0x30] sm:$0xff] %vm298, 0
        %317 = vst.msk [vmem:[%s309 + $0x38] sm:$0xff] %vm298, 0
        %318 = vst.msk [vmem:[%s309 + $0x40] sm:$0xff] %vm298, 0
        %319 = vst.msk [vmem:[%s309 + $0x48] sm:$0xff] %vm298, 0
        %s320 = scalar_lea.vmem [#allocation3], 288
        %321 = vst.msk [vmem:[%s320] sm:$0xff] %vm298, 0
        %322 = vst.msk [vmem:[%s320 + $0x8] sm:$0xff] %vm298, 0
        %323 = vst.msk [vmem:[%s320 + $0x10] sm:$0xff] %vm298, 0
        %324 = vst.msk [vmem:[%s320 + $0x18] sm:$0xff] %vm298, 0
        %325 = vst.msk [vmem:[%s320 + $0x20] sm:$0xff] %vm298, 0
        %326 = vst.msk [vmem:[%s320 + $0x28] sm:$0xff] %vm298, 0
        %327 = vst.msk [vmem:[%s320 + $0x30] sm:$0xff] %vm298, 0
        %328 = vst.msk [vmem:[%s320 + $0x38] sm:$0xff] %vm298, 0
        %329 = vst.msk [vmem:[%s320 + $0x40] sm:$0xff] %vm298, 0
        %330 = vst.msk [vmem:[%s320 + $0x48] sm:$0xff] %vm298, 0
        %s331 = scalar_lea.vmem [#allocation3], 496
        %332 = vst.msk [vmem:[%s331] sm:$0xff] %vm298, 0
        %333 = vst.msk [vmem:[%s331 + $0x8] sm:$0xff] %vm298, 0
        %334 = vst.msk [vmem:[%s331 + $0x10] sm:$0xff] %vm298, 0
        %335 = vst.msk [vmem:[%s331 + $0x18] sm:$0xff] %vm298, 0
        %336 = vst.msk [vmem:[%s331 + $0x20] sm:$0xff] %vm298, 0
        %337 = vst.msk [vmem:[%s331 + $0x28] sm:$0xff] %vm298, 0
        %338 = vst.msk [vmem:[%s331 + $0x30] sm:$0xff] %vm298, 0
        %339 = vst.msk [vmem:[%s331 + $0x38] sm:$0xff] %vm298, 0
        %340 = vst.msk [vmem:[%s331 + $0x40] sm:$0xff] %vm298, 0
        %341 = vst.msk [vmem:[%s331 + $0x48] sm:$0xff] %vm298, 0
        %s342 = scalar_lea.vmem [#allocation3], 576
        %343 = vst.msk [vmem:[%s342] sm:$0xff] %vm298, 0
        %344 = vst.msk [vmem:[%s342 + $0x8] sm:$0xff] %vm298, 0
        %345 = vst.msk [vmem:[%s342 + $0x10] sm:$0xff] %vm298, 0
        %346 = vst.msk [vmem:[%s342 + $0x18] sm:$0xff] %vm298, 0
        %347 = vst.msk [vmem:[%s342 + $0x20] sm:$0xff] %vm298, 0
        %348 = vst.msk [vmem:[%s342 + $0x28] sm:$0xff] %vm298, 0
        %349 = vst.msk [vmem:[%s342 + $0x30] sm:$0xff] %vm298, 0
        %350 = vst.msk [vmem:[%s342 + $0x38] sm:$0xff] %vm298, 0
        %351 = vst.msk [vmem:[%s342 + $0x40] sm:$0xff] %vm298, 0
        %352 = vst.msk [vmem:[%s342 + $0x48] sm:$0xff] %vm298, 0
        %s353 = scalar_lea.vmem [#allocation3], 784
        %354 = vst.msk [vmem:[%s353] sm:$0xff] %vm298, 0
        %355 = vst.msk [vmem:[%s353 + $0x8] sm:$0xff] %vm298, 0
        %356 = vst.msk [vmem:[%s353 + $0x10] sm:$0xff] %vm298, 0
        %357 = vst.msk [vmem:[%s353 + $0x18] sm:$0xff] %vm298, 0
        %358 = vst.msk [vmem:[%s353 + $0x20] sm:$0xff] %vm298, 0
        %359 = vst.msk [vmem:[%s353 + $0x28] sm:$0xff] %vm298, 0
        %360 = vst.msk [vmem:[%s353 + $0x30] sm:$0xff] %vm298, 0
        %361 = vst.msk [vmem:[%s353 + $0x38] sm:$0xff] %vm298, 0
        %362 = vst.msk [vmem:[%s353 + $0x40] sm:$0xff] %vm298, 0
        %363 = vst.msk [vmem:[%s353 + $0x48] sm:$0xff] %vm298, 0
        %364 = vst.msk [vmem:[#allocation2] sm:$0xff] %vm298, 0.0
        %365 = vst.msk [vmem:[#allocation2 + $0x8] sm:$0xff] %vm298, 0.0
        loop: start=0, step=1, limit=4
        $region61: #{tpu_custom_call.1} parent=39 // loop_pre_header
          _
        $region62: #{tpu_custom_call.1} parent=39 // loop_header
          %s367 = sphi 0, %s371
          %p368 = scmp.ge.s32.totalorder %s367, 4
        $region63: #{tpu_custom_call.1} parent=39 // loop_header_branch
          %370 = sbr.rel (%p368) target = $region67
        $region64: #{tpu_custom_call.1} parent=39 // loop_body
          %v372 = vld [vmem:[#allocation2] sm:$0xff]
          %v373 = vld [vmem:[#allocation2 + $0x8] sm:$0xff]
          %s374 = smul.u32 %s367, 2
          %s375 = smul.addr %s374, 4
          %s376 = scalar_lea.vmem %s254, %s375 [#allocation5]
          %v377 = vld [vmem:[%s376] sm:$0xf]
          %v378 = vld [vmem:[%s376 + $0x4] sm:$0xf]
          %v379 = vunpack.c.l.bf16 %v377
          %v380 = vunpack.c.l.bf16 %v378
          %v381 = vadd.f32 %v372, %v379
          %v382 = vadd.f32 %v373, %v380
          %383 = vst.msk [vmem:[#allocation2] sm:$0xff] %vm298, %v381
          %384 = vst.msk [vmem:[#allocation2 + $0x8] sm:$0xff] %vm298, %v382
        $region65: #{tpu_custom_call.1} parent=39 // loop_footer
          %s371 = sadd.s32 1, %s367
        $region66: #{tpu_custom_call.1} parent=39 // loop_footer_branch
          %366 = sbr.rel target = $region62
        $region67: #{tpu_custom_call.1} parent=39 // loop_exit
          _
        %v385 = vld [vmem:[#allocation8] sm:$0xf]
        %v386 = vld [vmem:[#allocation8 + $0x4] sm:$0xf]
        %v387 = vld [vmem:[#allocation8 + $0x8] sm:$0xf]
        %v388 = vld [vmem:[#allocation8 + $0xc] sm:$0xf]
        %v389 = vld [vmem:[#allocation8 + $0x10] sm:$0xf]
        %v390 = vld [vmem:[#allocation8 + $0x14] sm:$0xf]
        %v391 = vld [vmem:[#allocation2] sm:$0xff]
        %v392 = vld [vmem:[#allocation2 + $0x8] sm:$0xff]
        %v393 = vpack.c.bf16 %v392, %v391
        %v400 = vunpack.c.l.b16 %v385
        %v401 = vunpack.c.l.b16 %v386
        %v402 = vunpack.c.l.b16 %v387
        %v403 = vunpack.c.l.b16 %v388
        %v404 = vunpack.c.l.b16 %v389
        %v405 = vunpack.c.l.b16 %v390
        %v406 = vpack.c.b16 %v401, %v400
        %v407 = vpack.c.b16 %v403, %v402
        %v408 = vpack.c.b16 %v405, %v404
        %vm409 = vcmask 130048
        %v411 = vsel %vm409, %v406, 0
        %v414 = vsel %vm409, %v407, 0
        %v417 = vsel %vm409, %v408, 0
        %419 = vmatprep.subr.bf16.mxu0 0
        %420 = vmatpush1.bf16.msra.mxu0 %v393
        %421 = vmatprep.subr.bf16.mxu0 0
        %422 = vmatpush1.bf16.msra.mxu0 0
        %423 = vmatprep.subr.bf16.mxu0 0
        %424 = vmatpush1.bf16.msra.mxu0 0
        %425 = vmatprep.subr.bf16.mxu0 0
        %426 = vmatpush1.bf16.msra.mxu0 0
        %427 = vmatprep.subr.bf16.mxu0 0
        %428 = vmatpush1.bf16.msra.mxu0 0
        %429 = vmatprep.subr.bf16.mxu0 0
        %430 = vmatpush1.bf16.msra.mxu0 0
        %431 = vmatprep.subr.bf16.mxu0 0
        %432 = vmatpush1.bf16.msra.mxu0 0
        %433 = vmatprep.subr.bf16.mxu0 0
        %434 = vmatpush1.bf16.msra.mxu0 0
        %435 = vmatprep.subr.bf16.mxu0 0
        %436 = vmatpush1.bf16.msra.mxu0 0
        %437 = vmatprep.subr.bf16.mxu0 0
        %438 = vmatpush1.bf16.msra.mxu0 0
        %439 = vmatprep.subr.bf16.mxu0 0
        %440 = vmatpush1.bf16.msra.mxu0 0
        %441 = vmatprep.subr.bf16.mxu0 0
        %442 = vmatpush1.bf16.msra.mxu0 0
        %443 = vmatprep.subr.bf16.mxu0 0
        %444 = vmatpush1.bf16.msra.mxu0 0
        %445 = vmatprep.subr.bf16.mxu0 0
        %446 = vmatpush1.bf16.msra.mxu0 0
        %447 = vmatprep.subr.bf16.mxu0 0
        %448 = vmatpush1.bf16.msra.mxu0 0
        %449 = vmatprep.subr.bf16.mxu0 0
        %450 = vmatpush1.bf16.msra.mxu0 0
        %451 = vmatprep.mubr.bf16.mxu0 0
        %452 = vmatmul.mubr.bf16.gmra.mrb[0].mxu0 %v411
        %v453 = vpop.f32.mrb[0].mxu0
        %v454 = vadd.f32 0.0, %v453
        %v455 = vpop.f32.mrb[0].mxu0
        %v456 = vpop.f32.mrb[0].mxu0
        %v457 = vadd.f32 0.0, %v456
        %v458 = vpop.f32.mrb[0].mxu0
        %459 = vmatprep.mubr.bf16.mxu0 0
        %460 = vmatmul.mubr.bf16.gmra.mrb[0].mxu0 %v414
        %v461 = vpop.f32.mrb[0].mxu0
        %v462 = vadd.f32 0.0, %v461
        %v463 = vpop.f32.mrb[0].mxu0
        %v464 = vpop.f32.mrb[0].mxu0
        %v465 = vadd.f32 0.0, %v464
        %v466 = vpop.f32.mrb[0].mxu0
        %467 = vmatprep.mubr.bf16.mxu0 0
        %468 = vmatmul.mubr.bf16.gmra.mrb[0].mxu0 %v417
        %v469 = vpop.f32.mrb[0].mxu0
        %v470 = vadd.f32 0.0, %v469
        %v471 = vpop.f32.mrb[0].mxu0
        %v472 = vpop.f32.mrb[0].mxu0
        %v473 = vadd.f32 0.0, %v472
        %v474 = vpop.f32.mrb[0].mxu0
        %475 = vdwg.mxu0
        %v476 = vpack.c.bf16 %v457, %v454
        %v477 = vpack.c.bf16 %v465, %v462
        %v478 = vpack.c.bf16 %v473, %v470
        %s479 = scalar_lea.vmem [#allocation3], 80
        %480 = vst.msk [vmem:[%s479] sm:$0xff] %vm298, %v476
        %s481 = scalar_lea.vmem [#allocation3], 368
        %482 = vst.msk [vmem:[%s481] sm:$0xff] %vm298, %v477
        %s483 = scalar_lea.vmem [#allocation3], 656
        %484 = vst.msk [vmem:[%s483] sm:$0xff] %vm298, %v478
        loop: start=1, step=1, limit=16
        $region68: #{tpu_custom_call.1} parent=39 // loop_pre_header
          _
        $region69: #{tpu_custom_call.1} parent=39 // loop_header
          %s486 = sphi 1, %s490
          %p487 = scmp.ge.s32.totalorder %s486, 16
        $region70: #{tpu_custom_call.1} parent=39 // loop_header_branch
          %489 = sbr.rel (%p487) target = $region74
        $region71: #{tpu_custom_call.1} parent=39 // loop_body
          %s491 = sadd.s32 %s486, 3
          %p492 = scmp.lt.s32.totalorder %s491, 16
          // Predicated region
          $region75: #{tpu_custom_call.1} parent=71 // pred_check
            %p493 = pneg %p492
          $region76: #{tpu_custom_call.1} parent=71 // pred_check_branch
            %495 = sbr.rel (%p493) target = $region78
          $region77: #{tpu_custom_call.1} parent=71 // pred_region
            %v496 = vld [vmem:[#allocation2] sm:$0xff]
            %v497 = vld [vmem:[#allocation2 + $0x8] sm:$0xff]
            %s498 = smul.u32 %s491, 2
            %s499 = smul.addr %s498, 4
            %s500 = scalar_lea.vmem %s254, %s499 [#allocation5]
            %v501 = vld [vmem:[%s500] sm:$0xf]
            %v502 = vld [vmem:[%s500 + $0x4] sm:$0xf]
            %v503 = vunpack.c.l.bf16 %v501
            %v504 = vunpack.c.l.bf16 %v502
            %v505 = vadd.f32 %v496, %v503
            %v506 = vadd.f32 %v497, %v504
            %507 = vst.msk [vmem:[#allocation2] sm:$0xff] %vm298, %v505
            %508 = vst.msk [vmem:[#allocation2 + $0x8] sm:$0xff] %vm298, %v506
          $region78: #{tpu_custom_call.1} parent=71 // pred_fallthru
            _
          %s509 = ssub.s32 %s486, 4
          %p510 = scmp.ge.s32.totalorder %s509, 0
          // Predicated region
          $region79: #{tpu_custom_call.1} parent=71 // pred_check
            %p511 = pneg %p510
          $region80: #{tpu_custom_call.1} parent=71 // pred_check_branch
            %513 = sbr.rel (%p511) target = $region82
          $region81: #{tpu_custom_call.1} parent=71 // pred_region
            %v514 = vld [vmem:[#allocation2] sm:$0xff]
            %v515 = vld [vmem:[#allocation2 + $0x8] sm:$0xff]
            %s516 = smul.u32 %s509, 2
            %s517 = smul.addr %s516, 4
            %s518 = scalar_lea.vmem %s254, %s517 [#allocation5]
            %v519 = vld [vmem:[%s518] sm:$0xf]
            %v520 = vld [vmem:[%s518 + $0x4] sm:$0xf]
            %v521 = vunpack.c.l.bf16 %v519
            %v522 = vunpack.c.l.bf16 %v520
            %v523 = vsub.f32 %v514, %v521
            %v524 = vsub.f32 %v515, %v522
            %525 = vst.msk [vmem:[#allocation2] sm:$0xff] %vm298, %v523
            %526 = vst.msk [vmem:[#allocation2 + $0x8] sm:$0xff] %vm298, %v524
          $region82: #{tpu_custom_call.1} parent=71 // pred_fallthru
            _
          %v527 = vld [vmem:[#allocation2] sm:$0xff]
          %v528 = vld [vmem:[#allocation2 + $0x8] sm:$0xff]
          %v529 = vpack.c.bf16 %v528, %v527
          %530 = vmatprep.subr.bf16.mxu0 0
          %531 = vmatpush1.bf16.msra.mxu0 %v529
          %532 = vmatprep.subr.bf16.mxu0 0
          %533 = vmatpush1.bf16.msra.mxu0 0
          %534 = vmatprep.subr.bf16.mxu0 0
          %535 = vmatpush1.bf16.msra.mxu0 0
          %536 = vmatprep.subr.bf16.mxu0 0
          %537 = vmatpush1.bf16.msra.mxu0 0
          %538 = vmatprep.subr.bf16.mxu0 0
          %539 = vmatpush1.bf16.msra.mxu0 0
          %540 = vmatprep.subr.bf16.mxu0 0
          %541 = vmatpush1.bf16.msra.mxu0 0
          %542 = vmatprep.subr.bf16.mxu0 0
          %543 = vmatpush1.bf16.msra.mxu0 0
          %544 = vmatprep.subr.bf16.mxu0 0
          %545 = vmatpush1.bf16.msra.mxu0 0
          %546 = vmatprep.subr.bf16.mxu0 0
          %547 = vmatpush1.bf16.msra.mxu0 0
          %548 = vmatprep.subr.bf16.mxu0 0
          %549 = vmatpush1.bf16.msra.mxu0 0
          %550 = vmatprep.subr.bf16.mxu0 0
          %551 = vmatpush1.bf16.msra.mxu0 0
          %552 = vmatprep.subr.bf16.mxu0 0
          %553 = vmatpush1.bf16.msra.mxu0 0
          %554 = vmatprep.subr.bf16.mxu0 0
          %555 = vmatpush1.bf16.msra.mxu0 0
          %556 = vmatprep.subr.bf16.mxu0 0
          %557 = vmatpush1.bf16.msra.mxu0 0
          %558 = vmatprep.subr.bf16.mxu0 0
          %559 = vmatpush1.bf16.msra.mxu0 0
          %560 = vmatprep.subr.bf16.mxu0 0
          %561 = vmatpush1.bf16.msra.mxu0 0
          %562 = vmatprep.mubr.bf16.mxu0 0
          %563 = vmatmul.mubr.bf16.gmra.mrb[0].mxu0 %v411
          %v564 = vpop.f32.mrb[0].mxu0
          %v565 = vadd.f32 0.0, %v564
          %v566 = vpop.f32.mrb[0].mxu0
          %v567 = vpop.f32.mrb[0].mxu0
          %v568 = vadd.f32 0.0, %v567
          %v569 = vpop.f32.mrb[0].mxu0
          %570 = vmatprep.mubr.bf16.mxu0 0
          %571 = vmatmul.mubr.bf16.gmra.mrb[0].mxu0 %v414
          %v572 = vpop.f32.mrb[0].mxu0
          %v573 = vadd.f32 0.0, %v572
          %v574 = vpop.f32.mrb[0].mxu0
          %v575 = vpop.f32.mrb[0].mxu0
          %v576 = vadd.f32 0.0, %v575
          %v577 = vpop.f32.mrb[0].mxu0
          %578 = vmatprep.mubr.bf16.mxu0 0
          %579 = vmatmul.mubr.bf16.gmra.mrb[0].mxu0 %v417
          %v580 = vpop.f32.mrb[0].mxu0
          %v581 = vadd.f32 0.0, %v580
          %v582 = vpop.f32.mrb[0].mxu0
          %v583 = vpop.f32.mrb[0].mxu0
          %v584 = vadd.f32 0.0, %v583
          %v585 = vpop.f32.mrb[0].mxu0
          %586 = vdwg.mxu0
          %v587 = vpack.c.bf16 %v568, %v565
          %v588 = vpack.c.bf16 %v576, %v573
          %v589 = vpack.c.bf16 %v584, %v581
          %s590 = sadd.s32 %s486, 10
          %s591 = smul.addr %s590, 8
          %s592 = scalar_lea.vmem [#allocation3], %s591
          %593 = vst.msk [vmem:[%s592] sm:$0xff] %vm298, %v587
          %s594 = sadd.s32 %s590, 36
          %s595 = smul.addr %s594, 8
          %s596 = scalar_lea.vmem [#allocation3], %s595
          %597 = vst.msk [vmem:[%s596] sm:$0xff] %vm298, %v588
          %s598 = sadd.s32 %s590, 72
          %s599 = smul.addr %s598, 8
          %s600 = scalar_lea.vmem [#allocation3], %s599
          %601 = vst.msk [vmem:[%s600] sm:$0xff] %vm298, %v589
        $region72: #{tpu_custom_call.1} parent=39 // loop_footer
          %s490 = sadd.s32 1, %s486
        $region73: #{tpu_custom_call.1} parent=39 // loop_footer_branch
          %485 = sbr.rel target = $region69
        $region74: #{tpu_custom_call.1} parent=39 // loop_exit
          _
        %vm602 = vcmask 64512
        %603 = vst.msk [vmem:[#allocation4] sm:$0xff] %vm602, 0.0
        %604 = vst.msk [vmem:[#allocation4 + $0x8] sm:$0xff] %vm602, 0.0
        %605 = vst.msk [vmem:[#allocation4 + $0x10] sm:$0xff] %vm602, 0.0
        %606 = vst.msk [vmem:[#allocation4 + $0x18] sm:$0xff] %vm602, 0.0
        %607 = vst.msk [vmem:[#allocation4 + $0x20] sm:$0xff] %vm602, 0.0
        %608 = vst.msk [vmem:[#allocation4 + $0x28] sm:$0xff] %vm602, 0.0
        %609 = vst.msk [vmem:[#allocation4 + $0x30] sm:$0xff] %vm602, 0.0
        %610 = vst.msk [vmem:[#allocation4 + $0x38] sm:$0xff] %vm602, 0.0
        %611 = vst.msk [vmem:[#allocation4 + $0x40] sm:$0xff] %vm602, 0.0
        %612 = vst.msk [vmem:[#allocation4 + $0x48] sm:$0xff] %vm602, 0.0
        %613 = vst.msk [vmem:[#allocation4 + $0x50] sm:$0xff] %vm602, 0.0
        %614 = vst.msk [vmem:[#allocation4 + $0x58] sm:$0xff] %vm602, 0.0
        %615 = vst.msk [vmem:[#allocation4 + $0x60] sm:$0xff] %vm602, 0.0
        %616 = vst.msk [vmem:[#allocation4 + $0x68] sm:$0xff] %vm602, 0.0
        %617 = vst.msk [vmem:[#allocation4 + $0x70] sm:$0xff] %vm602, 0.0
        %618 = vst.msk [vmem:[#allocation4 + $0x78] sm:$0xff] %vm602, 0.0
        %619 = vst.msk [vmem:[#allocation4 + $0x80] sm:$0xff] %vm602, 0.0
        %620 = vst.msk [vmem:[#allocation4 + $0x88] sm:$0xff] %vm602, 0.0
        %621 = vst.msk [vmem:[#allocation4 + $0x90] sm:$0xff] %vm602, 0.0
        %622 = vst.msk [vmem:[#allocation4 + $0x98] sm:$0xff] %vm602, 0.0
        %623 = vst.msk [vmem:[#allocation4 + $0xa0] sm:$0xff] %vm602, 0.0
        %624 = vst.msk [vmem:[#allocation4 + $0xa8] sm:$0xff] %vm602, 0.0
        %625 = vst.msk [vmem:[#allocation4 + $0xb0] sm:$0xff] %vm602, 0.0
        %626 = vst.msk [vmem:[#allocation4 + $0xb8] sm:$0xff] %vm602, 0.0
        %627 = vst.msk [vmem:[#allocation4 + $0xc0] sm:$0xff] %vm602, 0.0
        %628 = vst.msk [vmem:[#allocation4 + $0xc8] sm:$0xff] %vm602, 0.0
        %629 = vst.msk [vmem:[#allocation4 + $0xd0] sm:$0xff] %vm602, 0.0
        %630 = vst.msk [vmem:[#allocation4 + $0xd8] sm:$0xff] %vm602, 0.0
        %631 = vst.msk [vmem:[#allocation4 + $0xe0] sm:$0xff] %vm602, 0.0
        %632 = vst.msk [vmem:[#allocation4 + $0xe8] sm:$0xff] %vm602, 0.0
        %633 = vst.msk [vmem:[#allocation4 + $0xf0] sm:$0xff] %vm602, 0.0
        %634 = vst.msk [vmem:[#allocation4 + $0xf8] sm:$0xff] %vm602, 0.0
        %v635 = vld [vmem:[#allocation3] sm:$0xff]
        %v636 = vld [vmem:[#allocation3 + $0x8] sm:$0xff]
        %v637 = vld [vmem:[#allocation3 + $0x10] sm:$0xff]
        %v638 = vld [vmem:[#allocation3 + $0x18] sm:$0xff]
        %v639 = vld [vmem:[#allocation3 + $0x20] sm:$0xff]
        %v640 = vld [vmem:[#allocation3 + $0x28] sm:$0xff]
        %v641 = vld [vmem:[#allocation3 + $0x30] sm:$0xff]
        %v642 = vld [vmem:[#allocation3 + $0x38] sm:$0xff]
        %v643 = vld [vmem:[#allocation3 + $0x40] sm:$0xff]
        %v644 = vld [vmem:[#allocation3 + $0x48] sm:$0xff]
        %v645 = vld [vmem:[#allocation3 + $0x50] sm:$0xff]
        %v646 = vld [vmem:[#allocation3 + $0x58] sm:$0xff]
        %v647 = vld [vmem:[#allocation3 + $0x60] sm:$0xff]
        %v648 = vld [vmem:[#allocation3 + $0x68] sm:$0xff]
        %v649 = vld [vmem:[#allocation3 + $0x70] sm:$0xff]
        %v650 = vld [vmem:[#allocation3 + $0x78] sm:$0xff]
        %v651 = vld [vmem:[#allocation4] sm:$0xff]
        %v652 = vld [vmem:[#allocation4 + $0x8] sm:$0xff]
        %v653 = vld [vmem:[#allocation4 + $0x10] sm:$0xff]
        %v654 = vld [vmem:[#allocation4 + $0x18] sm:$0xff]
        %v655 = vld [vmem:[#allocation4 + $0x20] sm:$0xff]
        %v656 = vld [vmem:[#allocation4 + $0x28] sm:$0xff]
        %v657 = vld [vmem:[#allocation4 + $0x30] sm:$0xff]
        %v658 = vld [vmem:[#allocation4 + $0x38] sm:$0xff]
        %v659 = vld [vmem:[#allocation4 + $0x40] sm:$0xff]
        %v660 = vld [vmem:[#allocation4 + $0x48] sm:$0xff]
        %v661 = vld [vmem:[#allocation4 + $0x50] sm:$0xff]
        %v662 = vld [vmem:[#allocation4 + $0x58] sm:$0xff]
        %v663 = vld [vmem:[#allocation4 + $0x60] sm:$0xff]
        %v664 = vld [vmem:[#allocation4 + $0x68] sm:$0xff]
        %v665 = vld [vmem:[#allocation4 + $0x70] sm:$0xff]
        %v666 = vld [vmem:[#allocation4 + $0x78] sm:$0xff]
        %v667 = vld [vmem:[#allocation4 + $0x80] sm:$0xff]
        %v668 = vld [vmem:[#allocation4 + $0x88] sm:$0xff]
        %v669 = vld [vmem:[#allocation4 + $0x90] sm:$0xff]
        %v670 = vld [vmem:[#allocation4 + $0x98] sm:$0xff]
        %v671 = vld [vmem:[#allocation4 + $0xa0] sm:$0xff]
        %v672 = vld [vmem:[#allocation4 + $0xa8] sm:$0xff]
        %v673 = vld [vmem:[#allocation4 + $0xb0] sm:$0xff]
        %v674 = vld [vmem:[#allocation4 + $0xb8] sm:$0xff]
        %v675 = vld [vmem:[#allocation4 + $0xc0] sm:$0xff]
        %v676 = vld [vmem:[#allocation4 + $0xc8] sm:$0xff]
        %v677 = vld [vmem:[#allocation4 + $0xd0] sm:$0xff]
        %v678 = vld [vmem:[#allocation4 + $0xd8] sm:$0xff]
        %v679 = vld [vmem:[#allocation4 + $0xe0] sm:$0xff]
        %v680 = vld [vmem:[#allocation4 + $0xe8] sm:$0xff]
        %v681 = vld [vmem:[#allocation4 + $0xf0] sm:$0xff]
        %v682 = vld [vmem:[#allocation4 + $0xf8] sm:$0xff]
        %v683 = vld [vmem:[#allocation10] sm:$0xf]
        %v684 = vld [vmem:[#allocation10 + $0x4] sm:$0xf]
        %v685 = vld [vmem:[#allocation10 + $0x8] sm:$0xf]
        %v686 = vld [vmem:[#allocation10 + $0xc] sm:$0xf]
        %v691 = vunpack.c.l.b16 %v683
        %v692 = vunpack.c.l.b16 %v684
        %v693 = vunpack.c.l.b16 %v685
        %v694 = vunpack.c.l.b16 %v686
        %v695 = vpack.c.b16 %v692, %v691
        %v696 = vpack.c.b16 %v694, %v693
        %v700 = vsel %vm298, %v635, 0
        %v703 = vsel %vm298, %v636, 0
        %v706 = vsel %vm298, %v637, 0
        %v709 = vsel %vm298, %v638, 0
        %v712 = vsel %vm298, %v639, 0
        %v715 = vsel %vm298, %v640, 0
        %v718 = vsel %vm298, %v641, 0
        %v721 = vsel %vm298, %v642, 0
        %v724 = vsel %vm298, %v643, 0
        %v727 = vsel %vm298, %v644, 0
        %v730 = vsel %vm298, %v645, 0
        %v733 = vsel %vm298, %v646, 0
        %v736 = vsel %vm298, %v647, 0
        %v739 = vsel %vm298, %v648, 0
        %v742 = vsel %vm298, %v649, 0
        %v745 = vsel %vm298, %v650, 0
        %747 = vmatprep.subr.bf16.mxu0 0
        %748 = vmatpush1.bf16.msra.mxu0 %v695
        %749 = vmatprep.subr.bf16.mxu0 0
        %750 = vmatpush1.bf16.msra.mxu0 %v696
        %751 = vmatprep.subr.bf16.mxu0 0
        %752 = vmatpush1.bf16.msra.mxu0 0
        %753 = vmatprep.subr.bf16.mxu0 0
        %754 = vmatpush1.bf16.msra.mxu0 0
        %755 = vmatprep.subr.bf16.mxu0 0
        %756 = vmatpush1.bf16.msra.mxu0 0
        %757 = vmatprep.subr.bf16.mxu0 0
        %758 = vmatpush1.bf16.msra.mxu0 0
        %759 = vmatprep.subr.bf16.mxu0 0
        %760 = vmatpush1.bf16.msra.mxu0 0
        %761 = vmatprep.subr.bf16.mxu0 0
        %762 = vmatpush1.bf16.msra.mxu0 0
        %763 = vmatprep.subr.bf16.mxu0 0
        %764 = vmatpush1.bf16.msra.mxu0 0
        %765 = vmatprep.subr.bf16.mxu0 0
        %766 = vmatpush1.bf16.msra.mxu0 0
        %767 = vmatprep.subr.bf16.mxu0 0
        %768 = vmatpush1.bf16.msra.mxu0 0
        %769 = vmatprep.subr.bf16.mxu0 0
        %770 = vmatpush1.bf16.msra.mxu0 0
        %771 = vmatprep.subr.bf16.mxu0 0
        %772 = vmatpush1.bf16.msra.mxu0 0
        %773 = vmatprep.subr.bf16.mxu0 0
        %774 = vmatpush1.bf16.msra.mxu0 0
        %775 = vmatprep.subr.bf16.mxu0 0
        %776 = vmatpush1.bf16.msra.mxu0 0
        %777 = vmatprep.subr.bf16.mxu0 0
        %778 = vmatpush1.bf16.msra.mxu0 0
        %779 = vmatprep.mubr.bf16.mxu0 0
        %780 = vmatmul.mubr.bf16.gmra.mrb[0].mxu0 %v700
        %v781 = vpop.f32.mrb[0].mxu0
        %v782 = vadd.f32 0.0, %v781
        %v783 = vpop.f32.mrb[0].mxu0
        %v784 = vpop.f32.mrb[0].mxu0
        %v785 = vadd.f32 0.0, %v784
        %v786 = vpop.f32.mrb[0].mxu0
        %787 = vmatprep.mubr.bf16.mxu0 0
        %788 = vmatmul.mubr.bf16.gmra.mrb[0].mxu0 %v703
        %v789 = vpop.f32.mrb[0].mxu0
        %v790 = vadd.f32 0.0, %v789
        %v791 = vpop.f32.mrb[0].mxu0
        %v792 = vpop.f32.mrb[0].mxu0
        %v793 = vadd.f32 0.0, %v792
        %v794 = vpop.f32.mrb[0].mxu0
        %795 = vmatprep.mubr.bf16.mxu0 0
        %796 = vmatmul.mubr.bf16.gmra.mrb[0].mxu0 %v706
        %v797 = vpop.f32.mrb[0].mxu0
        %v798 = vadd.f32 0.0, %v797
        %v799 = vpop.f32.mrb[0].mxu0
        %v800 = vpop.f32.mrb[0].mxu0
        %v801 = vadd.f32 0.0, %v800
        %v802 = vpop.f32.mrb[0].mxu0
        %803 = vmatprep.mubr.bf16.mxu0 0
        %804 = vmatmul.mubr.bf16.gmra.mrb[0].mxu0 %v709
        %v805 = vpop.f32.mrb[0].mxu0
        %v806 = vadd.f32 0.0, %v805
        %v807 = vpop.f32.mrb[0].mxu0
        %v808 = vpop.f32.mrb[0].mxu0
        %v809 = vadd.f32 0.0, %v808
        %v810 = vpop.f32.mrb[0].mxu0
        %811 = vmatprep.mubr.bf16.mxu0 0
        %812 = vmatmul.mubr.bf16.gmra.mrb[0].mxu0 %v712
        %v813 = vpop.f32.mrb[0].mxu0
        %v814 = vadd.f32 0.0, %v813
        %v815 = vpop.f32.mrb[0].mxu0
        %v816 = vpop.f32.mrb[0].mxu0
        %v817 = vadd.f32 0.0, %v816
        %v818 = vpop.f32.mrb[0].mxu0
        %819 = vmatprep.mubr.bf16.mxu0 0
        %820 = vmatmul.mubr.bf16.gmra.mrb[0].mxu0 %v715
        %v821 = vpop.f32.mrb[0].mxu0
        %v822 = vadd.f32 0.0, %v821
        %v823 = vpop.f32.mrb[0].mxu0
        %v824 = vpop.f32.mrb[0].mxu0
        %v825 = vadd.f32 0.0, %v824
        %v826 = vpop.f32.mrb[0].mxu0
        %827 = vmatprep.mubr.bf16.mxu0 0
        %828 = vmatmul.mubr.bf16.gmra.mrb[0].mxu0 %v718
        %v829 = vpop.f32.mrb[0].mxu0
        %v830 = vadd.f32 0.0, %v829
        %v831 = vpop.f32.mrb[0].mxu0
        %v832 = vpop.f32.mrb[0].mxu0
        %v833 = vadd.f32 0.0, %v832
        %v834 = vpop.f32.mrb[0].mxu0
        %835 = vmatprep.mubr.bf16.mxu0 0
        %836 = vmatmul.mubr.bf16.gmra.mrb[0].mxu0 %v721
        %v837 = vpop.f32.mrb[0].mxu0
        %v838 = vadd.f32 0.0, %v837
        %v839 = vpop.f32.mrb[0].mxu0
        %v840 = vpop.f32.mrb[0].mxu0
        %v841 = vadd.f32 0.0, %v840
        %v842 = vpop.f32.mrb[0].mxu0
        %843 = vmatprep.mubr.bf16.mxu0 0
        %844 = vmatmul.mubr.bf16.gmra.mrb[0].mxu0 %v724
        %v845 = vpop.f32.mrb[0].mxu0
        %v846 = vadd.f32 0.0, %v845
        %v847 = vpop.f32.mrb[0].mxu0
        %v848 = vpop.f32.mrb[0].mxu0
        %v849 = vadd.f32 0.0, %v848
        %v850 = vpop.f32.mrb[0].mxu0
        %851 = vmatprep.mubr.bf16.mxu0 0
        %852 = vmatmul.mubr.bf16.gmra.mrb[0].mxu0 %v727
        %v853 = vpop.f32.mrb[0].mxu0
        %v854 = vadd.f32 0.0, %v853
        %v855 = vpop.f32.mrb[0].mxu0
        %v856 = vpop.f32.mrb[0].mxu0
        %v857 = vadd.f32 0.0, %v856
        %v858 = vpop.f32.mrb[0].mxu0
        %859 = vmatprep.mubr.bf16.mxu0 0
        %860 = vmatmul.mubr.bf16.gmra.mrb[0].mxu0 %v730
        %v861 = vpop.f32.mrb[0].mxu0
        %v862 = vadd.f32 0.0, %v861
        %v863 = vpop.f32.mrb[0].mxu0
        %v864 = vpop.f32.mrb[0].mxu0
        %v865 = vadd.f32 0.0, %v864
        %v866 = vpop.f32.mrb[0].mxu0
        %867 = vmatprep.mubr.bf16.mxu0 0
        %868 = vmatmul.mubr.bf16.gmra.mrb[0].mxu0 %v733
        %v869 = vpop.f32.mrb[0].mxu0
        %v870 = vadd.f32 0.0, %v869
        %v871 = vpop.f32.mrb[0].mxu0
        %v872 = vpop.f32.mrb[0].mxu0
        %v873 = vadd.f32 0.0, %v872
        %v874 = vpop.f32.mrb[0].mxu0
        %875 = vmatprep.mubr.bf16.mxu0 0
        %876 = vmatmul.mubr.bf16.gmra.mrb[0].mxu0 %v736
        %v877 = vpop.f32.mrb[0].mxu0
        %v878 = vadd.f32 0.0, %v877
        %v879 = vpop.f32.mrb[0].mxu0
        %v880 = vpop.f32.mrb[0].mxu0
        %v881 = vadd.f32 0.0, %v880
        %v882 = vpop.f32.mrb[0].mxu0
        %883 = vmatprep.mubr.bf16.mxu0 0
        %884 = vmatmul.mubr.bf16.gmra.mrb[0].mxu0 %v739
        %v885 = vpop.f32.mrb[0].mxu0
        %v886 = vadd.f32 0.0, %v885
        %v887 = vpop.f32.mrb[0].mxu0
        %v888 = vpop.f32.mrb[0].mxu0
        %v889 = vadd.f32 0.0, %v888
        %v890 = vpop.f32.mrb[0].mxu0
        %891 = vmatprep.mubr.bf16.mxu0 0
        %892 = vmatmul.mubr.bf16.gmra.mrb[0].mxu0 %v742
        %v893 = vpop.f32.mrb[0].mxu0
        %v894 = vadd.f32 0.0, %v893
        %v895 = vpop.f32.mrb[0].mxu0
        %v896 = vpop.f32.mrb[0].mxu0
        %v897 = vadd.f32 0.0, %v896
        %v898 = vpop.f32.mrb[0].mxu0
        %899 = vmatprep.mubr.bf16.mxu0 0
        %900 = vmatmul.mubr.bf16.gmra.mrb[0].mxu0 %v745
        %v901 = vpop.f32.mrb[0].mxu0
        %v902 = vadd.f32 0.0, %v901
        %v903 = vpop.f32.mrb[0].mxu0
        %v904 = vpop.f32.mrb[0].mxu0
        %v905 = vadd.f32 0.0, %v904
        %v906 = vpop.f32.mrb[0].mxu0
        %907 = vdwg.mxu0
        %v908 = vadd.f32 %v651, %v782
        %v909 = vadd.f32 %v652, %v785
        %v910 = vadd.f32 %v653, %v790
        %v911 = vadd.f32 %v654, %v793
        %v912 = vadd.f32 %v655, %v798
        %v913 = vadd.f32 %v656, %v801
        %v914 = vadd.f32 %v657, %v806
        %v915 = vadd.f32 %v658, %v809
        %v916 = vadd.f32 %v659, %v814
        %v917 = vadd.f32 %v660, %v817
        %v918 = vadd.f32 %v661, %v822
        %v919 = vadd.f32 %v662, %v825
        %v920 = vadd.f32 %v663, %v830
        %v921 = vadd.f32 %v664, %v833
        %v922 = vadd.f32 %v665, %v838
        %v923 = vadd.f32 %v666, %v841
        %v924 = vadd.f32 %v667, %v846
        %v925 = vadd.f32 %v668, %v849
        %v926 = vadd.f32 %v669, %v854
        %v927 = vadd.f32 %v670, %v857
        %v928 = vadd.f32 %v671, %v862
        %v929 = vadd.f32 %v672, %v865
        %v930 = vadd.f32 %v673, %v870
        %v931 = vadd.f32 %v674, %v873
        %v932 = vadd.f32 %v675, %v878
        %v933 = vadd.f32 %v676, %v881
        %v934 = vadd.f32 %v677, %v886
        %v935 = vadd.f32 %v678, %v889
        %v936 = vadd.f32 %v679, %v894
        %v937 = vadd.f32 %v680, %v897
        %v938 = vadd.f32 %v681, %v902
        %v939 = vadd.f32 %v682, %v905
        %940 = vst.msk [vmem:[#allocation4] sm:$0xff] %vm602, %v908
        %941 = vst.msk [vmem:[#allocation4 + $0x8] sm:$0xff] %vm602, %v909
        %942 = vst.msk [vmem:[#allocation4 + $0x10] sm:$0xff] %vm602, %v910
        %943 = vst.msk [vmem:[#allocation4 + $0x18] sm:$0xff] %vm602, %v911
        %944 = vst.msk [vmem:[#allocation4 + $0x20] sm:$0xff] %vm602, %v912
        %945 = vst.msk [vmem:[#allocation4 + $0x28] sm:$0xff] %vm602, %v913
        %946 = vst.msk [vmem:[#allocation4 + $0x30] sm:$0xff] %vm602, %v914
        %947 = vst.msk [vmem:[#allocation4 + $0x38] sm:$0xff] %vm602, %v915
        %948 = vst.msk [vmem:[#allocation4 + $0x40] sm:$0xff] %vm602, %v916
        %949 = vst.msk [vmem:[#allocation4 + $0x48] sm:$0xff] %vm602, %v917
        %950 = vst.msk [vmem:[#allocation4 + $0x50] sm:$0xff] %vm602, %v918
        %951 = vst.msk [vmem:[#allocation4 + $0x58] sm:$0xff] %vm602, %v919
        %952 = vst.msk [vmem:[#allocation4 + $0x60] sm:$0xff] %vm602, %v920
        %953 = vst.msk [vmem:[#allocation4 + $0x68] sm:$0xff] %vm602, %v921
        %954 = vst.msk [vmem:[#allocation4 + $0x70] sm:$0xff] %vm602, %v922
        %955 = vst.msk [vmem:[#allocation4 + $0x78] sm:$0xff] %vm602, %v923
        %956 = vst.msk [vmem:[#allocation4 + $0x80] sm:$0xff] %vm602, %v924
        %957 = vst.msk [vmem:[#allocation4 + $0x88] sm:$0xff] %vm602, %v925
        %958 = vst.msk [vmem:[#allocation4 + $0x90] sm:$0xff] %vm602, %v926
        %959 = vst.msk [vmem:[#allocation4 + $0x98] sm:$0xff] %vm602, %v927
        %960 = vst.msk [vmem:[#allocation4 + $0xa0] sm:$0xff] %vm602, %v928
        %961 = vst.msk [vmem:[#allocation4 + $0xa8] sm:$0xff] %vm602, %v929
        %962 = vst.msk [vmem:[#allocation4 + $0xb0] sm:$0xff] %vm602, %v930
        %963 = vst.msk [vmem:[#allocation4 + $0xb8] sm:$0xff] %vm602, %v931
        %964 = vst.msk [vmem:[#allocation4 + $0xc0] sm:$0xff] %vm602, %v932
        %965 = vst.msk [vmem:[#allocation4 + $0xc8] sm:$0xff] %vm602, %v933
        %966 = vst.msk [vmem:[#allocation4 + $0xd0] sm:$0xff] %vm602, %v934
        %967 = vst.msk [vmem:[#allocation4 + $0xd8] sm:$0xff] %vm602, %v935
        %968 = vst.msk [vmem:[#allocation4 + $0xe0] sm:$0xff] %vm602, %v936
        %969 = vst.msk [vmem:[#allocation4 + $0xe8] sm:$0xff] %vm602, %v937
        %970 = vst.msk [vmem:[#allocation4 + $0xf0] sm:$0xff] %vm602, %v938
        %971 = vst.msk [vmem:[#allocation4 + $0xf8] sm:$0xff] %vm602, %v939
        %v972 = vld [vmem:[%s320] sm:$0xff]
        %v973 = vld [vmem:[%s320 + $0x8] sm:$0xff]
        %v974 = vld [vmem:[%s320 + $0x10] sm:$0xff]
        %v975 = vld [vmem:[%s320 + $0x18] sm:$0xff]
        %v976 = vld [vmem:[%s320 + $0x20] sm:$0xff]
        %v977 = vld [vmem:[%s320 + $0x28] sm:$0xff]
        %v978 = vld [vmem:[%s320 + $0x30] sm:$0xff]
        %v979 = vld [vmem:[%s320 + $0x38] sm:$0xff]
        %v980 = vld [vmem:[%s320 + $0x40] sm:$0xff]
        %v981 = vld [vmem:[%s320 + $0x48] sm:$0xff]
        %v982 = vld [vmem:[%s320 + $0x50] sm:$0xff]
        %v983 = vld [vmem:[%s320 + $0x58] sm:$0xff]
        %v984 = vld [vmem:[%s320 + $0x60] sm:$0xff]
        %v985 = vld [vmem:[%s320 + $0x68] sm:$0xff]
        %v986 = vld [vmem:[%s320 + $0x70] sm:$0xff]
        %v987 = vld [vmem:[%s320 + $0x78] sm:$0xff]
        %v988 = vld [vmem:[#allocation4] sm:$0xff]
        %v989 = vld [vmem:[#allocation4 + $0x8] sm:$0xff]
        %v990 = vld [vmem:[#allocation4 + $0x10] sm:$0xff]
        %v991 = vld [vmem:[#allocation4 + $0x18] sm:$0xff]
        %v992 = vld [vmem:[#allocation4 + $0x20] sm:$0xff]
        %v993 = vld [vmem:[#allocation4 + $0x28] sm:$0xff]
        %v994 = vld [vmem:[#allocation4 + $0x30] sm:$0xff]
        %v995 = vld [vmem:[#allocation4 + $0x38] sm:$0xff]
        %v996 = vld [vmem:[#allocation4 + $0x40] sm:$0xff]
        %v997 = vld [vmem:[#allocation4 + $0x48] sm:$0xff]
        %v998 = vld [vmem:[#allocation4 + $0x50] sm:$0xff]
        %v999 = vld [vmem:[#allocation4 + $0x58] sm:$0xff]
        %v1000 = vld [vmem:[#allocation4 + $0x60] sm:$0xff]
        %v1001 = vld [vmem:[#allocation4 + $0x68] sm:$0xff]
        %v1002 = vld [vmem:[#allocation4 + $0x70] sm:$0xff]
        %v1003 = vld [vmem:[#allocation4 + $0x78] sm:$0xff]
        %v1004 = vld [vmem:[#allocation4 + $0x80] sm:$0xff]
        %v1005 = vld [vmem:[#allocation4 + $0x88] sm:$0xff]
        %v1006 = vld [vmem:[#allocation4 + $0x90] sm:$0xff]
        %v1007 = vld [vmem:[#allocation4 + $0x98] sm:$0xff]
        %v1008 = vld [vmem:[#allocation4 + $0xa0] sm:$0xff]
        %v1009 = vld [vmem:[#allocation4 + $0xa8] sm:$0xff]
        %v1010 = vld [vmem:[#allocation4 + $0xb0] sm:$0xff]
        %v1011 = vld [vmem:[#allocation4 + $0xb8] sm:$0xff]
        %v1012 = vld [vmem:[#allocation4 + $0xc0] sm:$0xff]
        %v1013 = vld [vmem:[#allocation4 + $0xc8] sm:$0xff]
        %v1014 = vld [vmem:[#allocation4 + $0xd0] sm:$0xff]
        %v1015 = vld [vmem:[#allocation4 + $0xd8] sm:$0xff]
        %v1016 = vld [vmem:[#allocation4 + $0xe0] sm:$0xff]
        %v1017 = vld [vmem:[#allocation4 + $0xe8] sm:$0xff]
        %v1018 = vld [vmem:[#allocation4 + $0xf0] sm:$0xff]
        %v1019 = vld [vmem:[#allocation4 + $0xf8] sm:$0xff]
        %s1020 = scalar_lea.vmem [#allocation10], 16
        %v1021 = vld [vmem:[%s1020] sm:$0xf]
        %v1022 = vld [vmem:[%s1020 + $0x4] sm:$0xf]
        %v1023 = vld [vmem:[%s1020 + $0x8] sm:$0xf]
        %v1024 = vld [vmem:[%s1020 + $0xc] sm:$0xf]
        %v1029 = vunpack.c.l.b16 %v1021
        %v1030 = vunpack.c.l.b16 %v1022
        %v1031 = vunpack.c.l.b16 %v1023
        %v1032 = vunpack.c.l.b16 %v1024
        %v1033 = vpack.c.b16 %v1030, %v1029
        %v1034 = vpack.c.b16 %v1032, %v1031
        %v1038 = vsel %vm298, %v972, 0
        %v1041 = vsel %vm298, %v973, 0
        %v1044 = vsel %vm298, %v974, 0
        %v1047 = vsel %vm298, %v975, 0
        %v1050 = vsel %vm298, %v976, 0
        %v1053 = vsel %vm298, %v977, 0
        %v1056 = vsel %vm298, %v978, 0
        %v1059 = vsel %vm298, %v979, 0
        %v1062 = vsel %vm298, %v980, 0
        %v1065 = vsel %vm298, %v981, 0
        %v1068 = vsel %vm298, %v982, 0
        %v1071 = vsel %vm298, %v983, 0
        %v1074 = vsel %vm298, %v984, 0
        %v1077 = vsel %vm298, %v985, 0
        %v1080 = vsel %vm298, %v986, 0
        %v1083 = vsel %vm298, %v987, 0
        %1085 = vmatprep.subr.bf16.mxu0 0
        %1086 = vmatpush1.bf16.msra.mxu0 %v1033
        %1087 = vmatprep.subr.bf16.mxu0 0
        %1088 = vmatpush1.bf16.msra.mxu0 %v1034
        %1089 = vmatprep.subr.bf16.mxu0 0
        %1090 = vmatpush1.bf16.msra.mxu0 0
        %1091 = vmatprep.subr.bf16.mxu0 0
        %1092 = vmatpush1.bf16.msra.mxu0 0
        %1093 = vmatprep.subr.bf16.mxu0 0
        %1094 = vmatpush1.bf16.msra.mxu0 0
        %1095 = vmatprep.subr.bf16.mxu0 0
        %1096 = vmatpush1.bf16.msra.mxu0 0
        %1097 = vmatprep.subr.bf16.mxu0 0
        %1098 = vmatpush1.bf16.msra.mxu0 0
        %1099 = vmatprep.subr.bf16.mxu0 0
        %1100 = vmatpush1.bf16.msra.mxu0 0
        %1101 = vmatprep.subr.bf16.mxu0 0
        %1102 = vmatpush1.bf16.msra.mxu0 0
        %1103 = vmatprep.subr.bf16.mxu0 0
        %1104 = vmatpush1.bf16.msra.mxu0 0
        %1105 = vmatprep.subr.bf16.mxu0 0
        %1106 = vmatpush1.bf16.msra.mxu0 0
        %1107 = vmatprep.subr.bf16.mxu0 0
        %1108 = vmatpush1.bf16.msra.mxu0 0
        %1109 = vmatprep.subr.bf16.mxu0 0
        %1110 = vmatpush1.bf16.msra.mxu0 0
        %1111 = vmatprep.subr.bf16.mxu0 0
        %1112 = vmatpush1.bf16.msra.mxu0 0
        %1113 = vmatprep.subr.bf16.mxu0 0
        %1114 = vmatpush1.bf16.msra.mxu0 0
        %1115 = vmatprep.subr.bf16.mxu0 0
        %1116 = vmatpush1.bf16.msra.mxu0 0
        %1117 = vmatprep.mubr.bf16.mxu0 0
        %1118 = vmatmul.mubr.bf16.gmra.mrb[0].mxu0 %v1038
        %v1119 = vpop.f32.mrb[0].mxu0
        %v1120 = vadd.f32 0.0, %v1119
        %v1121 = vpop.f32.mrb[0].mxu0
        %v1122 = vpop.f32.mrb[0].mxu0
        %v1123 = vadd.f32 0.0, %v1122
        %v1124 = vpop.f32.mrb[0].mxu0
        %1125 = vmatprep.mubr.bf16.mxu0 0
        %1126 = vmatmul.mubr.bf16.gmra.mrb[0].mxu0 %v1041
        %v1127 = vpop.f32.mrb[0].mxu0
        %v1128 = vadd.f32 0.0, %v1127
        %v1129 = vpop.f32.mrb[0].mxu0
        %v1130 = vpop.f32.mrb[0].mxu0
        %v1131 = vadd.f32 0.0, %v1130
        %v1132 = vpop.f32.mrb[0].mxu0
        %1133 = vmatprep.mubr.bf16.mxu0 0
        %1134 = vmatmul.mubr.bf16.gmra.mrb[0].mxu0 %v1044
        %v1135 = vpop.f32.mrb[0].mxu0
        %v1136 = vadd.f32 0.0, %v1135
        %v1137 = vpop.f32.mrb[0].mxu0
        %v1138 = vpop.f32.mrb[0].mxu0
        %v1139 = vadd.f32 0.0, %v1138
        %v1140 = vpop.f32.mrb[0].mxu0
        %1141 = vmatprep.mubr.bf16.mxu0 0
        %1142 = vmatmul.mubr.bf16.gmra.mrb[0].mxu0 %v1047
        %v1143 = vpop.f32.mrb[0].mxu0
        %v1144 = vadd.f32 0.0, %v1143
        %v1145 = vpop.f32.mrb[0].mxu0
        %v1146 = vpop.f32.mrb[0].mxu0
        %v1147 = vadd.f32 0.0, %v1146
        %v1148 = vpop.f32.mrb[0].mxu0
        %1149 = vmatprep.mubr.bf16.mxu0 0
        %1150 = vmatmul.mubr.bf16.gmra.mrb[0].mxu0 %v1050
        %v1151 = vpop.f32.mrb[0].mxu0
        %v1152 = vadd.f32 0.0, %v1151
        %v1153 = vpop.f32.mrb[0].mxu0
        %v1154 = vpop.f32.mrb[0].mxu0
        %v1155 = vadd.f32 0.0, %v1154
        %v1156 = vpop.f32.mrb[0].mxu0
        %1157 = vmatprep.mubr.bf16.mxu0 0
        %1158 = vmatmul.mubr.bf16.gmra.mrb[0].mxu0 %v1053
        %v1159 = vpop.f32.mrb[0].mxu0
        %v1160 = vadd.f32 0.0, %v1159
        %v1161 = vpop.f32.mrb[0].mxu0
        %v1162 = vpop.f32.mrb[0].mxu0
        %v1163 = vadd.f32 0.0, %v1162
        %v1164 = vpop.f32.mrb[0].mxu0
        %1165 = vmatprep.mubr.bf16.mxu0 0
        %1166 = vmatmul.mubr.bf16.gmra.mrb[0].mxu0 %v1056
        %v1167 = vpop.f32.mrb[0].mxu0
        %v1168 = vadd.f32 0.0, %v1167
        %v1169 = vpop.f32.mrb[0].mxu0
        %v1170 = vpop.f32.mrb[0].mxu0
        %v1171 = vadd.f32 0.0, %v1170
        %v1172 = vpop.f32.mrb[0].mxu0
        %1173 = vmatprep.mubr.bf16.mxu0 0
        %1174 = vmatmul.mubr.bf16.gmra.mrb[0].mxu0 %v1059
        %v1175 = vpop.f32.mrb[0].mxu0
        %v1176 = vadd.f32 0.0, %v1175
        %v1177 = vpop.f32.mrb[0].mxu0
        %v1178 = vpop.f32.mrb[0].mxu0
        %v1179 = vadd.f32 0.0, %v1178
        %v1180 = vpop.f32.mrb[0].mxu0
        %1181 = vmatprep.mubr.bf16.mxu0 0
        %1182 = vmatmul.mubr.bf16.gmra.mrb[0].mxu0 %v1062
        %v1183 = vpop.f32.mrb[0].mxu0
        %v1184 = vadd.f32 0.0, %v1183
        %v1185 = vpop.f32.mrb[0].mxu0
        %v1186 = vpop.f32.mrb[0].mxu0
        %v1187 = vadd.f32 0.0, %v1186
        %v1188 = vpop.f32.mrb[0].mxu0
        %1189 = vmatprep.mubr.bf16.mxu0 0
        %1190 = vmatmul.mubr.bf16.gmra.mrb[0].mxu0 %v1065
        %v1191 = vpop.f32.mrb[0].mxu0
        %v1192 = vadd.f32 0.0, %v1191
        %v1193 = vpop.f32.mrb[0].mxu0
        %v1194 = vpop.f32.mrb[0].mxu0
        %v1195 = vadd.f32 0.0, %v1194
        %v1196 = vpop.f32.mrb[0].mxu0
        %1197 = vmatprep.mubr.bf16.mxu0 0
        %1198 = vmatmul.mubr.bf16.gmra.mrb[0].mxu0 %v1068
        %v1199 = vpop.f32.mrb[0].mxu0
        %v1200 = vadd.f32 0.0, %v1199
        %v1201 = vpop.f32.mrb[0].mxu0
        %v1202 = vpop.f32.mrb[0].mxu0
        %v1203 = vadd.f32 0.0, %v1202
        %v1204 = vpop.f32.mrb[0].mxu0
        %1205 = vmatprep.mubr.bf16.mxu0 0
        %1206 = vmatmul.mubr.bf16.gmra.mrb[0].mxu0 %v1071
        %v1207 = vpop.f32.mrb[0].mxu0
        %v1208 = vadd.f32 0.0, %v1207
        %v1209 = vpop.f32.mrb[0].mxu0
        %v1210 = vpop.f32.mrb[0].mxu0
        %v1211 = vadd.f32 0.0, %v1210
        %v1212 = vpop.f32.mrb[0].mxu0
        %1213 = vmatprep.mubr.bf16.mxu0 0
        %1214 = vmatmul.mubr.bf16.gmra.mrb[0].mxu0 %v1074
        %v1215 = vpop.f32.mrb[0].mxu0
        %v1216 = vadd.f32 0.0, %v1215
        %v1217 = vpop.f32.mrb[0].mxu0
        %v1218 = vpop.f32.mrb[0].mxu0
        %v1219 = vadd.f32 0.0, %v1218
        %v1220 = vpop.f32.mrb[0].mxu0
        %1221 = vmatprep.mubr.bf16.mxu0 0
        %1222 = vmatmul.mubr.bf16.gmra.mrb[0].mxu0 %v1077
        %v1223 = vpop.f32.mrb[0].mxu0
        %v1224 = vadd.f32 0.0, %v1223
        %v1225 = vpop.f32.mrb[0].mxu0
        %v1226 = vpop.f32.mrb[0].mxu0
        %v1227 = vadd.f32 0.0, %v1226
        %v1228 = vpop.f32.mrb[0].mxu0
        %1229 = vmatprep.mubr.bf16.mxu0 0
        %1230 = vmatmul.mubr.bf16.gmra.mrb[0].mxu0 %v1080
        %v1231 = vpop.f32.mrb[0].mxu0
        %v1232 = vadd.f32 0.0, %v1231
        %v1233 = vpop.f32.mrb[0].mxu0
        %v1234 = vpop.f32.mrb[0].mxu0
        %v1235 = vadd.f32 0.0, %v1234
        %v1236 = vpop.f32.mrb[0].mxu0
        %1237 = vmatprep.mubr.bf16.mxu0 0
        %1238 = vmatmul.mubr.bf16.gmra.mrb[0].mxu0 %v1083
        %v1239 = vpop.f32.mrb[0].mxu0
        %v1240 = vadd.f32 0.0, %v1239
        %v1241 = vpop.f32.mrb[0].mxu0
        %v1242 = vpop.f32.mrb[0].mxu0
        %v1243 = vadd.f32 0.0, %v1242
        %v1244 = vpop.f32.mrb[0].mxu0
        %1245 = vdwg.mxu0
        %v1246 = vadd.f32 %v988, %v1120
        %v1247 = vadd.f32 %v989, %v1123
        %v1248 = vadd.f32 %v990, %v1128
        %v1249 = vadd.f32 %v991, %v1131
        %v1250 = vadd.f32 %v992, %v1136
        %v1251 = vadd.f32 %v993, %v1139
        %v1252 = vadd.f32 %v994, %v1144
        %v1253 = vadd.f32 %v995, %v1147
        %v1254 = vadd.f32 %v996, %v1152
        %v1255 = vadd.f32 %v997, %v1155
        %v1256 = vadd.f32 %v998, %v1160
        %v1257 = vadd.f32 %v999, %v1163
        %v1258 = vadd.f32 %v1000, %v1168
        %v1259 = vadd.f32 %v1001, %v1171
        %v1260 = vadd.f32 %v1002, %v1176
        %v1261 = vadd.f32 %v1003, %v1179
        %v1262 = vadd.f32 %v1004, %v1184
        %v1263 = vadd.f32 %v1005, %v1187
        %v1264 = vadd.f32 %v1006, %v1192
        %v1265 = vadd.f32 %v1007, %v1195
        %v1266 = vadd.f32 %v1008, %v1200
        %v1267 = vadd.f32 %v1009, %v1203
        %v1268 = vadd.f32 %v1010, %v1208
        %v1269 = vadd.f32 %v1011, %v1211
        %v1270 = vadd.f32 %v1012, %v1216
        %v1271 = vadd.f32 %v1013, %v1219
        %v1272 = vadd.f32 %v1014, %v1224
        %v1273 = vadd.f32 %v1015, %v1227
        %v1274 = vadd.f32 %v1016, %v1232
        %v1275 = vadd.f32 %v1017, %v1235
        %v1276 = vadd.f32 %v1018, %v1240
        %v1277 = vadd.f32 %v1019, %v1243
        %1278 = vst.msk [vmem:[#allocation4] sm:$0xff] %vm602, %v1246
        %1279 = vst.msk [vmem:[#allocation4 + $0x8] sm:$0xff] %vm602, %v1247
        %1280 = vst.msk [vmem:[#allocation4 + $0x10] sm:$0xff] %vm602, %v1248
        %1281 = vst.msk [vmem:[#allocation4 + $0x18] sm:$0xff] %vm602, %v1249
        %1282 = vst.msk [vmem:[#allocation4 + $0x20] sm:$0xff] %vm602, %v1250
        %1283 = vst.msk [vmem:[#allocation4 + $0x28] sm:$0xff] %vm602, %v1251
        %1284 = vst.msk [vmem:[#allocation4 + $0x30] sm:$0xff] %vm602, %v1252
        %1285 = vst.msk [vmem:[#allocation4 + $0x38] sm:$0xff] %vm602, %v1253
        %1286 = vst.msk [vmem:[#allocation4 + $0x40] sm:$0xff] %vm602, %v1254
        %1287 = vst.msk [vmem:[#allocation4 + $0x48] sm:$0xff] %vm602, %v1255
        %1288 = vst.msk [vmem:[#allocation4 + $0x50] sm:$0xff] %vm602, %v1256
        %1289 = vst.msk [vmem:[#allocation4 + $0x58] sm:$0xff] %vm602, %v1257
        %1290 = vst.msk [vmem:[#allocation4 + $0x60] sm:$0xff] %vm602, %v1258
        %1291 = vst.msk [vmem:[#allocation4 + $0x68] sm:$0xff] %vm602, %v1259
        %1292 = vst.msk [vmem:[#allocation4 + $0x70] sm:$0xff] %vm602, %v1260
        %1293 = vst.msk [vmem:[#allocation4 + $0x78] sm:$0xff] %vm602, %v1261
        %1294 = vst.msk [vmem:[#allocation4 + $0x80] sm:$0xff] %vm602, %v1262
        %1295 = vst.msk [vmem:[#allocation4 + $0x88] sm:$0xff] %vm602, %v1263
        %1296 = vst.msk [vmem:[#allocation4 + $0x90] sm:$0xff] %vm602, %v1264
        %1297 = vst.msk [vmem:[#allocation4 + $0x98] sm:$0xff] %vm602, %v1265
        %1298 = vst.msk [vmem:[#allocation4 + $0xa0] sm:$0xff] %vm602, %v1266
        %1299 = vst.msk [vmem:[#allocation4 + $0xa8] sm:$0xff] %vm602, %v1267
        %1300 = vst.msk [vmem:[#allocation4 + $0xb0] sm:$0xff] %vm602, %v1268
        %1301 = vst.msk [vmem:[#allocation4 + $0xb8] sm:$0xff] %vm602, %v1269
        %1302 = vst.msk [vmem:[#allocation4 + $0xc0] sm:$0xff] %vm602, %v1270
        %1303 = vst.msk [vmem:[#allocation4 + $0xc8] sm:$0xff] %vm602, %v1271
        %1304 = vst.msk [vmem:[#allocation4 + $0xd0] sm:$0xff] %vm602, %v1272
        %1305 = vst.msk [vmem:[#allocation4 + $0xd8] sm:$0xff] %vm602, %v1273
        %1306 = vst.msk [vmem:[#allocation4 + $0xe0] sm:$0xff] %vm602, %v1274
        %1307 = vst.msk [vmem:[#allocation4 + $0xe8] sm:$0xff] %vm602, %v1275
        %1308 = vst.msk [vmem:[#allocation4 + $0xf0] sm:$0xff] %vm602, %v1276
        %1309 = vst.msk [vmem:[#allocation4 + $0xf8] sm:$0xff] %vm602, %v1277
        %v1310 = vld [vmem:[%s342] sm:$0xff]
        %v1311 = vld [vmem:[%s342 + $0x8] sm:$0xff]
        %v1312 = vld [vmem:[%s342 + $0x10] sm:$0xff]
        %v1313 = vld [vmem:[%s342 + $0x18] sm:$0xff]
        %v1314 = vld [vmem:[%s342 + $0x20] sm:$0xff]
        %v1315 = vld [vmem:[%s342 + $0x28] sm:$0xff]
        %v1316 = vld [vmem:[%s342 + $0x30] sm:$0xff]
        %v1317 = vld [vmem:[%s342 + $0x38] sm:$0xff]
        %v1318 = vld [vmem:[%s342 + $0x40] sm:$0xff]
        %v1319 = vld [vmem:[%s342 + $0x48] sm:$0xff]
        %v1320 = vld [vmem:[%s342 + $0x50] sm:$0xff]
        %v1321 = vld [vmem:[%s342 + $0x58] sm:$0xff]
        %v1322 = vld [vmem:[%s342 + $0x60] sm:$0xff]
        %v1323 = vld [vmem:[%s342 + $0x68] sm:$0xff]
        %v1324 = vld [vmem:[%s342 + $0x70] sm:$0xff]
        %v1325 = vld [vmem:[%s342 + $0x78] sm:$0xff]
        %v1326 = vld [vmem:[#allocation4] sm:$0xff]
        %v1327 = vld [vmem:[#allocation4 + $0x8] sm:$0xff]
        %v1328 = vld [vmem:[#allocation4 + $0x10] sm:$0xff]
        %v1329 = vld [vmem:[#allocation4 + $0x18] sm:$0xff]
        %v1330 = vld [vmem:[#allocation4 + $0x20] sm:$0xff]
        %v1331 = vld [vmem:[#allocation4 + $0x28] sm:$0xff]
        %v1332 = vld [vmem:[#allocation4 + $0x30] sm:$0xff]
        %v1333 = vld [vmem:[#allocation4 + $0x38] sm:$0xff]
        %v1334 = vld [vmem:[#allocation4 + $0x40] sm:$0xff]
        %v1335 = vld [vmem:[#allocation4 + $0x48] sm:$0xff]
        %v1336 = vld [vmem:[#allocation4 + $0x50] sm:$0xff]
        %v1337 = vld [vmem:[#allocation4 + $0x58] sm:$0xff]
        %v1338 = vld [vmem:[#allocation4 + $0x60] sm:$0xff]
        %v1339 = vld [vmem:[#allocation4 + $0x68] sm:$0xff]
        %v1340 = vld [vmem:[#allocation4 + $0x70] sm:$0xff]
        %v1341 = vld [vmem:[#allocation4 + $0x78] sm:$0xff]
        %v1342 = vld [vmem:[#allocation4 + $0x80] sm:$0xff]
        %v1343 = vld [vmem:[#allocation4 + $0x88] sm:$0xff]
        %v1344 = vld [vmem:[#allocation4 + $0x90] sm:$0xff]
        %v1345 = vld [vmem:[#allocation4 + $0x98] sm:$0xff]
        %v1346 = vld [vmem:[#allocation4 + $0xa0] sm:$0xff]
        %v1347 = vld [vmem:[#allocation4 + $0xa8] sm:$0xff]
        %v1348 = vld [vmem:[#allocation4 + $0xb0] sm:$0xff]
        %v1349 = vld [vmem:[#allocation4 + $0xb8] sm:$0xff]
        %v1350 = vld [vmem:[#allocation4 + $0xc0] sm:$0xff]
        %v1351 = vld [vmem:[#allocation4 + $0xc8] sm:$0xff]
        %v1352 = vld [vmem:[#allocation4 + $0xd0] sm:$0xff]
        %v1353 = vld [vmem:[#allocation4 + $0xd8] sm:$0xff]
        %v1354 = vld [vmem:[#allocation4 + $0xe0] sm:$0xff]
        %v1355 = vld [vmem:[#allocation4 + $0xe8] sm:$0xff]
        %v1356 = vld [vmem:[#allocation4 + $0xf0] sm:$0xff]
        %v1357 = vld [vmem:[#allocation4 + $0xf8] sm:$0xff]
        %s1358 = scalar_lea.vmem [#allocation10], 32
        %v1359 = vld [vmem:[%s1358] sm:$0xf]
        %v1360 = vld [vmem:[%s1358 + $0x4] sm:$0xf]
        %v1361 = vld [vmem:[%s1358 + $0x8] sm:$0xf]
        %v1362 = vld [vmem:[%s1358 + $0xc] sm:$0xf]
        %v1367 = vunpack.c.l.b16 %v1359
        %v1368 = vunpack.c.l.b16 %v1360
        %v1369 = vunpack.c.l.b16 %v1361
        %v1370 = vunpack.c.l.b16 %v1362
        %v1371 = vpack.c.b16 %v1368, %v1367
        %v1372 = vpack.c.b16 %v1370, %v1369
        %v1376 = vsel %vm298, %v1310, 0
        %v1379 = vsel %vm298, %v1311, 0
        %v1382 = vsel %vm298, %v1312, 0
        %v1385 = vsel %vm298, %v1313, 0
        %v1388 = vsel %vm298, %v1314, 0
        %v1391 = vsel %vm298, %v1315, 0
        %v1394 = vsel %vm298, %v1316, 0
        %v1397 = vsel %vm298, %v1317, 0
        %v1400 = vsel %vm298, %v1318, 0
        %v1403 = vsel %vm298, %v1319, 0
        %v1406 = vsel %vm298, %v1320, 0
        %v1409 = vsel %vm298, %v1321, 0
        %v1412 = vsel %vm298, %v1322, 0
        %v1415 = vsel %vm298, %v1323, 0
        %v1418 = vsel %vm298, %v1324, 0
        %v1421 = vsel %vm298, %v1325, 0
        %1423 = vmatprep.subr.bf16.mxu0 0
        %1424 = vmatpush1.bf16.msra.mxu0 %v1371
        %1425 = vmatprep.subr.bf16.mxu0 0
        %1426 = vmatpush1.bf16.msra.mxu0 %v1372
        %1427 = vmatprep.subr.bf16.mxu0 0
        %1428 = vmatpush1.bf16.msra.mxu0 0
        %1429 = vmatprep.subr.bf16.mxu0 0
        %1430 = vmatpush1.bf16.msra.mxu0 0
        %1431 = vmatprep.subr.bf16.mxu0 0
        %1432 = vmatpush1.bf16.msra.mxu0 0
        %1433 = vmatprep.subr.bf16.mxu0 0
        %1434 = vmatpush1.bf16.msra.mxu0 0
        %1435 = vmatprep.subr.bf16.mxu0 0
        %1436 = vmatpush1.bf16.msra.mxu0 0
        %1437 = vmatprep.subr.bf16.mxu0 0
        %1438 = vmatpush1.bf16.msra.mxu0 0
        %1439 = vmatprep.subr.bf16.mxu0 0
        %1440 = vmatpush1.bf16.msra.mxu0 0
        %1441 = vmatprep.subr.bf16.mxu0 0
        %1442 = vmatpush1.bf16.msra.mxu0 0
        %1443 = vmatprep.subr.bf16.mxu0 0
        %1444 = vmatpush1.bf16.msra.mxu0 0
        %1445 = vmatprep.subr.bf16.mxu0 0
        %1446 = vmatpush1.bf16.msra.mxu0 0
        %1447 = vmatprep.subr.bf16.mxu0 0
        %1448 = vmatpush1.bf16.msra.mxu0 0
        %1449 = vmatprep.subr.bf16.mxu0 0
        %1450 = vmatpush1.bf16.msra.mxu0 0
        %1451 = vmatprep.subr.bf16.mxu0 0
        %1452 = vmatpush1.bf16.msra.mxu0 0
        %1453 = vmatprep.subr.bf16.mxu0 0
        %1454 = vmatpush1.bf16.msra.mxu0 0
        %1455 = vmatprep.mubr.bf16.mxu0 0
        %1456 = vmatmul.mubr.bf16.gmra.mrb[0].mxu0 %v1376
        %v1457 = vpop.f32.mrb[0].mxu0
        %v1458 = vadd.f32 0.0, %v1457
        %v1459 = vpop.f32.mrb[0].mxu0
        %v1460 = vpop.f32.mrb[0].mxu0
        %v1461 = vadd.f32 0.0, %v1460
        %v1462 = vpop.f32.mrb[0].mxu0
        %1463 = vmatprep.mubr.bf16.mxu0 0
        %1464 = vmatmul.mubr.bf16.gmra.mrb[0].mxu0 %v1379
        %v1465 = vpop.f32.mrb[0].mxu0
        %v1466 = vadd.f32 0.0, %v1465
        %v1467 = vpop.f32.mrb[0].mxu0
        %v1468 = vpop.f32.mrb[0].mxu0
        %v1469 = vadd.f32 0.0, %v1468
        %v1470 = vpop.f32.mrb[0].mxu0
        %1471 = vmatprep.mubr.bf16.mxu0 0
        %1472 = vmatmul.mubr.bf16.gmra.mrb[0].mxu0 %v1382
        %v1473 = vpop.f32.mrb[0].mxu0
        %v1474 = vadd.f32 0.0, %v1473
        %v1475 = vpop.f32.mrb[0].mxu0
        %v1476 = vpop.f32.mrb[0].mxu0
        %v1477 = vadd.f32 0.0, %v1476
        %v1478 = vpop.f32.mrb[0].mxu0
        %1479 = vmatprep.mubr.bf16.mxu0 0
        %1480 = vmatmul.mubr.bf16.gmra.mrb[0].mxu0 %v1385
        %v1481 = vpop.f32.mrb[0].mxu0
        %v1482 = vadd.f32 0.0, %v1481
        %v1483 = vpop.f32.mrb[0].mxu0
        %v1484 = vpop.f32.mrb[0].mxu0
        %v1485 = vadd.f32 0.0, %v1484
        %v1486 = vpop.f32.mrb[0].mxu0
        %1487 = vmatprep.mubr.bf16.mxu0 0
        %1488 = vmatmul.mubr.bf16.gmra.mrb[0].mxu0 %v1388
        %v1489 = vpop.f32.mrb[0].mxu0
        %v1490 = vadd.f32 0.0, %v1489
        %v1491 = vpop.f32.mrb[0].mxu0
        %v1492 = vpop.f32.mrb[0].mxu0
        %v1493 = vadd.f32 0.0, %v1492
        %v1494 = vpop.f32.mrb[0].mxu0
        %1495 = vmatprep.mubr.bf16.mxu0 0
        %1496 = vmatmul.mubr.bf16.gmra.mrb[0].mxu0 %v1391
        %v1497 = vpop.f32.mrb[0].mxu0
        %v1498 = vadd.f32 0.0, %v1497
        %v1499 = vpop.f32.mrb[0].mxu0
        %v1500 = vpop.f32.mrb[0].mxu0
        %v1501 = vadd.f32 0.0, %v1500
        %v1502 = vpop.f32.mrb[0].mxu0
        %1503 = vmatprep.mubr.bf16.mxu0 0
        %1504 = vmatmul.mubr.bf16.gmra.mrb[0].mxu0 %v1394
        %v1505 = vpop.f32.mrb[0].mxu0
        %v1506 = vadd.f32 0.0, %v1505
        %v1507 = vpop.f32.mrb[0].mxu0
        %v1508 = vpop.f32.mrb[0].mxu0
        %v1509 = vadd.f32 0.0, %v1508
        %v1510 = vpop.f32.mrb[0].mxu0
        %1511 = vmatprep.mubr.bf16.mxu0 0
        %1512 = vmatmul.mubr.bf16.gmra.mrb[0].mxu0 %v1397
        %v1513 = vpop.f32.mrb[0].mxu0
        %v1514 = vadd.f32 0.0, %v1513
        %v1515 = vpop.f32.mrb[0].mxu0
        %v1516 = vpop.f32.mrb[0].mxu0
        %v1517 = vadd.f32 0.0, %v1516
        %v1518 = vpop.f32.mrb[0].mxu0
        %1519 = vmatprep.mubr.bf16.mxu0 0
        %1520 = vmatmul.mubr.bf16.gmra.mrb[0].mxu0 %v1400
        %v1521 = vpop.f32.mrb[0].mxu0
        %v1522 = vadd.f32 0.0, %v1521
        %v1523 = vpop.f32.mrb[0].mxu0
        %v1524 = vpop.f32.mrb[0].mxu0
        %v1525 = vadd.f32 0.0, %v1524
        %v1526 = vpop.f32.mrb[0].mxu0
        %1527 = vmatprep.mubr.bf16.mxu0 0
        %1528 = vmatmul.mubr.bf16.gmra.mrb[0].mxu0 %v1403
        %v1529 = vpop.f32.mrb[0].mxu0
        %v1530 = vadd.f32 0.0, %v1529
        %v1531 = vpop.f32.mrb[0].mxu0
        %v1532 = vpop.f32.mrb[0].mxu0
        %v1533 = vadd.f32 0.0, %v1532
        %v1534 = vpop.f32.mrb[0].mxu0
        %1535 = vmatprep.mubr.bf16.mxu0 0
        %1536 = vmatmul.mubr.bf16.gmra.mrb[0].mxu0 %v1406
        %v1537 = vpop.f32.mrb[0].mxu0
        %v1538 = vadd.f32 0.0, %v1537
        %v1539 = vpop.f32.mrb[0].mxu0
        %v1540 = vpop.f32.mrb[0].mxu0
        %v1541 = vadd.f32 0.0, %v1540
        %v1542 = vpop.f32.mrb[0].mxu0
        %1543 = vmatprep.mubr.bf16.mxu0 0
        %1544 = vmatmul.mubr.bf16.gmra.mrb[0].mxu0 %v1409
        %v1545 = vpop.f32.mrb[0].mxu0
        %v1546 = vadd.f32 0.0, %v1545
        %v1547 = vpop.f32.mrb[0].mxu0
        %v1548 = vpop.f32.mrb[0].mxu0
        %v1549 = vadd.f32 0.0, %v1548
        %v1550 = vpop.f32.mrb[0].mxu0
        %1551 = vmatprep.mubr.bf16.mxu0 0
        %1552 = vmatmul.mubr.bf16.gmra.mrb[0].mxu0 %v1412
        %v1553 = vpop.f32.mrb[0].mxu0
        %v1554 = vadd.f32 0.0, %v1553
        %v1555 = vpop.f32.mrb[0].mxu0
        %v1556 = vpop.f32.mrb[0].mxu0
        %v1557 = vadd.f32 0.0, %v1556
        %v1558 = vpop.f32.mrb[0].mxu0
        %1559 = vmatprep.mubr.bf16.mxu0 0
        %1560 = vmatmul.mubr.bf16.gmra.mrb[0].mxu0 %v1415
        %v1561 = vpop.f32.mrb[0].mxu0
        %v1562 = vadd.f32 0.0, %v1561
        %v1563 = vpop.f32.mrb[0].mxu0
        %v1564 = vpop.f32.mrb[0].mxu0
        %v1565 = vadd.f32 0.0, %v1564
        %v1566 = vpop.f32.mrb[0].mxu0
        %1567 = vmatprep.mubr.bf16.mxu0 0
        %1568 = vmatmul.mubr.bf16.gmra.mrb[0].mxu0 %v1418
        %v1569 = vpop.f32.mrb[0].mxu0
        %v1570 = vadd.f32 0.0, %v1569
        %v1571 = vpop.f32.mrb[0].mxu0
        %v1572 = vpop.f32.mrb[0].mxu0
        %v1573 = vadd.f32 0.0, %v1572
        %v1574 = vpop.f32.mrb[0].mxu0
        %1575 = vmatprep.mubr.bf16.mxu0 0
        %1576 = vmatmul.mubr.bf16.gmra.mrb[0].mxu0 %v1421
        %v1577 = vpop.f32.mrb[0].mxu0
        %v1578 = vadd.f32 0.0, %v1577
        %v1579 = vpop.f32.mrb[0].mxu0
        %v1580 = vpop.f32.mrb[0].mxu0
        %v1581 = vadd.f32 0.0, %v1580
        %v1582 = vpop.f32.mrb[0].mxu0
        %1583 = vdwg.mxu0
        %v1584 = vadd.f32 %v1326, %v1458
        %v1585 = vadd.f32 %v1327, %v1461
        %v1586 = vadd.f32 %v1328, %v1466
        %v1587 = vadd.f32 %v1329, %v1469
        %v1588 = vadd.f32 %v1330, %v1474
        %v1589 = vadd.f32 %v1331, %v1477
        %v1590 = vadd.f32 %v1332, %v1482
        %v1591 = vadd.f32 %v1333, %v1485
        %v1592 = vadd.f32 %v1334, %v1490
        %v1593 = vadd.f32 %v1335, %v1493
        %v1594 = vadd.f32 %v1336, %v1498
        %v1595 = vadd.f32 %v1337, %v1501
        %v1596 = vadd.f32 %v1338, %v1506
        %v1597 = vadd.f32 %v1339, %v1509
        %v1598 = vadd.f32 %v1340, %v1514
        %v1599 = vadd.f32 %v1341, %v1517
        %v1600 = vadd.f32 %v1342, %v1522
        %v1601 = vadd.f32 %v1343, %v1525
        %v1602 = vadd.f32 %v1344, %v1530
        %v1603 = vadd.f32 %v1345, %v1533
        %v1604 = vadd.f32 %v1346, %v1538
        %v1605 = vadd.f32 %v1347, %v1541
        %v1606 = vadd.f32 %v1348, %v1546
        %v1607 = vadd.f32 %v1349, %v1549
        %v1608 = vadd.f32 %v1350, %v1554
        %v1609 = vadd.f32 %v1351, %v1557
        %v1610 = vadd.f32 %v1352, %v1562
        %v1611 = vadd.f32 %v1353, %v1565
        %v1612 = vadd.f32 %v1354, %v1570
        %v1613 = vadd.f32 %v1355, %v1573
        %v1614 = vadd.f32 %v1356, %v1578
        %v1615 = vadd.f32 %v1357, %v1581
        %1616 = vst.msk [vmem:[#allocation4] sm:$0xff] %vm602, %v1584
        %1617 = vst.msk [vmem:[#allocation4 + $0x8] sm:$0xff] %vm602, %v1585
        %1618 = vst.msk [vmem:[#allocation4 + $0x10] sm:$0xff] %vm602, %v1586
        %1619 = vst.msk [vmem:[#allocation4 + $0x18] sm:$0xff] %vm602, %v1587
        %1620 = vst.msk [vmem:[#allocation4 + $0x20] sm:$0xff] %vm602, %v1588
        %1621 = vst.msk [vmem:[#allocation4 + $0x28] sm:$0xff] %vm602, %v1589
        %1622 = vst.msk [vmem:[#allocation4 + $0x30] sm:$0xff] %vm602, %v1590
        %1623 = vst.msk [vmem:[#allocation4 + $0x38] sm:$0xff] %vm602, %v1591
        %1624 = vst.msk [vmem:[#allocation4 + $0x40] sm:$0xff] %vm602, %v1592
        %1625 = vst.msk [vmem:[#allocation4 + $0x48] sm:$0xff] %vm602, %v1593
        %1626 = vst.msk [vmem:[#allocation4 + $0x50] sm:$0xff] %vm602, %v1594
        %1627 = vst.msk [vmem:[#allocation4 + $0x58] sm:$0xff] %vm602, %v1595
        %1628 = vst.msk [vmem:[#allocation4 + $0x60] sm:$0xff] %vm602, %v1596
        %1629 = vst.msk [vmem:[#allocation4 + $0x68] sm:$0xff] %vm602, %v1597
        %1630 = vst.msk [vmem:[#allocation4 + $0x70] sm:$0xff] %vm602, %v1598
        %1631 = vst.msk [vmem:[#allocation4 + $0x78] sm:$0xff] %vm602, %v1599
        %1632 = vst.msk [vmem:[#allocation4 + $0x80] sm:$0xff] %vm602, %v1600
        %1633 = vst.msk [vmem:[#allocation4 + $0x88] sm:$0xff] %vm602, %v1601
        %1634 = vst.msk [vmem:[#allocation4 + $0x90] sm:$0xff] %vm602, %v1602
        %1635 = vst.msk [vmem:[#allocation4 + $0x98] sm:$0xff] %vm602, %v1603
        %1636 = vst.msk [vmem:[#allocation4 + $0xa0] sm:$0xff] %vm602, %v1604
        %1637 = vst.msk [vmem:[#allocation4 + $0xa8] sm:$0xff] %vm602, %v1605
        %1638 = vst.msk [vmem:[#allocation4 + $0xb0] sm:$0xff] %vm602, %v1606
        %1639 = vst.msk [vmem:[#allocation4 + $0xb8] sm:$0xff] %vm602, %v1607
        %1640 = vst.msk [vmem:[#allocation4 + $0xc0] sm:$0xff] %vm602, %v1608
        %1641 = vst.msk [vmem:[#allocation4 + $0xc8] sm:$0xff] %vm602, %v1609
        %1642 = vst.msk [vmem:[#allocation4 + $0xd0] sm:$0xff] %vm602, %v1610
        %1643 = vst.msk [vmem:[#allocation4 + $0xd8] sm:$0xff] %vm602, %v1611
        %1644 = vst.msk [vmem:[#allocation4 + $0xe0] sm:$0xff] %vm602, %v1612
        %1645 = vst.msk [vmem:[#allocation4 + $0xe8] sm:$0xff] %vm602, %v1613
        %1646 = vst.msk [vmem:[#allocation4 + $0xf0] sm:$0xff] %vm602, %v1614
        %1647 = vst.msk [vmem:[#allocation4 + $0xf8] sm:$0xff] %vm602, %v1615
        %v1648 = vld [vmem:[%s479] sm:$0xff]
        %v1649 = vld [vmem:[%s479 + $0x8] sm:$0xff]
        %v1650 = vld [vmem:[%s479 + $0x10] sm:$0xff]
        %v1651 = vld [vmem:[%s479 + $0x18] sm:$0xff]
        %v1652 = vld [vmem:[%s479 + $0x20] sm:$0xff]
        %v1653 = vld [vmem:[%s479 + $0x28] sm:$0xff]
        %v1654 = vld [vmem:[%s479 + $0x30] sm:$0xff]
        %v1655 = vld [vmem:[%s479 + $0x38] sm:$0xff]
        %v1656 = vld [vmem:[%s479 + $0x40] sm:$0xff]
        %v1657 = vld [vmem:[%s479 + $0x48] sm:$0xff]
        %v1658 = vld [vmem:[%s479 + $0x50] sm:$0xff]
        %v1659 = vld [vmem:[%s479 + $0x58] sm:$0xff]
        %v1660 = vld [vmem:[%s479 + $0x60] sm:$0xff]
        %v1661 = vld [vmem:[%s479 + $0x68] sm:$0xff]
        %v1662 = vld [vmem:[%s479 + $0x70] sm:$0xff]
        %v1663 = vld [vmem:[%s479 + $0x78] sm:$0xff]
        %v1664 = vld [vmem:[#allocation4] sm:$0xff]
        %v1665 = vld [vmem:[#allocation4 + $0x8] sm:$0xff]
        %v1666 = vld [vmem:[#allocation4 + $0x10] sm:$0xff]
        %v1667 = vld [vmem:[#allocation4 + $0x18] sm:$0xff]
        %v1668 = vld [vmem:[#allocation4 + $0x20] sm:$0xff]
        %v1669 = vld [vmem:[#allocation4 + $0x28] sm:$0xff]
        %v1670 = vld [vmem:[#allocation4 + $0x30] sm:$0xff]
        %v1671 = vld [vmem:[#allocation4 + $0x38] sm:$0xff]
        %v1672 = vld [vmem:[#allocation4 + $0x40] sm:$0xff]
        %v1673 = vld [vmem:[#allocation4 + $0x48] sm:$0xff]
        %v1674 = vld [vmem:[#allocation4 + $0x50] sm:$0xff]
        %v1675 = vld [vmem:[#allocation4 + $0x58] sm:$0xff]
        %v1676 = vld [vmem:[#allocation4 + $0x60] sm:$0xff]
        %v1677 = vld [vmem:[#allocation4 + $0x68] sm:$0xff]
        %v1678 = vld [vmem:[#allocation4 + $0x70] sm:$0xff]
        %v1679 = vld [vmem:[#allocation4 + $0x78] sm:$0xff]
        %v1680 = vld [vmem:[#allocation4 + $0x80] sm:$0xff]
        %v1681 = vld [vmem:[#allocation4 + $0x88] sm:$0xff]
        %v1682 = vld [vmem:[#allocation4 + $0x90] sm:$0xff]
        %v1683 = vld [vmem:[#allocation4 + $0x98] sm:$0xff]
        %v1684 = vld [vmem:[#allocation4 + $0xa0] sm:$0xff]
        %v1685 = vld [vmem:[#allocation4 + $0xa8] sm:$0xff]
        %v1686 = vld [vmem:[#allocation4 + $0xb0] sm:$0xff]
        %v1687 = vld [vmem:[#allocation4 + $0xb8] sm:$0xff]
        %v1688 = vld [vmem:[#allocation4 + $0xc0] sm:$0xff]
        %v1689 = vld [vmem:[#allocation4 + $0xc8] sm:$0xff]
        %v1690 = vld [vmem:[#allocation4 + $0xd0] sm:$0xff]
        %v1691 = vld [vmem:[#allocation4 + $0xd8] sm:$0xff]
        %v1692 = vld [vmem:[#allocation4 + $0xe0] sm:$0xff]
        %v1693 = vld [vmem:[#allocation4 + $0xe8] sm:$0xff]
        %v1694 = vld [vmem:[#allocation4 + $0xf0] sm:$0xff]
        %v1695 = vld [vmem:[#allocation4 + $0xf8] sm:$0xff]
        %s1696 = scalar_lea.vmem [#allocation10], 48
        %v1697 = vld [vmem:[%s1696] sm:$0xf]
        %v1698 = vld [vmem:[%s1696 + $0x4] sm:$0xf]
        %v1699 = vld [vmem:[%s1696 + $0x8] sm:$0xf]
        %v1700 = vld [vmem:[%s1696 + $0xc] sm:$0xf]
        %v1705 = vunpack.c.l.b16 %v1697
        %v1706 = vunpack.c.l.b16 %v1698
        %v1707 = vunpack.c.l.b16 %v1699
        %v1708 = vunpack.c.l.b16 %v1700
        %v1709 = vpack.c.b16 %v1706, %v1705
        %v1710 = vpack.c.b16 %v1708, %v1707
        %v1714 = vsel %vm298, %v1648, 0
        %v1717 = vsel %vm298, %v1649, 0
        %v1720 = vsel %vm298, %v1650, 0
        %v1723 = vsel %vm298, %v1651, 0
        %v1726 = vsel %vm298, %v1652, 0
        %v1729 = vsel %vm298, %v1653, 0
        %v1732 = vsel %vm298, %v1654, 0
        %v1735 = vsel %vm298, %v1655, 0
        %v1738 = vsel %vm298, %v1656, 0
        %v1741 = vsel %vm298, %v1657, 0
        %v1744 = vsel %vm298, %v1658, 0
        %v1747 = vsel %vm298, %v1659, 0
        %v1750 = vsel %vm298, %v1660, 0
        %v1753 = vsel %vm298, %v1661, 0
        %v1756 = vsel %vm298, %v1662, 0
        %v1759 = vsel %vm298, %v1663, 0
        %1761 = vmatprep.subr.bf16.mxu0 0
        %1762 = vmatpush1.bf16.msra.mxu0 %v1709
        %1763 = vmatprep.subr.bf16.mxu0 0
        %1764 = vmatpush1.bf16.msra.mxu0 %v1710
        %1765 = vmatprep.subr.bf16.mxu0 0
        %1766 = vmatpush1.bf16.msra.mxu0 0
        %1767 = vmatprep.subr.bf16.mxu0 0
        %1768 = vmatpush1.bf16.msra.mxu0 0
        %1769 = vmatprep.subr.bf16.mxu0 0
        %1770 = vmatpush1.bf16.msra.mxu0 0
        %1771 = vmatprep.subr.bf16.mxu0 0
        %1772 = vmatpush1.bf16.msra.mxu0 0
        %1773 = vmatprep.subr.bf16.mxu0 0
        %1774 = vmatpush1.bf16.msra.mxu0 0
        %1775 = vmatprep.subr.bf16.mxu0 0
        %1776 = vmatpush1.bf16.msra.mxu0 0
        %1777 = vmatprep.subr.bf16.mxu0 0
        %1778 = vmatpush1.bf16.msra.mxu0 0
        %1779 = vmatprep.subr.bf16.mxu0 0
        %1780 = vmatpush1.bf16.msra.mxu0 0
        %1781 = vmatprep.subr.bf16.mxu0 0
        %1782 = vmatpush1.bf16.msra.mxu0 0
        %1783 = vmatprep.subr.bf16.mxu0 0
        %1784 = vmatpush1.bf16.msra.mxu0 0
        %1785 = vmatprep.subr.bf16.mxu0 0
        %1786 = vmatpush1.bf16.msra.mxu0 0
        %1787 = vmatprep.subr.bf16.mxu0 0
        %1788 = vmatpush1.bf16.msra.mxu0 0
        %1789 = vmatprep.subr.bf16.mxu0 0
        %1790 = vmatpush1.bf16.msra.mxu0 0
        %1791 = vmatprep.subr.bf16.mxu0 0
        %1792 = vmatpush1.bf16.msra.mxu0 0
        %1793 = vmatprep.mubr.bf16.mxu0 0
        %1794 = vmatmul.mubr.bf16.gmra.mrb[0].mxu0 %v1714
        %v1795 = vpop.f32.mrb[0].mxu0
        %v1796 = vadd.f32 0.0, %v1795
        %v1797 = vpop.f32.mrb[0].mxu0
        %v1798 = vpop.f32.mrb[0].mxu0
        %v1799 = vadd.f32 0.0, %v1798
        %v1800 = vpop.f32.mrb[0].mxu0
        %1801 = vmatprep.mubr.bf16.mxu0 0
        %1802 = vmatmul.mubr.bf16.gmra.mrb[0].mxu0 %v1717
        %v1803 = vpop.f32.mrb[0].mxu0
        %v1804 = vadd.f32 0.0, %v1803
        %v1805 = vpop.f32.mrb[0].mxu0
        %v1806 = vpop.f32.mrb[0].mxu0
        %v1807 = vadd.f32 0.0, %v1806
        %v1808 = vpop.f32.mrb[0].mxu0
        %1809 = vmatprep.mubr.bf16.mxu0 0
        %1810 = vmatmul.mubr.bf16.gmra.mrb[0].mxu0 %v1720
        %v1811 = vpop.f32.mrb[0].mxu0
        %v1812 = vadd.f32 0.0, %v1811
        %v1813 = vpop.f32.mrb[0].mxu0
        %v1814 = vpop.f32.mrb[0].mxu0
        %v1815 = vadd.f32 0.0, %v1814
        %v1816 = vpop.f32.mrb[0].mxu0
        %1817 = vmatprep.mubr.bf16.mxu0 0
        %1818 = vmatmul.mubr.bf16.gmra.mrb[0].mxu0 %v1723
        %v1819 = vpop.f32.mrb[0].mxu0
        %v1820 = vadd.f32 0.0, %v1819
        %v1821 = vpop.f32.mrb[0].mxu0
        %v1822 = vpop.f32.mrb[0].mxu0
        %v1823 = vadd.f32 0.0, %v1822
        %v1824 = vpop.f32.mrb[0].mxu0
        %1825 = vmatprep.mubr.bf16.mxu0 0
        %1826 = vmatmul.mubr.bf16.gmra.mrb[0].mxu0 %v1726
        %v1827 = vpop.f32.mrb[0].mxu0
        %v1828 = vadd.f32 0.0, %v1827
        %v1829 = vpop.f32.mrb[0].mxu0
        %v1830 = vpop.f32.mrb[0].mxu0
        %v1831 = vadd.f32 0.0, %v1830
        %v1832 = vpop.f32.mrb[0].mxu0
        %1833 = vmatprep.mubr.bf16.mxu0 0
        %1834 = vmatmul.mubr.bf16.gmra.mrb[0].mxu0 %v1729
        %v1835 = vpop.f32.mrb[0].mxu0
        %v1836 = vadd.f32 0.0, %v1835
        %v1837 = vpop.f32.mrb[0].mxu0
        %v1838 = vpop.f32.mrb[0].mxu0
        %v1839 = vadd.f32 0.0, %v1838
        %v1840 = vpop.f32.mrb[0].mxu0
        %1841 = vmatprep.mubr.bf16.mxu0 0
        %1842 = vmatmul.mubr.bf16.gmra.mrb[0].mxu0 %v1732
        %v1843 = vpop.f32.mrb[0].mxu0
        %v1844 = vadd.f32 0.0, %v1843
        %v1845 = vpop.f32.mrb[0].mxu0
        %v1846 = vpop.f32.mrb[0].mxu0
        %v1847 = vadd.f32 0.0, %v1846
        %v1848 = vpop.f32.mrb[0].mxu0
        %1849 = vmatprep.mubr.bf16.mxu0 0
        %1850 = vmatmul.mubr.bf16.gmra.mrb[0].mxu0 %v1735
        %v1851 = vpop.f32.mrb[0].mxu0
        %v1852 = vadd.f32 0.0, %v1851
        %v1853 = vpop.f32.mrb[0].mxu0
        %v1854 = vpop.f32.mrb[0].mxu0
        %v1855 = vadd.f32 0.0, %v1854
        %v1856 = vpop.f32.mrb[0].mxu0
        %1857 = vmatprep.mubr.bf16.mxu0 0
        %1858 = vmatmul.mubr.bf16.gmra.mrb[0].mxu0 %v1738
        %v1859 = vpop.f32.mrb[0].mxu0
        %v1860 = vadd.f32 0.0, %v1859
        %v1861 = vpop.f32.mrb[0].mxu0
        %v1862 = vpop.f32.mrb[0].mxu0
        %v1863 = vadd.f32 0.0, %v1862
        %v1864 = vpop.f32.mrb[0].mxu0
        %1865 = vmatprep.mubr.bf16.mxu0 0
        %1866 = vmatmul.mubr.bf16.gmra.mrb[0].mxu0 %v1741
        %v1867 = vpop.f32.mrb[0].mxu0
        %v1868 = vadd.f32 0.0, %v1867
        %v1869 = vpop.f32.mrb[0].mxu0
        %v1870 = vpop.f32.mrb[0].mxu0
        %v1871 = vadd.f32 0.0, %v1870
        %v1872 = vpop.f32.mrb[0].mxu0
        %1873 = vmatprep.mubr.bf16.mxu0 0
        %1874 = vmatmul.mubr.bf16.gmra.mrb[0].mxu0 %v1744
        %v1875 = vpop.f32.mrb[0].mxu0
        %v1876 = vadd.f32 0.0, %v1875
        %v1877 = vpop.f32.mrb[0].mxu0
        %v1878 = vpop.f32.mrb[0].mxu0
        %v1879 = vadd.f32 0.0, %v1878
        %v1880 = vpop.f32.mrb[0].mxu0
        %1881 = vmatprep.mubr.bf16.mxu0 0
        %1882 = vmatmul.mubr.bf16.gmra.mrb[0].mxu0 %v1747
        %v1883 = vpop.f32.mrb[0].mxu0
        %v1884 = vadd.f32 0.0, %v1883
        %v1885 = vpop.f32.mrb[0].mxu0
        %v1886 = vpop.f32.mrb[0].mxu0
        %v1887 = vadd.f32 0.0, %v1886
        %v1888 = vpop.f32.mrb[0].mxu0
        %1889 = vmatprep.mubr.bf16.mxu0 0
        %1890 = vmatmul.mubr.bf16.gmra.mrb[0].mxu0 %v1750
        %v1891 = vpop.f32.mrb[0].mxu0
        %v1892 = vadd.f32 0.0, %v1891
        %v1893 = vpop.f32.mrb[0].mxu0
        %v1894 = vpop.f32.mrb[0].mxu0
        %v1895 = vadd.f32 0.0, %v1894
        %v1896 = vpop.f32.mrb[0].mxu0
        %1897 = vmatprep.mubr.bf16.mxu0 0
        %1898 = vmatmul.mubr.bf16.gmra.mrb[0].mxu0 %v1753
        %v1899 = vpop.f32.mrb[0].mxu0
        %v1900 = vadd.f32 0.0, %v1899
        %v1901 = vpop.f32.mrb[0].mxu0
        %v1902 = vpop.f32.mrb[0].mxu0
        %v1903 = vadd.f32 0.0, %v1902
        %v1904 = vpop.f32.mrb[0].mxu0
        %1905 = vmatprep.mubr.bf16.mxu0 0
        %1906 = vmatmul.mubr.bf16.gmra.mrb[0].mxu0 %v1756
        %v1907 = vpop.f32.mrb[0].mxu0
        %v1908 = vadd.f32 0.0, %v1907
        %v1909 = vpop.f32.mrb[0].mxu0
        %v1910 = vpop.f32.mrb[0].mxu0
        %v1911 = vadd.f32 0.0, %v1910
        %v1912 = vpop.f32.mrb[0].mxu0
        %1913 = vmatprep.mubr.bf16.mxu0 0
        %1914 = vmatmul.mubr.bf16.gmra.mrb[0].mxu0 %v1759
        %v1915 = vpop.f32.mrb[0].mxu0
        %v1916 = vadd.f32 0.0, %v1915
        %v1917 = vpop.f32.mrb[0].mxu0
        %v1918 = vpop.f32.mrb[0].mxu0
        %v1919 = vadd.f32 0.0, %v1918
        %v1920 = vpop.f32.mrb[0].mxu0
        %1921 = vdwg.mxu0
        %v1922 = vadd.f32 %v1664, %v1796
        %v1923 = vadd.f32 %v1665, %v1799
        %v1924 = vadd.f32 %v1666, %v1804
        %v1925 = vadd.f32 %v1667, %v1807
        %v1926 = vadd.f32 %v1668, %v1812
        %v1927 = vadd.f32 %v1669, %v1815
        %v1928 = vadd.f32 %v1670, %v1820
        %v1929 = vadd.f32 %v1671, %v1823
        %v1930 = vadd.f32 %v1672, %v1828
        %v1931 = vadd.f32 %v1673, %v1831
        %v1932 = vadd.f32 %v1674, %v1836
        %v1933 = vadd.f32 %v1675, %v1839
        %v1934 = vadd.f32 %v1676, %v1844
        %v1935 = vadd.f32 %v1677, %v1847
        %v1936 = vadd.f32 %v1678, %v1852
        %v1937 = vadd.f32 %v1679, %v1855
        %v1938 = vadd.f32 %v1680, %v1860
        %v1939 = vadd.f32 %v1681, %v1863
        %v1940 = vadd.f32 %v1682, %v1868
        %v1941 = vadd.f32 %v1683, %v1871
        %v1942 = vadd.f32 %v1684, %v1876
        %v1943 = vadd.f32 %v1685, %v1879
        %v1944 = vadd.f32 %v1686, %v1884
        %v1945 = vadd.f32 %v1687, %v1887
        %v1946 = vadd.f32 %v1688, %v1892
        %v1947 = vadd.f32 %v1689, %v1895
        %v1948 = vadd.f32 %v1690, %v1900
        %v1949 = vadd.f32 %v1691, %v1903
        %v1950 = vadd.f32 %v1692, %v1908
        %v1951 = vadd.f32 %v1693, %v1911
        %v1952 = vadd.f32 %v1694, %v1916
        %v1953 = vadd.f32 %v1695, %v1919
        %1954 = vst.msk [vmem:[#allocation4] sm:$0xff] %vm602, %v1922
        %1955 = vst.msk [vmem:[#allocation4 + $0x8] sm:$0xff] %vm602, %v1923
        %1956 = vst.msk [vmem:[#allocation4 + $0x10] sm:$0xff] %vm602, %v1924
        %1957 = vst.msk [vmem:[#allocation4 + $0x18] sm:$0xff] %vm602, %v1925
        %1958 = vst.msk [vmem:[#allocation4 + $0x20] sm:$0xff] %vm602, %v1926
        %1959 = vst.msk [vmem:[#allocation4 + $0x28] sm:$0xff] %vm602, %v1927
        %1960 = vst.msk [vmem:[#allocation4 + $0x30] sm:$0xff] %vm602, %v1928
        %1961 = vst.msk [vmem:[#allocation4 + $0x38] sm:$0xff] %vm602, %v1929
        %1962 = vst.msk [vmem:[#allocation4 + $0x40] sm:$0xff] %vm602, %v1930
        %1963 = vst.msk [vmem:[#allocation4 + $0x48] sm:$0xff] %vm602, %v1931
        %1964 = vst.msk [vmem:[#allocation4 + $0x50] sm:$0xff] %vm602, %v1932
        %1965 = vst.msk [vmem:[#allocation4 + $0x58] sm:$0xff] %vm602, %v1933
        %1966 = vst.msk [vmem:[#allocation4 + $0x60] sm:$0xff] %vm602, %v1934
        %1967 = vst.msk [vmem:[#allocation4 + $0x68] sm:$0xff] %vm602, %v1935
        %1968 = vst.msk [vmem:[#allocation4 + $0x70] sm:$0xff] %vm602, %v1936
        %1969 = vst.msk [vmem:[#allocation4 + $0x78] sm:$0xff] %vm602, %v1937
        %1970 = vst.msk [vmem:[#allocation4 + $0x80] sm:$0xff] %vm602, %v1938
        %1971 = vst.msk [vmem:[#allocation4 + $0x88] sm:$0xff] %vm602, %v1939
        %1972 = vst.msk [vmem:[#allocation4 + $0x90] sm:$0xff] %vm602, %v1940
        %1973 = vst.msk [vmem:[#allocation4 + $0x98] sm:$0xff] %vm602, %v1941
        %1974 = vst.msk [vmem:[#allocation4 + $0xa0] sm:$0xff] %vm602, %v1942
        %1975 = vst.msk [vmem:[#allocation4 + $0xa8] sm:$0xff] %vm602, %v1943
        %1976 = vst.msk [vmem:[#allocation4 + $0xb0] sm:$0xff] %vm602, %v1944
        %1977 = vst.msk [vmem:[#allocation4 + $0xb8] sm:$0xff] %vm602, %v1945
        %1978 = vst.msk [vmem:[#allocation4 + $0xc0] sm:$0xff] %vm602, %v1946
        %1979 = vst.msk [vmem:[#allocation4 + $0xc8] sm:$0xff] %vm602, %v1947
        %1980 = vst.msk [vmem:[#allocation4 + $0xd0] sm:$0xff] %vm602, %v1948
        %1981 = vst.msk [vmem:[#allocation4 + $0xd8] sm:$0xff] %vm602, %v1949
        %1982 = vst.msk [vmem:[#allocation4 + $0xe0] sm:$0xff] %vm602, %v1950
        %1983 = vst.msk [vmem:[#allocation4 + $0xe8] sm:$0xff] %vm602, %v1951
        %1984 = vst.msk [vmem:[#allocation4 + $0xf0] sm:$0xff] %vm602, %v1952
        %1985 = vst.msk [vmem:[#allocation4 + $0xf8] sm:$0xff] %vm602, %v1953
        %v1986 = vld [vmem:[%s481] sm:$0xff]
        %v1987 = vld [vmem:[%s481 + $0x8] sm:$0xff]
        %v1988 = vld [vmem:[%s481 + $0x10] sm:$0xff]
        %v1989 = vld [vmem:[%s481 + $0x18] sm:$0xff]
        %v1990 = vld [vmem:[%s481 + $0x20] sm:$0xff]
        %v1991 = vld [vmem:[%s481 + $0x28] sm:$0xff]
        %v1992 = vld [vmem:[%s481 + $0x30] sm:$0xff]
        %v1993 = vld [vmem:[%s481 + $0x38] sm:$0xff]
        %v1994 = vld [vmem:[%s481 + $0x40] sm:$0xff]
        %v1995 = vld [vmem:[%s481 + $0x48] sm:$0xff]
        %v1996 = vld [vmem:[%s481 + $0x50] sm:$0xff]
        %v1997 = vld [vmem:[%s481 + $0x58] sm:$0xff]
        %v1998 = vld [vmem:[%s481 + $0x60] sm:$0xff]
        %v1999 = vld [vmem:[%s481 + $0x68] sm:$0xff]
        %v2000 = vld [vmem:[%s481 + $0x70] sm:$0xff]
        %v2001 = vld [vmem:[%s481 + $0x78] sm:$0xff]
        %v2002 = vld [vmem:[#allocation4] sm:$0xff]
        %v2003 = vld [vmem:[#allocation4 + $0x8] sm:$0xff]
        %v2004 = vld [vmem:[#allocation4 + $0x10] sm:$0xff]
        %v2005 = vld [vmem:[#allocation4 + $0x18] sm:$0xff]
        %v2006 = vld [vmem:[#allocation4 + $0x20] sm:$0xff]
        %v2007 = vld [vmem:[#allocation4 + $0x28] sm:$0xff]
        %v2008 = vld [vmem:[#allocation4 + $0x30] sm:$0xff]
        %v2009 = vld [vmem:[#allocation4 + $0x38] sm:$0xff]
        %v2010 = vld [vmem:[#allocation4 + $0x40] sm:$0xff]
        %v2011 = vld [vmem:[#allocation4 + $0x48] sm:$0xff]
        %v2012 = vld [vmem:[#allocation4 + $0x50] sm:$0xff]
        %v2013 = vld [vmem:[#allocation4 + $0x58] sm:$0xff]
        %v2014 = vld [vmem:[#allocation4 + $0x60] sm:$0xff]
        %v2015 = vld [vmem:[#allocation4 + $0x68] sm:$0xff]
        %v2016 = vld [vmem:[#allocation4 + $0x70] sm:$0xff]
        %v2017 = vld [vmem:[#allocation4 + $0x78] sm:$0xff]
        %v2018 = vld [vmem:[#allocation4 + $0x80] sm:$0xff]
        %v2019 = vld [vmem:[#allocation4 + $0x88] sm:$0xff]
        %v2020 = vld [vmem:[#allocation4 + $0x90] sm:$0xff]
        %v2021 = vld [vmem:[#allocation4 + $0x98] sm:$0xff]
        %v2022 = vld [vmem:[#allocation4 + $0xa0] sm:$0xff]
        %v2023 = vld [vmem:[#allocation4 + $0xa8] sm:$0xff]
        %v2024 = vld [vmem:[#allocation4 + $0xb0] sm:$0xff]
        %v2025 = vld [vmem:[#allocation4 + $0xb8] sm:$0xff]
        %v2026 = vld [vmem:[#allocation4 + $0xc0] sm:$0xff]
        %v2027 = vld [vmem:[#allocation4 + $0xc8] sm:$0xff]
        %v2028 = vld [vmem:[#allocation4 + $0xd0] sm:$0xff]
        %v2029 = vld [vmem:[#allocation4 + $0xd8] sm:$0xff]
        %v2030 = vld [vmem:[#allocation4 + $0xe0] sm:$0xff]
        %v2031 = vld [vmem:[#allocation4 + $0xe8] sm:$0xff]
        %v2032 = vld [vmem:[#allocation4 + $0xf0] sm:$0xff]
        %v2033 = vld [vmem:[#allocation4 + $0xf8] sm:$0xff]
        %s2034 = scalar_lea.vmem [#allocation10], 64
        %v2035 = vld [vmem:[%s2034] sm:$0xf]
        %v2036 = vld [vmem:[%s2034 + $0x4] sm:$0xf]
        %v2037 = vld [vmem:[%s2034 + $0x8] sm:$0xf]
        %v2038 = vld [vmem:[%s2034 + $0xc] sm:$0xf]
        %v2043 = vunpack.c.l.b16 %v2035
        %v2044 = vunpack.c.l.b16 %v2036
        %v2045 = vunpack.c.l.b16 %v2037
        %v2046 = vunpack.c.l.b16 %v2038
        %v2047 = vpack.c.b16 %v2044, %v2043
        %v2048 = vpack.c.b16 %v2046, %v2045
        %v2052 = vsel %vm298, %v1986, 0
        %v2055 = vsel %vm298, %v1987, 0
        %v2058 = vsel %vm298, %v1988, 0
        %v2061 = vsel %vm298, %v1989, 0
        %v2064 = vsel %vm298, %v1990, 0
        %v2067 = vsel %vm298, %v1991, 0
        %v2070 = vsel %vm298, %v1992, 0
        %v2073 = vsel %vm298, %v1993, 0
        %v2076 = vsel %vm298, %v1994, 0
        %v2079 = vsel %vm298, %v1995, 0
        %v2082 = vsel %vm298, %v1996, 0
        %v2085 = vsel %vm298, %v1997, 0
        %v2088 = vsel %vm298, %v1998, 0
        %v2091 = vsel %vm298, %v1999, 0
        %v2094 = vsel %vm298, %v2000, 0
        %v2097 = vsel %vm298, %v2001, 0
        %2099 = vmatprep.subr.bf16.mxu0 0
        %2100 = vmatpush1.bf16.msra.mxu0 %v2047
        %2101 = vmatprep.subr.bf16.mxu0 0
        %2102 = vmatpush1.bf16.msra.mxu0 %v2048
        %2103 = vmatprep.subr.bf16.mxu0 0
        %2104 = vmatpush1.bf16.msra.mxu0 0
        %2105 = vmatprep.subr.bf16.mxu0 0
        %2106 = vmatpush1.bf16.msra.mxu0 0
        %2107 = vmatprep.subr.bf16.mxu0 0
        %2108 = vmatpush1.bf16.msra.mxu0 0
        %2109 = vmatprep.subr.bf16.mxu0 0
        %2110 = vmatpush1.bf16.msra.mxu0 0
        %2111 = vmatprep.subr.bf16.mxu0 0
        %2112 = vmatpush1.bf16.msra.mxu0 0
        %2113 = vmatprep.subr.bf16.mxu0 0
        %2114 = vmatpush1.bf16.msra.mxu0 0
        %2115 = vmatprep.subr.bf16.mxu0 0
        %2116 = vmatpush1.bf16.msra.mxu0 0
        %2117 = vmatprep.subr.bf16.mxu0 0
        %2118 = vmatpush1.bf16.msra.mxu0 0
        %2119 = vmatprep.subr.bf16.mxu0 0
        %2120 = vmatpush1.bf16.msra.mxu0 0
        %2121 = vmatprep.subr.bf16.mxu0 0
        %2122 = vmatpush1.bf16.msra.mxu0 0
        %2123 = vmatprep.subr.bf16.mxu0 0
        %2124 = vmatpush1.bf16.msra.mxu0 0
        %2125 = vmatprep.subr.bf16.mxu0 0
        %2126 = vmatpush1.bf16.msra.mxu0 0
        %2127 = vmatprep.subr.bf16.mxu0 0
        %2128 = vmatpush1.bf16.msra.mxu0 0
        %2129 = vmatprep.subr.bf16.mxu0 0
        %2130 = vmatpush1.bf16.msra.mxu0 0
        %2131 = vmatprep.mubr.bf16.mxu0 0
        %2132 = vmatmul.mubr.bf16.gmra.mrb[0].mxu0 %v2052
        %v2133 = vpop.f32.mrb[0].mxu0
        %v2134 = vadd.f32 0.0, %v2133
        %v2135 = vpop.f32.mrb[0].mxu0
        %v2136 = vpop.f32.mrb[0].mxu0
        %v2137 = vadd.f32 0.0, %v2136
        %v2138 = vpop.f32.mrb[0].mxu0
        %2139 = vmatprep.mubr.bf16.mxu0 0
        %2140 = vmatmul.mubr.bf16.gmra.mrb[0].mxu0 %v2055
        %v2141 = vpop.f32.mrb[0].mxu0
        %v2142 = vadd.f32 0.0, %v2141
        %v2143 = vpop.f32.mrb[0].mxu0
        %v2144 = vpop.f32.mrb[0].mxu0
        %v2145 = vadd.f32 0.0, %v2144
        %v2146 = vpop.f32.mrb[0].mxu0
        %2147 = vmatprep.mubr.bf16.mxu0 0
        %2148 = vmatmul.mubr.bf16.gmra.mrb[0].mxu0 %v2058
        %v2149 = vpop.f32.mrb[0].mxu0
        %v2150 = vadd.f32 0.0, %v2149
        %v2151 = vpop.f32.mrb[0].mxu0
        %v2152 = vpop.f32.mrb[0].mxu0
        %v2153 = vadd.f32 0.0, %v2152
        %v2154 = vpop.f32.mrb[0].mxu0
        %2155 = vmatprep.mubr.bf16.mxu0 0
        %2156 = vmatmul.mubr.bf16.gmra.mrb[0].mxu0 %v2061
        %v2157 = vpop.f32.mrb[0].mxu0
        %v2158 = vadd.f32 0.0, %v2157
        %v2159 = vpop.f32.mrb[0].mxu0
        %v2160 = vpop.f32.mrb[0].mxu0
        %v2161 = vadd.f32 0.0, %v2160
        %v2162 = vpop.f32.mrb[0].mxu0
        %2163 = vmatprep.mubr.bf16.mxu0 0
        %2164 = vmatmul.mubr.bf16.gmra.mrb[0].mxu0 %v2064
        %v2165 = vpop.f32.mrb[0].mxu0
        %v2166 = vadd.f32 0.0, %v2165
        %v2167 = vpop.f32.mrb[0].mxu0
        %v2168 = vpop.f32.mrb[0].mxu0
        %v2169 = vadd.f32 0.0, %v2168
        %v2170 = vpop.f32.mrb[0].mxu0
        %2171 = vmatprep.mubr.bf16.mxu0 0
        %2172 = vmatmul.mubr.bf16.gmra.mrb[0].mxu0 %v2067
        %v2173 = vpop.f32.mrb[0].mxu0
        %v2174 = vadd.f32 0.0, %v2173
        %v2175 = vpop.f32.mrb[0].mxu0
        %v2176 = vpop.f32.mrb[0].mxu0
        %v2177 = vadd.f32 0.0, %v2176
        %v2178 = vpop.f32.mrb[0].mxu0
        %2179 = vmatprep.mubr.bf16.mxu0 0
        %2180 = vmatmul.mubr.bf16.gmra.mrb[0].mxu0 %v2070
        %v2181 = vpop.f32.mrb[0].mxu0
        %v2182 = vadd.f32 0.0, %v2181
        %v2183 = vpop.f32.mrb[0].mxu0
        %v2184 = vpop.f32.mrb[0].mxu0
        %v2185 = vadd.f32 0.0, %v2184
        %v2186 = vpop.f32.mrb[0].mxu0
        %2187 = vmatprep.mubr.bf16.mxu0 0
        %2188 = vmatmul.mubr.bf16.gmra.mrb[0].mxu0 %v2073
        %v2189 = vpop.f32.mrb[0].mxu0
        %v2190 = vadd.f32 0.0, %v2189
        %v2191 = vpop.f32.mrb[0].mxu0
        %v2192 = vpop.f32.mrb[0].mxu0
        %v2193 = vadd.f32 0.0, %v2192
        %v2194 = vpop.f32.mrb[0].mxu0
        %2195 = vmatprep.mubr.bf16.mxu0 0
        %2196 = vmatmul.mubr.bf16.gmra.mrb[0].mxu0 %v2076
        %v2197 = vpop.f32.mrb[0].mxu0
        %v2198 = vadd.f32 0.0, %v2197
        %v2199 = vpop.f32.mrb[0].mxu0
        %v2200 = vpop.f32.mrb[0].mxu0
        %v2201 = vadd.f32 0.0, %v2200
        %v2202 = vpop.f32.mrb[0].mxu0
        %2203 = vmatprep.mubr.bf16.mxu0 0
        %2204 = vmatmul.mubr.bf16.gmra.mrb[0].mxu0 %v2079
        %v2205 = vpop.f32.mrb[0].mxu0
        %v2206 = vadd.f32 0.0, %v2205
        %v2207 = vpop.f32.mrb[0].mxu0
        %v2208 = vpop.f32.mrb[0].mxu0
        %v2209 = vadd.f32 0.0, %v2208
        %v2210 = vpop.f32.mrb[0].mxu0
        %2211 = vmatprep.mubr.bf16.mxu0 0
        %2212 = vmatmul.mubr.bf16.gmra.mrb[0].mxu0 %v2082
        %v2213 = vpop.f32.mrb[0].mxu0
        %v2214 = vadd.f32 0.0, %v2213
        %v2215 = vpop.f32.mrb[0].mxu0
        %v2216 = vpop.f32.mrb[0].mxu0
        %v2217 = vadd.f32 0.0, %v2216
        %v2218 = vpop.f32.mrb[0].mxu0
        %2219 = vmatprep.mubr.bf16.mxu0 0
        %2220 = vmatmul.mubr.bf16.gmra.mrb[0].mxu0 %v2085
        %v2221 = vpop.f32.mrb[0].mxu0
        %v2222 = vadd.f32 0.0, %v2221
        %v2223 = vpop.f32.mrb[0].mxu0
        %v2224 = vpop.f32.mrb[0].mxu0
        %v2225 = vadd.f32 0.0, %v2224
        %v2226 = vpop.f32.mrb[0].mxu0
        %2227 = vmatprep.mubr.bf16.mxu0 0
        %2228 = vmatmul.mubr.bf16.gmra.mrb[0].mxu0 %v2088
        %v2229 = vpop.f32.mrb[0].mxu0
        %v2230 = vadd.f32 0.0, %v2229
        %v2231 = vpop.f32.mrb[0].mxu0
        %v2232 = vpop.f32.mrb[0].mxu0
        %v2233 = vadd.f32 0.0, %v2232
        %v2234 = vpop.f32.mrb[0].mxu0
        %2235 = vmatprep.mubr.bf16.mxu0 0
        %2236 = vmatmul.mubr.bf16.gmra.mrb[0].mxu0 %v2091
        %v2237 = vpop.f32.mrb[0].mxu0
        %v2238 = vadd.f32 0.0, %v2237
        %v2239 = vpop.f32.mrb[0].mxu0
        %v2240 = vpop.f32.mrb[0].mxu0
        %v2241 = vadd.f32 0.0, %v2240
        %v2242 = vpop.f32.mrb[0].mxu0
        %2243 = vmatprep.mubr.bf16.mxu0 0
        %2244 = vmatmul.mubr.bf16.gmra.mrb[0].mxu0 %v2094
        %v2245 = vpop.f32.mrb[0].mxu0
        %v2246 = vadd.f32 0.0, %v2245
        %v2247 = vpop.f32.mrb[0].mxu0
        %v2248 = vpop.f32.mrb[0].mxu0
        %v2249 = vadd.f32 0.0, %v2248
        %v2250 = vpop.f32.mrb[0].mxu0
        %2251 = vmatprep.mubr.bf16.mxu0 0
        %2252 = vmatmul.mubr.bf16.gmra.mrb[0].mxu0 %v2097
        %v2253 = vpop.f32.mrb[0].mxu0
        %v2254 = vadd.f32 0.0, %v2253
        %v2255 = vpop.f32.mrb[0].mxu0
        %v2256 = vpop.f32.mrb[0].mxu0
        %v2257 = vadd.f32 0.0, %v2256
        %v2258 = vpop.f32.mrb[0].mxu0
        %2259 = vdwg.mxu0
        %v2260 = vadd.f32 %v2002, %v2134
        %v2261 = vadd.f32 %v2003, %v2137
        %v2262 = vadd.f32 %v2004, %v2142
        %v2263 = vadd.f32 %v2005, %v2145
        %v2264 = vadd.f32 %v2006, %v2150
        %v2265 = vadd.f32 %v2007, %v2153
        %v2266 = vadd.f32 %v2008, %v2158
        %v2267 = vadd.f32 %v2009, %v2161
        %v2268 = vadd.f32 %v2010, %v2166
        %v2269 = vadd.f32 %v2011, %v2169
        %v2270 = vadd.f32 %v2012, %v2174
        %v2271 = vadd.f32 %v2013, %v2177
        %v2272 = vadd.f32 %v2014, %v2182
        %v2273 = vadd.f32 %v2015, %v2185
        %v2274 = vadd.f32 %v2016, %v2190
        %v2275 = vadd.f32 %v2017, %v2193
        %v2276 = vadd.f32 %v2018, %v2198
        %v2277 = vadd.f32 %v2019, %v2201
        %v2278 = vadd.f32 %v2020, %v2206
        %v2279 = vadd.f32 %v2021, %v2209
        %v2280 = vadd.f32 %v2022, %v2214
        %v2281 = vadd.f32 %v2023, %v2217
        %v2282 = vadd.f32 %v2024, %v2222
        %v2283 = vadd.f32 %v2025, %v2225
        %v2284 = vadd.f32 %v2026, %v2230
        %v2285 = vadd.f32 %v2027, %v2233
        %v2286 = vadd.f32 %v2028, %v2238
        %v2287 = vadd.f32 %v2029, %v2241
        %v2288 = vadd.f32 %v2030, %v2246
        %v2289 = vadd.f32 %v2031, %v2249
        %v2290 = vadd.f32 %v2032, %v2254
        %v2291 = vadd.f32 %v2033, %v2257
        %2292 = vst.msk [vmem:[#allocation4] sm:$0xff] %vm602, %v2260
        %2293 = vst.msk [vmem:[#allocation4 + $0x8] sm:$0xff] %vm602, %v2261
        %2294 = vst.msk [vmem:[#allocation4 + $0x10] sm:$0xff] %vm602, %v2262
        %2295 = vst.msk [vmem:[#allocation4 + $0x18] sm:$0xff] %vm602, %v2263
        %2296 = vst.msk [vmem:[#allocation4 + $0x20] sm:$0xff] %vm602, %v2264
        %2297 = vst.msk [vmem:[#allocation4 + $0x28] sm:$0xff] %vm602, %v2265
        %2298 = vst.msk [vmem:[#allocation4 + $0x30] sm:$0xff] %vm602, %v2266
        %2299 = vst.msk [vmem:[#allocation4 + $0x38] sm:$0xff] %vm602, %v2267
        %2300 = vst.msk [vmem:[#allocation4 + $0x40] sm:$0xff] %vm602, %v2268
        %2301 = vst.msk [vmem:[#allocation4 + $0x48] sm:$0xff] %vm602, %v2269
        %2302 = vst.msk [vmem:[#allocation4 + $0x50] sm:$0xff] %vm602, %v2270
        %2303 = vst.msk [vmem:[#allocation4 + $0x58] sm:$0xff] %vm602, %v2271
        %2304 = vst.msk [vmem:[#allocation4 + $0x60] sm:$0xff] %vm602, %v2272
        %2305 = vst.msk [vmem:[#allocation4 + $0x68] sm:$0xff] %vm602, %v2273
        %2306 = vst.msk [vmem:[#allocation4 + $0x70] sm:$0xff] %vm602, %v2274
        %2307 = vst.msk [vmem:[#allocation4 + $0x78] sm:$0xff] %vm602, %v2275
        %2308 = vst.msk [vmem:[#allocation4 + $0x80] sm:$0xff] %vm602, %v2276
        %2309 = vst.msk [vmem:[#allocation4 + $0x88] sm:$0xff] %vm602, %v2277
        %2310 = vst.msk [vmem:[#allocation4 + $0x90] sm:$0xff] %vm602, %v2278
        %2311 = vst.msk [vmem:[#allocation4 + $0x98] sm:$0xff] %vm602, %v2279
        %2312 = vst.msk [vmem:[#allocation4 + $0xa0] sm:$0xff] %vm602, %v2280
        %2313 = vst.msk [vmem:[#allocation4 + $0xa8] sm:$0xff] %vm602, %v2281
        %2314 = vst.msk [vmem:[#allocation4 + $0xb0] sm:$0xff] %vm602, %v2282
        %2315 = vst.msk [vmem:[#allocation4 + $0xb8] sm:$0xff] %vm602, %v2283
        %2316 = vst.msk [vmem:[#allocation4 + $0xc0] sm:$0xff] %vm602, %v2284
        %2317 = vst.msk [vmem:[#allocation4 + $0xc8] sm:$0xff] %vm602, %v2285
        %2318 = vst.msk [vmem:[#allocation4 + $0xd0] sm:$0xff] %vm602, %v2286
        %2319 = vst.msk [vmem:[#allocation4 + $0xd8] sm:$0xff] %vm602, %v2287
        %2320 = vst.msk [vmem:[#allocation4 + $0xe0] sm:$0xff] %vm602, %v2288
        %2321 = vst.msk [vmem:[#allocation4 + $0xe8] sm:$0xff] %vm602, %v2289
        %2322 = vst.msk [vmem:[#allocation4 + $0xf0] sm:$0xff] %vm602, %v2290
        %2323 = vst.msk [vmem:[#allocation4 + $0xf8] sm:$0xff] %vm602, %v2291
        %v2324 = vld [vmem:[%s483] sm:$0xff]
        %v2325 = vld [vmem:[%s483 + $0x8] sm:$0xff]
        %v2326 = vld [vmem:[%s483 + $0x10] sm:$0xff]
        %v2327 = vld [vmem:[%s483 + $0x18] sm:$0xff]
        %v2328 = vld [vmem:[%s483 + $0x20] sm:$0xff]
        %v2329 = vld [vmem:[%s483 + $0x28] sm:$0xff]
        %v2330 = vld [vmem:[%s483 + $0x30] sm:$0xff]
        %v2331 = vld [vmem:[%s483 + $0x38] sm:$0xff]
        %v2332 = vld [vmem:[%s483 + $0x40] sm:$0xff]
        %v2333 = vld [vmem:[%s483 + $0x48] sm:$0xff]
        %v2334 = vld [vmem:[%s483 + $0x50] sm:$0xff]
        %v2335 = vld [vmem:[%s483 + $0x58] sm:$0xff]
        %v2336 = vld [vmem:[%s483 + $0x60] sm:$0xff]
        %v2337 = vld [vmem:[%s483 + $0x68] sm:$0xff]
        %v2338 = vld [vmem:[%s483 + $0x70] sm:$0xff]
        %v2339 = vld [vmem:[%s483 + $0x78] sm:$0xff]
        %v2340 = vld [vmem:[#allocation4] sm:$0xff]
        %v2341 = vld [vmem:[#allocation4 + $0x8] sm:$0xff]
        %v2342 = vld [vmem:[#allocation4 + $0x10] sm:$0xff]
        %v2343 = vld [vmem:[#allocation4 + $0x18] sm:$0xff]
        %v2344 = vld [vmem:[#allocation4 + $0x20] sm:$0xff]
        %v2345 = vld [vmem:[#allocation4 + $0x28] sm:$0xff]
        %v2346 = vld [vmem:[#allocation4 + $0x30] sm:$0xff]
        %v2347 = vld [vmem:[#allocation4 + $0x38] sm:$0xff]
        %v2348 = vld [vmem:[#allocation4 + $0x40] sm:$0xff]
        %v2349 = vld [vmem:[#allocation4 + $0x48] sm:$0xff]
        %v2350 = vld [vmem:[#allocation4 + $0x50] sm:$0xff]
        %v2351 = vld [vmem:[#allocation4 + $0x58] sm:$0xff]
        %v2352 = vld [vmem:[#allocation4 + $0x60] sm:$0xff]
        %v2353 = vld [vmem:[#allocation4 + $0x68] sm:$0xff]
        %v2354 = vld [vmem:[#allocation4 + $0x70] sm:$0xff]
        %v2355 = vld [vmem:[#allocation4 + $0x78] sm:$0xff]
        %v2356 = vld [vmem:[#allocation4 + $0x80] sm:$0xff]
        %v2357 = vld [vmem:[#allocation4 + $0x88] sm:$0xff]
        %v2358 = vld [vmem:[#allocation4 + $0x90] sm:$0xff]
        %v2359 = vld [vmem:[#allocation4 + $0x98] sm:$0xff]
        %v2360 = vld [vmem:[#allocation4 + $0xa0] sm:$0xff]
        %v2361 = vld [vmem:[#allocation4 + $0xa8] sm:$0xff]
        %v2362 = vld [vmem:[#allocation4 + $0xb0] sm:$0xff]
        %v2363 = vld [vmem:[#allocation4 + $0xb8] sm:$0xff]
        %v2364 = vld [vmem:[#allocation4 + $0xc0] sm:$0xff]
        %v2365 = vld [vmem:[#allocation4 + $0xc8] sm:$0xff]
        %v2366 = vld [vmem:[#allocation4 + $0xd0] sm:$0xff]
        %v2367 = vld [vmem:[#allocation4 + $0xd8] sm:$0xff]
        %v2368 = vld [vmem:[#allocation4 + $0xe0] sm:$0xff]
        %v2369 = vld [vmem:[#allocation4 + $0xe8] sm:$0xff]
        %v2370 = vld [vmem:[#allocation4 + $0xf0] sm:$0xff]
        %v2371 = vld [vmem:[#allocation4 + $0xf8] sm:$0xff]
        %s2372 = scalar_lea.vmem [#allocation10], 80
        %v2373 = vld [vmem:[%s2372] sm:$0xf]
        %v2374 = vld [vmem:[%s2372 + $0x4] sm:$0xf]
        %v2375 = vld [vmem:[%s2372 + $0x8] sm:$0xf]
        %v2376 = vld [vmem:[%s2372 + $0xc] sm:$0xf]
        %v2381 = vunpack.c.l.b16 %v2373
        %v2382 = vunpack.c.l.b16 %v2374
        %v2383 = vunpack.c.l.b16 %v2375
        %v2384 = vunpack.c.l.b16 %v2376
        %v2385 = vpack.c.b16 %v2382, %v2381
        %v2386 = vpack.c.b16 %v2384, %v2383
        %v2390 = vsel %vm298, %v2324, 0
        %v2393 = vsel %vm298, %v2325, 0
        %v2396 = vsel %vm298, %v2326, 0
        %v2399 = vsel %vm298, %v2327, 0
        %v2402 = vsel %vm298, %v2328, 0
        %v2405 = vsel %vm298, %v2329, 0
        %v2408 = vsel %vm298, %v2330, 0
        %v2411 = vsel %vm298, %v2331, 0
        %v2414 = vsel %vm298, %v2332, 0
        %v2417 = vsel %vm298, %v2333, 0
        %v2420 = vsel %vm298, %v2334, 0
        %v2423 = vsel %vm298, %v2335, 0
        %v2426 = vsel %vm298, %v2336, 0
        %v2429 = vsel %vm298, %v2337, 0
        %v2432 = vsel %vm298, %v2338, 0
        %v2435 = vsel %vm298, %v2339, 0
        %2437 = vmatprep.subr.bf16.mxu0 0
        %2438 = vmatpush1.bf16.msra.mxu0 %v2385
        %2439 = vmatprep.subr.bf16.mxu0 0
        %2440 = vmatpush1.bf16.msra.mxu0 %v2386
        %2441 = vmatprep.subr.bf16.mxu0 0
        %2442 = vmatpush1.bf16.msra.mxu0 0
        %2443 = vmatprep.subr.bf16.mxu0 0
        %2444 = vmatpush1.bf16.msra.mxu0 0
        %2445 = vmatprep.subr.bf16.mxu0 0
        %2446 = vmatpush1.bf16.msra.mxu0 0
        %2447 = vmatprep.subr.bf16.mxu0 0
        %2448 = vmatpush1.bf16.msra.mxu0 0
        %2449 = vmatprep.subr.bf16.mxu0 0
        %2450 = vmatpush1.bf16.msra.mxu0 0
        %2451 = vmatprep.subr.bf16.mxu0 0
        %2452 = vmatpush1.bf16.msra.mxu0 0
        %2453 = vmatprep.subr.bf16.mxu0 0
        %2454 = vmatpush1.bf16.msra.mxu0 0
        %2455 = vmatprep.subr.bf16.mxu0 0
        %2456 = vmatpush1.bf16.msra.mxu0 0
        %2457 = vmatprep.subr.bf16.mxu0 0
        %2458 = vmatpush1.bf16.msra.mxu0 0
        %2459 = vmatprep.subr.bf16.mxu0 0
        %2460 = vmatpush1.bf16.msra.mxu0 0
        %2461 = vmatprep.subr.bf16.mxu0 0
        %2462 = vmatpush1.bf16.msra.mxu0 0
        %2463 = vmatprep.subr.bf16.mxu0 0
        %2464 = vmatpush1.bf16.msra.mxu0 0
        %2465 = vmatprep.subr.bf16.mxu0 0
        %2466 = vmatpush1.bf16.msra.mxu0 0
        %2467 = vmatprep.subr.bf16.mxu0 0
        %2468 = vmatpush1.bf16.msra.mxu0 0
        %2469 = vmatprep.mubr.bf16.mxu0 0
        %2470 = vmatmul.mubr.bf16.gmra.mrb[0].mxu0 %v2390
        %v2471 = vpop.f32.mrb[0].mxu0
        %v2472 = vadd.f32 0.0, %v2471
        %v2473 = vpop.f32.mrb[0].mxu0
        %v2474 = vpop.f32.mrb[0].mxu0
        %v2475 = vadd.f32 0.0, %v2474
        %v2476 = vpop.f32.mrb[0].mxu0
        %2477 = vmatprep.mubr.bf16.mxu0 0
        %2478 = vmatmul.mubr.bf16.gmra.mrb[0].mxu0 %v2393
        %v2479 = vpop.f32.mrb[0].mxu0
        %v2480 = vadd.f32 0.0, %v2479
        %v2481 = vpop.f32.mrb[0].mxu0
        %v2482 = vpop.f32.mrb[0].mxu0
        %v2483 = vadd.f32 0.0, %v2482
        %v2484 = vpop.f32.mrb[0].mxu0
        %2485 = vmatprep.mubr.bf16.mxu0 0
        %2486 = vmatmul.mubr.bf16.gmra.mrb[0].mxu0 %v2396
        %v2487 = vpop.f32.mrb[0].mxu0
        %v2488 = vadd.f32 0.0, %v2487
        %v2489 = vpop.f32.mrb[0].mxu0
        %v2490 = vpop.f32.mrb[0].mxu0
        %v2491 = vadd.f32 0.0, %v2490
        %v2492 = vpop.f32.mrb[0].mxu0
        %2493 = vmatprep.mubr.bf16.mxu0 0
        %2494 = vmatmul.mubr.bf16.gmra.mrb[0].mxu0 %v2399
        %v2495 = vpop.f32.mrb[0].mxu0
        %v2496 = vadd.f32 0.0, %v2495
        %v2497 = vpop.f32.mrb[0].mxu0
        %v2498 = vpop.f32.mrb[0].mxu0
        %v2499 = vadd.f32 0.0, %v2498
        %v2500 = vpop.f32.mrb[0].mxu0
        %2501 = vmatprep.mubr.bf16.mxu0 0
        %2502 = vmatmul.mubr.bf16.gmra.mrb[0].mxu0 %v2402
        %v2503 = vpop.f32.mrb[0].mxu0
        %v2504 = vadd.f32 0.0, %v2503
        %v2505 = vpop.f32.mrb[0].mxu0
        %v2506 = vpop.f32.mrb[0].mxu0
        %v2507 = vadd.f32 0.0, %v2506
        %v2508 = vpop.f32.mrb[0].mxu0
        %2509 = vmatprep.mubr.bf16.mxu0 0
        %2510 = vmatmul.mubr.bf16.gmra.mrb[0].mxu0 %v2405
        %v2511 = vpop.f32.mrb[0].mxu0
        %v2512 = vadd.f32 0.0, %v2511
        %v2513 = vpop.f32.mrb[0].mxu0
        %v2514 = vpop.f32.mrb[0].mxu0
        %v2515 = vadd.f32 0.0, %v2514
        %v2516 = vpop.f32.mrb[0].mxu0
        %2517 = vmatprep.mubr.bf16.mxu0 0
        %2518 = vmatmul.mubr.bf16.gmra.mrb[0].mxu0 %v2408
        %v2519 = vpop.f32.mrb[0].mxu0
        %v2520 = vadd.f32 0.0, %v2519
        %v2521 = vpop.f32.mrb[0].mxu0
        %v2522 = vpop.f32.mrb[0].mxu0
        %v2523 = vadd.f32 0.0, %v2522
        %v2524 = vpop.f32.mrb[0].mxu0
        %2525 = vmatprep.mubr.bf16.mxu0 0
        %2526 = vmatmul.mubr.bf16.gmra.mrb[0].mxu0 %v2411
        %v2527 = vpop.f32.mrb[0].mxu0
        %v2528 = vadd.f32 0.0, %v2527
        %v2529 = vpop.f32.mrb[0].mxu0
        %v2530 = vpop.f32.mrb[0].mxu0
        %v2531 = vadd.f32 0.0, %v2530
        %v2532 = vpop.f32.mrb[0].mxu0
        %2533 = vmatprep.mubr.bf16.mxu0 0
        %2534 = vmatmul.mubr.bf16.gmra.mrb[0].mxu0 %v2414
        %v2535 = vpop.f32.mrb[0].mxu0
        %v2536 = vadd.f32 0.0, %v2535
        %v2537 = vpop.f32.mrb[0].mxu0
        %v2538 = vpop.f32.mrb[0].mxu0
        %v2539 = vadd.f32 0.0, %v2538
        %v2540 = vpop.f32.mrb[0].mxu0
        %2541 = vmatprep.mubr.bf16.mxu0 0
        %2542 = vmatmul.mubr.bf16.gmra.mrb[0].mxu0 %v2417
        %v2543 = vpop.f32.mrb[0].mxu0
        %v2544 = vadd.f32 0.0, %v2543
        %v2545 = vpop.f32.mrb[0].mxu0
        %v2546 = vpop.f32.mrb[0].mxu0
        %v2547 = vadd.f32 0.0, %v2546
        %v2548 = vpop.f32.mrb[0].mxu0
        %2549 = vmatprep.mubr.bf16.mxu0 0
        %2550 = vmatmul.mubr.bf16.gmra.mrb[0].mxu0 %v2420
        %v2551 = vpop.f32.mrb[0].mxu0
        %v2552 = vadd.f32 0.0, %v2551
        %v2553 = vpop.f32.mrb[0].mxu0
        %v2554 = vpop.f32.mrb[0].mxu0
        %v2555 = vadd.f32 0.0, %v2554
        %v2556 = vpop.f32.mrb[0].mxu0
        %2557 = vmatprep.mubr.bf16.mxu0 0
        %2558 = vmatmul.mubr.bf16.gmra.mrb[0].mxu0 %v2423
        %v2559 = vpop.f32.mrb[0].mxu0
        %v2560 = vadd.f32 0.0, %v2559
        %v2561 = vpop.f32.mrb[0].mxu0
        %v2562 = vpop.f32.mrb[0].mxu0
        %v2563 = vadd.f32 0.0, %v2562
        %v2564 = vpop.f32.mrb[0].mxu0
        %2565 = vmatprep.mubr.bf16.mxu0 0
        %2566 = vmatmul.mubr.bf16.gmra.mrb[0].mxu0 %v2426
        %v2567 = vpop.f32.mrb[0].mxu0
        %v2568 = vadd.f32 0.0, %v2567
        %v2569 = vpop.f32.mrb[0].mxu0
        %v2570 = vpop.f32.mrb[0].mxu0
        %v2571 = vadd.f32 0.0, %v2570
        %v2572 = vpop.f32.mrb[0].mxu0
        %2573 = vmatprep.mubr.bf16.mxu0 0
        %2574 = vmatmul.mubr.bf16.gmra.mrb[0].mxu0 %v2429
        %v2575 = vpop.f32.mrb[0].mxu0
        %v2576 = vadd.f32 0.0, %v2575
        %v2577 = vpop.f32.mrb[0].mxu0
        %v2578 = vpop.f32.mrb[0].mxu0
        %v2579 = vadd.f32 0.0, %v2578
        %v2580 = vpop.f32.mrb[0].mxu0
        %2581 = vmatprep.mubr.bf16.mxu0 0
        %2582 = vmatmul.mubr.bf16.gmra.mrb[0].mxu0 %v2432
        %v2583 = vpop.f32.mrb[0].mxu0
        %v2584 = vadd.f32 0.0, %v2583
        %v2585 = vpop.f32.mrb[0].mxu0
        %v2586 = vpop.f32.mrb[0].mxu0
        %v2587 = vadd.f32 0.0, %v2586
        %v2588 = vpop.f32.mrb[0].mxu0
        %2589 = vmatprep.mubr.bf16.mxu0 0
        %2590 = vmatmul.mubr.bf16.gmra.mrb[0].mxu0 %v2435
        %v2591 = vpop.f32.mrb[0].mxu0
        %v2592 = vadd.f32 0.0, %v2591
        %v2593 = vpop.f32.mrb[0].mxu0
        %v2594 = vpop.f32.mrb[0].mxu0
        %v2595 = vadd.f32 0.0, %v2594
        %v2596 = vpop.f32.mrb[0].mxu0
        %2597 = vdwg.mxu0
        %v2598 = vadd.f32 %v2340, %v2472
        %v2599 = vadd.f32 %v2341, %v2475
        %v2600 = vadd.f32 %v2342, %v2480
        %v2601 = vadd.f32 %v2343, %v2483
        %v2602 = vadd.f32 %v2344, %v2488
        %v2603 = vadd.f32 %v2345, %v2491
        %v2604 = vadd.f32 %v2346, %v2496
        %v2605 = vadd.f32 %v2347, %v2499
        %v2606 = vadd.f32 %v2348, %v2504
        %v2607 = vadd.f32 %v2349, %v2507
        %v2608 = vadd.f32 %v2350, %v2512
        %v2609 = vadd.f32 %v2351, %v2515
        %v2610 = vadd.f32 %v2352, %v2520
        %v2611 = vadd.f32 %v2353, %v2523
        %v2612 = vadd.f32 %v2354, %v2528
        %v2613 = vadd.f32 %v2355, %v2531
        %v2614 = vadd.f32 %v2356, %v2536
        %v2615 = vadd.f32 %v2357, %v2539
        %v2616 = vadd.f32 %v2358, %v2544
        %v2617 = vadd.f32 %v2359, %v2547
        %v2618 = vadd.f32 %v2360, %v2552
        %v2619 = vadd.f32 %v2361, %v2555
        %v2620 = vadd.f32 %v2362, %v2560
        %v2621 = vadd.f32 %v2363, %v2563
        %v2622 = vadd.f32 %v2364, %v2568
        %v2623 = vadd.f32 %v2365, %v2571
        %v2624 = vadd.f32 %v2366, %v2576
        %v2625 = vadd.f32 %v2367, %v2579
        %v2626 = vadd.f32 %v2368, %v2584
        %v2627 = vadd.f32 %v2369, %v2587
        %v2628 = vadd.f32 %v2370, %v2592
        %v2629 = vadd.f32 %v2371, %v2595
        %2630 = vst.msk [vmem:[#allocation4] sm:$0xff] %vm602, %v2598
        %2631 = vst.msk [vmem:[#allocation4 + $0x8] sm:$0xff] %vm602, %v2599
        %2632 = vst.msk [vmem:[#allocation4 + $0x10] sm:$0xff] %vm602, %v2600
        %2633 = vst.msk [vmem:[#allocation4 + $0x18] sm:$0xff] %vm602, %v2601
        %2634 = vst.msk [vmem:[#allocation4 + $0x20] sm:$0xff] %vm602, %v2602
        %2635 = vst.msk [vmem:[#allocation4 + $0x28] sm:$0xff] %vm602, %v2603
        %2636 = vst.msk [vmem:[#allocation4 + $0x30] sm:$0xff] %vm602, %v2604
        %2637 = vst.msk [vmem:[#allocation4 + $0x38] sm:$0xff] %vm602, %v2605
        %2638 = vst.msk [vmem:[#allocation4 + $0x40] sm:$0xff] %vm602, %v2606
        %2639 = vst.msk [vmem:[#allocation4 + $0x48] sm:$0xff] %vm602, %v2607
        %2640 = vst.msk [vmem:[#allocation4 + $0x50] sm:$0xff] %vm602, %v2608
        %2641 = vst.msk [vmem:[#allocation4 + $0x58] sm:$0xff] %vm602, %v2609
        %2642 = vst.msk [vmem:[#allocation4 + $0x60] sm:$0xff] %vm602, %v2610
        %2643 = vst.msk [vmem:[#allocation4 + $0x68] sm:$0xff] %vm602, %v2611
        %2644 = vst.msk [vmem:[#allocation4 + $0x70] sm:$0xff] %vm602, %v2612
        %2645 = vst.msk [vmem:[#allocation4 + $0x78] sm:$0xff] %vm602, %v2613
        %2646 = vst.msk [vmem:[#allocation4 + $0x80] sm:$0xff] %vm602, %v2614
        %2647 = vst.msk [vmem:[#allocation4 + $0x88] sm:$0xff] %vm602, %v2615
        %2648 = vst.msk [vmem:[#allocation4 + $0x90] sm:$0xff] %vm602, %v2616
        %2649 = vst.msk [vmem:[#allocation4 + $0x98] sm:$0xff] %vm602, %v2617
        %2650 = vst.msk [vmem:[#allocation4 + $0xa0] sm:$0xff] %vm602, %v2618
        %2651 = vst.msk [vmem:[#allocation4 + $0xa8] sm:$0xff] %vm602, %v2619
        %2652 = vst.msk [vmem:[#allocation4 + $0xb0] sm:$0xff] %vm602, %v2620
        %2653 = vst.msk [vmem:[#allocation4 + $0xb8] sm:$0xff] %vm602, %v2621
        %2654 = vst.msk [vmem:[#allocation4 + $0xc0] sm:$0xff] %vm602, %v2622
        %2655 = vst.msk [vmem:[#allocation4 + $0xc8] sm:$0xff] %vm602, %v2623
        %2656 = vst.msk [vmem:[#allocation4 + $0xd0] sm:$0xff] %vm602, %v2624
        %2657 = vst.msk [vmem:[#allocation4 + $0xd8] sm:$0xff] %vm602, %v2625
        %2658 = vst.msk [vmem:[#allocation4 + $0xe0] sm:$0xff] %vm602, %v2626
        %2659 = vst.msk [vmem:[#allocation4 + $0xe8] sm:$0xff] %vm602, %v2627
        %2660 = vst.msk [vmem:[#allocation4 + $0xf0] sm:$0xff] %vm602, %v2628
        %2661 = vst.msk [vmem:[#allocation4 + $0xf8] sm:$0xff] %vm602, %v2629
        %s2662 = scalar_lea.vmem [#allocation3], 160
        %v2663 = vld [vmem:[%s2662] sm:$0xff]
        %v2664 = vld [vmem:[%s2662 + $0x8] sm:$0xff]
        %v2665 = vld [vmem:[%s2662 + $0x10] sm:$0xff]
        %v2666 = vld [vmem:[%s2662 + $0x18] sm:$0xff]
        %v2667 = vld [vmem:[%s2662 + $0x20] sm:$0xff]
        %v2668 = vld [vmem:[%s2662 + $0x28] sm:$0xff]
        %v2669 = vld [vmem:[%s2662 + $0x30] sm:$0xff]
        %v2670 = vld [vmem:[%s2662 + $0x38] sm:$0xff]
        %v2671 = vld [vmem:[%s2662 + $0x40] sm:$0xff]
        %v2672 = vld [vmem:[%s2662 + $0x48] sm:$0xff]
        %v2673 = vld [vmem:[%s2662 + $0x50] sm:$0xff]
        %v2674 = vld [vmem:[%s2662 + $0x58] sm:$0xff]
        %v2675 = vld [vmem:[%s2662 + $0x60] sm:$0xff]
        %v2676 = vld [vmem:[%s2662 + $0x68] sm:$0xff]
        %v2677 = vld [vmem:[%s2662 + $0x70] sm:$0xff]
        %v2678 = vld [vmem:[%s2662 + $0x78] sm:$0xff]
        %v2679 = vld [vmem:[#allocation4] sm:$0xff]
        %v2680 = vld [vmem:[#allocation4 + $0x8] sm:$0xff]
        %v2681 = vld [vmem:[#allocation4 + $0x10] sm:$0xff]
        %v2682 = vld [vmem:[#allocation4 + $0x18] sm:$0xff]
        %v2683 = vld [vmem:[#allocation4 + $0x20] sm:$0xff]
        %v2684 = vld [vmem:[#allocation4 + $0x28] sm:$0xff]
        %v2685 = vld [vmem:[#allocation4 + $0x30] sm:$0xff]
        %v2686 = vld [vmem:[#allocation4 + $0x38] sm:$0xff]
        %v2687 = vld [vmem:[#allocation4 + $0x40] sm:$0xff]
        %v2688 = vld [vmem:[#allocation4 + $0x48] sm:$0xff]
        %v2689 = vld [vmem:[#allocation4 + $0x50] sm:$0xff]
        %v2690 = vld [vmem:[#allocation4 + $0x58] sm:$0xff]
        %v2691 = vld [vmem:[#allocation4 + $0x60] sm:$0xff]
        %v2692 = vld [vmem:[#allocation4 + $0x68] sm:$0xff]
        %v2693 = vld [vmem:[#allocation4 + $0x70] sm:$0xff]
        %v2694 = vld [vmem:[#allocation4 + $0x78] sm:$0xff]
        %v2695 = vld [vmem:[#allocation4 + $0x80] sm:$0xff]
        %v2696 = vld [vmem:[#allocation4 + $0x88] sm:$0xff]
        %v2697 = vld [vmem:[#allocation4 + $0x90] sm:$0xff]
        %v2698 = vld [vmem:[#allocation4 + $0x98] sm:$0xff]
        %v2699 = vld [vmem:[#allocation4 + $0xa0] sm:$0xff]
        %v2700 = vld [vmem:[#allocation4 + $0xa8] sm:$0xff]
        %v2701 = vld [vmem:[#allocation4 + $0xb0] sm:$0xff]
        %v2702 = vld [vmem:[#allocation4 + $0xb8] sm:$0xff]
        %v2703 = vld [vmem:[#allocation4 + $0xc0] sm:$0xff]
        %v2704 = vld [vmem:[#allocation4 + $0xc8] sm:$0xff]
        %v2705 = vld [vmem:[#allocation4 + $0xd0] sm:$0xff]
        %v2706 = vld [vmem:[#allocation4 + $0xd8] sm:$0xff]
        %v2707 = vld [vmem:[#allocation4 + $0xe0] sm:$0xff]
        %v2708 = vld [vmem:[#allocation4 + $0xe8] sm:$0xff]
        %v2709 = vld [vmem:[#allocation4 + $0xf0] sm:$0xff]
        %v2710 = vld [vmem:[#allocation4 + $0xf8] sm:$0xff]
        %s2711 = scalar_lea.vmem [#allocation10], 96
        %v2712 = vld [vmem:[%s2711] sm:$0xf]
        %v2713 = vld [vmem:[%s2711 + $0x4] sm:$0xf]
        %v2714 = vld [vmem:[%s2711 + $0x8] sm:$0xf]
        %v2715 = vld [vmem:[%s2711 + $0xc] sm:$0xf]
        %v2720 = vunpack.c.l.b16 %v2712
        %v2721 = vunpack.c.l.b16 %v2713
        %v2722 = vunpack.c.l.b16 %v2714
        %v2723 = vunpack.c.l.b16 %v2715
        %v2724 = vpack.c.b16 %v2721, %v2720
        %v2725 = vpack.c.b16 %v2723, %v2722
        %v2729 = vsel %vm298, %v2663, 0
        %v2732 = vsel %vm298, %v2664, 0
        %v2735 = vsel %vm298, %v2665, 0
        %v2738 = vsel %vm298, %v2666, 0
        %v2741 = vsel %vm298, %v2667, 0
        %v2744 = vsel %vm298, %v2668, 0
        %v2747 = vsel %vm298, %v2669, 0
        %v2750 = vsel %vm298, %v2670, 0
        %v2753 = vsel %vm298, %v2671, 0
        %v2756 = vsel %vm298, %v2672, 0
        %v2759 = vsel %vm298, %v2673, 0
        %v2762 = vsel %vm298, %v2674, 0
        %v2765 = vsel %vm298, %v2675, 0
        %v2768 = vsel %vm298, %v2676, 0
        %v2771 = vsel %vm298, %v2677, 0
        %v2774 = vsel %vm298, %v2678, 0
        %2776 = vmatprep.subr.bf16.mxu0 0
        %2777 = vmatpush1.bf16.msra.mxu0 %v2724
        %2778 = vmatprep.subr.bf16.mxu0 0
        %2779 = vmatpush1.bf16.msra.mxu0 %v2725
        %2780 = vmatprep.subr.bf16.mxu0 0
        %2781 = vmatpush1.bf16.msra.mxu0 0
        %2782 = vmatprep.subr.bf16.mxu0 0
        %2783 = vmatpush1.bf16.msra.mxu0 0
        %2784 = vmatprep.subr.bf16.mxu0 0
        %2785 = vmatpush1.bf16.msra.mxu0 0
        %2786 = vmatprep.subr.bf16.mxu0 0
        %2787 = vmatpush1.bf16.msra.mxu0 0
        %2788 = vmatprep.subr.bf16.mxu0 0
        %2789 = vmatpush1.bf16.msra.mxu0 0
        %2790 = vmatprep.subr.bf16.mxu0 0
        %2791 = vmatpush1.bf16.msra.mxu0 0
        %2792 = vmatprep.subr.bf16.mxu0 0
        %2793 = vmatpush1.bf16.msra.mxu0 0
        %2794 = vmatprep.subr.bf16.mxu0 0
        %2795 = vmatpush1.bf16.msra.mxu0 0
        %2796 = vmatprep.subr.bf16.mxu0 0
        %2797 = vmatpush1.bf16.msra.mxu0 0
        %2798 = vmatprep.subr.bf16.mxu0 0
        %2799 = vmatpush1.bf16.msra.mxu0 0
        %2800 = vmatprep.subr.bf16.mxu0 0
        %2801 = vmatpush1.bf16.msra.mxu0 0
        %2802 = vmatprep.subr.bf16.mxu0 0
        %2803 = vmatpush1.bf16.msra.mxu0 0
        %2804 = vmatprep.subr.bf16.mxu0 0
        %2805 = vmatpush1.bf16.msra.mxu0 0
        %2806 = vmatprep.subr.bf16.mxu0 0
        %2807 = vmatpush1.bf16.msra.mxu0 0
        %2808 = vmatprep.mubr.bf16.mxu0 0
        %2809 = vmatmul.mubr.bf16.gmra.mrb[0].mxu0 %v2729
        %v2810 = vpop.f32.mrb[0].mxu0
        %v2811 = vadd.f32 0.0, %v2810
        %v2812 = vpop.f32.mrb[0].mxu0
        %v2813 = vpop.f32.mrb[0].mxu0
        %v2814 = vadd.f32 0.0, %v2813
        %v2815 = vpop.f32.mrb[0].mxu0
        %2816 = vmatprep.mubr.bf16.mxu0 0
        %2817 = vmatmul.mubr.bf16.gmra.mrb[0].mxu0 %v2732
        %v2818 = vpop.f32.mrb[0].mxu0
        %v2819 = vadd.f32 0.0, %v2818
        %v2820 = vpop.f32.mrb[0].mxu0
        %v2821 = vpop.f32.mrb[0].mxu0
        %v2822 = vadd.f32 0.0, %v2821
        %v2823 = vpop.f32.mrb[0].mxu0
        %2824 = vmatprep.mubr.bf16.mxu0 0
        %2825 = vmatmul.mubr.bf16.gmra.mrb[0].mxu0 %v2735
        %v2826 = vpop.f32.mrb[0].mxu0
        %v2827 = vadd.f32 0.0, %v2826
        %v2828 = vpop.f32.mrb[0].mxu0
        %v2829 = vpop.f32.mrb[0].mxu0
        %v2830 = vadd.f32 0.0, %v2829
        %v2831 = vpop.f32.mrb[0].mxu0
        %2832 = vmatprep.mubr.bf16.mxu0 0
        %2833 = vmatmul.mubr.bf16.gmra.mrb[0].mxu0 %v2738
        %v2834 = vpop.f32.mrb[0].mxu0
        %v2835 = vadd.f32 0.0, %v2834
        %v2836 = vpop.f32.mrb[0].mxu0
        %v2837 = vpop.f32.mrb[0].mxu0
        %v2838 = vadd.f32 0.0, %v2837
        %v2839 = vpop.f32.mrb[0].mxu0
        %2840 = vmatprep.mubr.bf16.mxu0 0
        %2841 = vmatmul.mubr.bf16.gmra.mrb[0].mxu0 %v2741
        %v2842 = vpop.f32.mrb[0].mxu0
        %v2843 = vadd.f32 0.0, %v2842
        %v2844 = vpop.f32.mrb[0].mxu0
        %v2845 = vpop.f32.mrb[0].mxu0
        %v2846 = vadd.f32 0.0, %v2845
        %v2847 = vpop.f32.mrb[0].mxu0
        %2848 = vmatprep.mubr.bf16.mxu0 0
        %2849 = vmatmul.mubr.bf16.gmra.mrb[0].mxu0 %v2744
        %v2850 = vpop.f32.mrb[0].mxu0
        %v2851 = vadd.f32 0.0, %v2850
        %v2852 = vpop.f32.mrb[0].mxu0
        %v2853 = vpop.f32.mrb[0].mxu0
        %v2854 = vadd.f32 0.0, %v2853
        %v2855 = vpop.f32.mrb[0].mxu0
        %2856 = vmatprep.mubr.bf16.mxu0 0
        %2857 = vmatmul.mubr.bf16.gmra.mrb[0].mxu0 %v2747
        %v2858 = vpop.f32.mrb[0].mxu0
        %v2859 = vadd.f32 0.0, %v2858
        %v2860 = vpop.f32.mrb[0].mxu0
        %v2861 = vpop.f32.mrb[0].mxu0
        %v2862 = vadd.f32 0.0, %v2861
        %v2863 = vpop.f32.mrb[0].mxu0
        %2864 = vmatprep.mubr.bf16.mxu0 0
        %2865 = vmatmul.mubr.bf16.gmra.mrb[0].mxu0 %v2750
        %v2866 = vpop.f32.mrb[0].mxu0
        %v2867 = vadd.f32 0.0, %v2866
        %v2868 = vpop.f32.mrb[0].mxu0
        %v2869 = vpop.f32.mrb[0].mxu0
        %v2870 = vadd.f32 0.0, %v2869
        %v2871 = vpop.f32.mrb[0].mxu0
        %2872 = vmatprep.mubr.bf16.mxu0 0
        %2873 = vmatmul.mubr.bf16.gmra.mrb[0].mxu0 %v2753
        %v2874 = vpop.f32.mrb[0].mxu0
        %v2875 = vadd.f32 0.0, %v2874
        %v2876 = vpop.f32.mrb[0].mxu0
        %v2877 = vpop.f32.mrb[0].mxu0
        %v2878 = vadd.f32 0.0, %v2877
        %v2879 = vpop.f32.mrb[0].mxu0
        %2880 = vmatprep.mubr.bf16.mxu0 0
        %2881 = vmatmul.mubr.bf16.gmra.mrb[0].mxu0 %v2756
        %v2882 = vpop.f32.mrb[0].mxu0
        %v2883 = vadd.f32 0.0, %v2882
        %v2884 = vpop.f32.mrb[0].mxu0
        %v2885 = vpop.f32.mrb[0].mxu0
        %v2886 = vadd.f32 0.0, %v2885
        %v2887 = vpop.f32.mrb[0].mxu0
        %2888 = vmatprep.mubr.bf16.mxu0 0
        %2889 = vmatmul.mubr.bf16.gmra.mrb[0].mxu0 %v2759
        %v2890 = vpop.f32.mrb[0].mxu0
        %v2891 = vadd.f32 0.0, %v2890
        %v2892 = vpop.f32.mrb[0].mxu0
        %v2893 = vpop.f32.mrb[0].mxu0
        %v2894 = vadd.f32 0.0, %v2893
        %v2895 = vpop.f32.mrb[0].mxu0
        %2896 = vmatprep.mubr.bf16.mxu0 0
        %2897 = vmatmul.mubr.bf16.gmra.mrb[0].mxu0 %v2762
        %v2898 = vpop.f32.mrb[0].mxu0
        %v2899 = vadd.f32 0.0, %v2898
        %v2900 = vpop.f32.mrb[0].mxu0
        %v2901 = vpop.f32.mrb[0].mxu0
        %v2902 = vadd.f32 0.0, %v2901
        %v2903 = vpop.f32.mrb[0].mxu0
        %2904 = vmatprep.mubr.bf16.mxu0 0
        %2905 = vmatmul.mubr.bf16.gmra.mrb[0].mxu0 %v2765
        %v2906 = vpop.f32.mrb[0].mxu0
        %v2907 = vadd.f32 0.0, %v2906
        %v2908 = vpop.f32.mrb[0].mxu0
        %v2909 = vpop.f32.mrb[0].mxu0
        %v2910 = vadd.f32 0.0, %v2909
        %v2911 = vpop.f32.mrb[0].mxu0
        %2912 = vmatprep.mubr.bf16.mxu0 0
        %2913 = vmatmul.mubr.bf16.gmra.mrb[0].mxu0 %v2768
        %v2914 = vpop.f32.mrb[0].mxu0
        %v2915 = vadd.f32 0.0, %v2914
        %v2916 = vpop.f32.mrb[0].mxu0
        %v2917 = vpop.f32.mrb[0].mxu0
        %v2918 = vadd.f32 0.0, %v2917
        %v2919 = vpop.f32.mrb[0].mxu0
        %2920 = vmatprep.mubr.bf16.mxu0 0
        %2921 = vmatmul.mubr.bf16.gmra.mrb[0].mxu0 %v2771
        %v2922 = vpop.f32.mrb[0].mxu0
        %v2923 = vadd.f32 0.0, %v2922
        %v2924 = vpop.f32.mrb[0].mxu0
        %v2925 = vpop.f32.mrb[0].mxu0
        %v2926 = vadd.f32 0.0, %v2925
        %v2927 = vpop.f32.mrb[0].mxu0
        %2928 = vmatprep.mubr.bf16.mxu0 0
        %2929 = vmatmul.mubr.bf16.gmra.mrb[0].mxu0 %v2774
        %v2930 = vpop.f32.mrb[0].mxu0
        %v2931 = vadd.f32 0.0, %v2930
        %v2932 = vpop.f32.mrb[0].mxu0
        %v2933 = vpop.f32.mrb[0].mxu0
        %v2934 = vadd.f32 0.0, %v2933
        %v2935 = vpop.f32.mrb[0].mxu0
        %2936 = vdwg.mxu0
        %v2937 = vadd.f32 %v2679, %v2811
        %v2938 = vadd.f32 %v2680, %v2814
        %v2939 = vadd.f32 %v2681, %v2819
        %v2940 = vadd.f32 %v2682, %v2822
        %v2941 = vadd.f32 %v2683, %v2827
        %v2942 = vadd.f32 %v2684, %v2830
        %v2943 = vadd.f32 %v2685, %v2835
        %v2944 = vadd.f32 %v2686, %v2838
        %v2945 = vadd.f32 %v2687, %v2843
        %v2946 = vadd.f32 %v2688, %v2846
        %v2947 = vadd.f32 %v2689, %v2851
        %v2948 = vadd.f32 %v2690, %v2854
        %v2949 = vadd.f32 %v2691, %v2859
        %v2950 = vadd.f32 %v2692, %v2862
        %v2951 = vadd.f32 %v2693, %v2867
        %v2952 = vadd.f32 %v2694, %v2870
        %v2953 = vadd.f32 %v2695, %v2875
        %v2954 = vadd.f32 %v2696, %v2878
        %v2955 = vadd.f32 %v2697, %v2883
        %v2956 = vadd.f32 %v2698, %v2886
        %v2957 = vadd.f32 %v2699, %v2891
        %v2958 = vadd.f32 %v2700, %v2894
        %v2959 = vadd.f32 %v2701, %v2899
        %v2960 = vadd.f32 %v2702, %v2902
        %v2961 = vadd.f32 %v2703, %v2907
        %v2962 = vadd.f32 %v2704, %v2910
        %v2963 = vadd.f32 %v2705, %v2915
        %v2964 = vadd.f32 %v2706, %v2918
        %v2965 = vadd.f32 %v2707, %v2923
        %v2966 = vadd.f32 %v2708, %v2926
        %v2967 = vadd.f32 %v2709, %v2931
        %v2968 = vadd.f32 %v2710, %v2934
        %2969 = vst.msk [vmem:[#allocation4] sm:$0xff] %vm602, %v2937
        %2970 = vst.msk [vmem:[#allocation4 + $0x8] sm:$0xff] %vm602, %v2938
        %2971 = vst.msk [vmem:[#allocation4 + $0x10] sm:$0xff] %vm602, %v2939
        %2972 = vst.msk [vmem:[#allocation4 + $0x18] sm:$0xff] %vm602, %v2940
        %2973 = vst.msk [vmem:[#allocation4 + $0x20] sm:$0xff] %vm602, %v2941
        %2974 = vst.msk [vmem:[#allocation4 + $0x28] sm:$0xff] %vm602, %v2942
        %2975 = vst.msk [vmem:[#allocation4 + $0x30] sm:$0xff] %vm602, %v2943
        %2976 = vst.msk [vmem:[#allocation4 + $0x38] sm:$0xff] %vm602, %v2944
        %2977 = vst.msk [vmem:[#allocation4 + $0x40] sm:$0xff] %vm602, %v2945
        %2978 = vst.msk [vmem:[#allocation4 + $0x48] sm:$0xff] %vm602, %v2946
        %2979 = vst.msk [vmem:[#allocation4 + $0x50] sm:$0xff] %vm602, %v2947
        %2980 = vst.msk [vmem:[#allocation4 + $0x58] sm:$0xff] %vm602, %v2948
        %2981 = vst.msk [vmem:[#allocation4 + $0x60] sm:$0xff] %vm602, %v2949
        %2982 = vst.msk [vmem:[#allocation4 + $0x68] sm:$0xff] %vm602, %v2950
        %2983 = vst.msk [vmem:[#allocation4 + $0x70] sm:$0xff] %vm602, %v2951
        %2984 = vst.msk [vmem:[#allocation4 + $0x78] sm:$0xff] %vm602, %v2952
        %2985 = vst.msk [vmem:[#allocation4 + $0x80] sm:$0xff] %vm602, %v2953
        %2986 = vst.msk [vmem:[#allocation4 + $0x88] sm:$0xff] %vm602, %v2954
        %2987 = vst.msk [vmem:[#allocation4 + $0x90] sm:$0xff] %vm602, %v2955
        %2988 = vst.msk [vmem:[#allocation4 + $0x98] sm:$0xff] %vm602, %v2956
        %2989 = vst.msk [vmem:[#allocation4 + $0xa0] sm:$0xff] %vm602, %v2957
        %2990 = vst.msk [vmem:[#allocation4 + $0xa8] sm:$0xff] %vm602, %v2958
        %2991 = vst.msk [vmem:[#allocation4 + $0xb0] sm:$0xff] %vm602, %v2959
        %2992 = vst.msk [vmem:[#allocation4 + $0xb8] sm:$0xff] %vm602, %v2960
        %2993 = vst.msk [vmem:[#allocation4 + $0xc0] sm:$0xff] %vm602, %v2961
        %2994 = vst.msk [vmem:[#allocation4 + $0xc8] sm:$0xff] %vm602, %v2962
        %2995 = vst.msk [vmem:[#allocation4 + $0xd0] sm:$0xff] %vm602, %v2963
        %2996 = vst.msk [vmem:[#allocation4 + $0xd8] sm:$0xff] %vm602, %v2964
        %2997 = vst.msk [vmem:[#allocation4 + $0xe0] sm:$0xff] %vm602, %v2965
        %2998 = vst.msk [vmem:[#allocation4 + $0xe8] sm:$0xff] %vm602, %v2966
        %2999 = vst.msk [vmem:[#allocation4 + $0xf0] sm:$0xff] %vm602, %v2967
        %3000 = vst.msk [vmem:[#allocation4 + $0xf8] sm:$0xff] %vm602, %v2968
        %s3001 = scalar_lea.vmem [#allocation3], 448
        %v3002 = vld [vmem:[%s3001] sm:$0xff]
        %v3003 = vld [vmem:[%s3001 + $0x8] sm:$0xff]
        %v3004 = vld [vmem:[%s3001 + $0x10] sm:$0xff]
        %v3005 = vld [vmem:[%s3001 + $0x18] sm:$0xff]
        %v3006 = vld [vmem:[%s3001 + $0x20] sm:$0xff]
        %v3007 = vld [vmem:[%s3001 + $0x28] sm:$0xff]
        %v3008 = vld [vmem:[%s3001 + $0x30] sm:$0xff]
        %v3009 = vld [vmem:[%s3001 + $0x38] sm:$0xff]
        %v3010 = vld [vmem:[%s3001 + $0x40] sm:$0xff]
        %v3011 = vld [vmem:[%s3001 + $0x48] sm:$0xff]
        %v3012 = vld [vmem:[%s3001 + $0x50] sm:$0xff]
        %v3013 = vld [vmem:[%s3001 + $0x58] sm:$0xff]
        %v3014 = vld [vmem:[%s3001 + $0x60] sm:$0xff]
        %v3015 = vld [vmem:[%s3001 + $0x68] sm:$0xff]
        %v3016 = vld [vmem:[%s3001 + $0x70] sm:$0xff]
        %v3017 = vld [vmem:[%s3001 + $0x78] sm:$0xff]
        %v3018 = vld [vmem:[#allocation4] sm:$0xff]
        %v3019 = vld [vmem:[#allocation4 + $0x8] sm:$0xff]
        %v3020 = vld [vmem:[#allocation4 + $0x10] sm:$0xff]
        %v3021 = vld [vmem:[#allocation4 + $0x18] sm:$0xff]
        %v3022 = vld [vmem:[#allocation4 + $0x20] sm:$0xff]
        %v3023 = vld [vmem:[#allocation4 + $0x28] sm:$0xff]
        %v3024 = vld [vmem:[#allocation4 + $0x30] sm:$0xff]
        %v3025 = vld [vmem:[#allocation4 + $0x38] sm:$0xff]
        %v3026 = vld [vmem:[#allocation4 + $0x40] sm:$0xff]
        %v3027 = vld [vmem:[#allocation4 + $0x48] sm:$0xff]
        %v3028 = vld [vmem:[#allocation4 + $0x50] sm:$0xff]
        %v3029 = vld [vmem:[#allocation4 + $0x58] sm:$0xff]
        %v3030 = vld [vmem:[#allocation4 + $0x60] sm:$0xff]
        %v3031 = vld [vmem:[#allocation4 + $0x68] sm:$0xff]
        %v3032 = vld [vmem:[#allocation4 + $0x70] sm:$0xff]
        %v3033 = vld [vmem:[#allocation4 + $0x78] sm:$0xff]
        %v3034 = vld [vmem:[#allocation4 + $0x80] sm:$0xff]
        %v3035 = vld [vmem:[#allocation4 + $0x88] sm:$0xff]
        %v3036 = vld [vmem:[#allocation4 + $0x90] sm:$0xff]
        %v3037 = vld [vmem:[#allocation4 + $0x98] sm:$0xff]
        %v3038 = vld [vmem:[#allocation4 + $0xa0] sm:$0xff]
        %v3039 = vld [vmem:[#allocation4 + $0xa8] sm:$0xff]
        %v3040 = vld [vmem:[#allocation4 + $0xb0] sm:$0xff]
        %v3041 = vld [vmem:[#allocation4 + $0xb8] sm:$0xff]
        %v3042 = vld [vmem:[#allocation4 + $0xc0] sm:$0xff]
        %v3043 = vld [vmem:[#allocation4 + $0xc8] sm:$0xff]
        %v3044 = vld [vmem:[#allocation4 + $0xd0] sm:$0xff]
        %v3045 = vld [vmem:[#allocation4 + $0xd8] sm:$0xff]
        %v3046 = vld [vmem:[#allocation4 + $0xe0] sm:$0xff]
        %v3047 = vld [vmem:[#allocation4 + $0xe8] sm:$0xff]
        %v3048 = vld [vmem:[#allocation4 + $0xf0] sm:$0xff]
        %v3049 = vld [vmem:[#allocation4 + $0xf8] sm:$0xff]
        %s3050 = scalar_lea.vmem [#allocation10], 112
        %v3051 = vld [vmem:[%s3050] sm:$0xf]
        %v3052 = vld [vmem:[%s3050 + $0x4] sm:$0xf]
        %v3053 = vld [vmem:[%s3050 + $0x8] sm:$0xf]
        %v3054 = vld [vmem:[%s3050 + $0xc] sm:$0xf]
        %v3059 = vunpack.c.l.b16 %v3051
        %v3060 = vunpack.c.l.b16 %v3052
        %v3061 = vunpack.c.l.b16 %v3053
        %v3062 = vunpack.c.l.b16 %v3054
        %v3063 = vpack.c.b16 %v3060, %v3059
        %v3064 = vpack.c.b16 %v3062, %v3061
        %v3068 = vsel %vm298, %v3002, 0
        %v3071 = vsel %vm298, %v3003, 0
        %v3074 = vsel %vm298, %v3004, 0
        %v3077 = vsel %vm298, %v3005, 0
        %v3080 = vsel %vm298, %v3006, 0
        %v3083 = vsel %vm298, %v3007, 0
        %v3086 = vsel %vm298, %v3008, 0
        %v3089 = vsel %vm298, %v3009, 0
        %v3092 = vsel %vm298, %v3010, 0
        %v3095 = vsel %vm298, %v3011, 0
        %v3098 = vsel %vm298, %v3012, 0
        %v3101 = vsel %vm298, %v3013, 0
        %v3104 = vsel %vm298, %v3014, 0
        %v3107 = vsel %vm298, %v3015, 0
        %v3110 = vsel %vm298, %v3016, 0
        %v3113 = vsel %vm298, %v3017, 0
        %3115 = vmatprep.subr.bf16.mxu0 0
        %3116 = vmatpush1.bf16.msra.mxu0 %v3063
        %3117 = vmatprep.subr.bf16.mxu0 0
        %3118 = vmatpush1.bf16.msra.mxu0 %v3064
        %3119 = vmatprep.subr.bf16.mxu0 0
        %3120 = vmatpush1.bf16.msra.mxu0 0
        %3121 = vmatprep.subr.bf16.mxu0 0
        %3122 = vmatpush1.bf16.msra.mxu0 0
        %3123 = vmatprep.subr.bf16.mxu0 0
        %3124 = vmatpush1.bf16.msra.mxu0 0
        %3125 = vmatprep.subr.bf16.mxu0 0
        %3126 = vmatpush1.bf16.msra.mxu0 0
        %3127 = vmatprep.subr.bf16.mxu0 0
        %3128 = vmatpush1.bf16.msra.mxu0 0
        %3129 = vmatprep.subr.bf16.mxu0 0
        %3130 = vmatpush1.bf16.msra.mxu0 0
        %3131 = vmatprep.subr.bf16.mxu0 0
        %3132 = vmatpush1.bf16.msra.mxu0 0
        %3133 = vmatprep.subr.bf16.mxu0 0
        %3134 = vmatpush1.bf16.msra.mxu0 0
        %3135 = vmatprep.subr.bf16.mxu0 0
        %3136 = vmatpush1.bf16.msra.mxu0 0
        %3137 = vmatprep.subr.bf16.mxu0 0
        %3138 = vmatpush1.bf16.msra.mxu0 0
        %3139 = vmatprep.subr.bf16.mxu0 0
        %3140 = vmatpush1.bf16.msra.mxu0 0
        %3141 = vmatprep.subr.bf16.mxu0 0
        %3142 = vmatpush1.bf16.msra.mxu0 0
        %3143 = vmatprep.subr.bf16.mxu0 0
        %3144 = vmatpush1.bf16.msra.mxu0 0
        %3145 = vmatprep.subr.bf16.mxu0 0
        %3146 = vmatpush1.bf16.msra.mxu0 0
        %3147 = vmatprep.mubr.bf16.mxu0 0
        %3148 = vmatmul.mubr.bf16.gmra.mrb[0].mxu0 %v3068
        %v3149 = vpop.f32.mrb[0].mxu0
        %v3150 = vadd.f32 0.0, %v3149
        %v3151 = vpop.f32.mrb[0].mxu0
        %v3152 = vpop.f32.mrb[0].mxu0
        %v3153 = vadd.f32 0.0, %v3152
        %v3154 = vpop.f32.mrb[0].mxu0
        %3155 = vmatprep.mubr.bf16.mxu0 0
        %3156 = vmatmul.mubr.bf16.gmra.mrb[0].mxu0 %v3071
        %v3157 = vpop.f32.mrb[0].mxu0
        %v3158 = vadd.f32 0.0, %v3157
        %v3159 = vpop.f32.mrb[0].mxu0
        %v3160 = vpop.f32.mrb[0].mxu0
        %v3161 = vadd.f32 0.0, %v3160
        %v3162 = vpop.f32.mrb[0].mxu0
        %3163 = vmatprep.mubr.bf16.mxu0 0
        %3164 = vmatmul.mubr.bf16.gmra.mrb[0].mxu0 %v3074
        %v3165 = vpop.f32.mrb[0].mxu0
        %v3166 = vadd.f32 0.0, %v3165
        %v3167 = vpop.f32.mrb[0].mxu0
        %v3168 = vpop.f32.mrb[0].mxu0
        %v3169 = vadd.f32 0.0, %v3168
        %v3170 = vpop.f32.mrb[0].mxu0
        %3171 = vmatprep.mubr.bf16.mxu0 0
        %3172 = vmatmul.mubr.bf16.gmra.mrb[0].mxu0 %v3077
        %v3173 = vpop.f32.mrb[0].mxu0
        %v3174 = vadd.f32 0.0, %v3173
        %v3175 = vpop.f32.mrb[0].mxu0
        %v3176 = vpop.f32.mrb[0].mxu0
        %v3177 = vadd.f32 0.0, %v3176
        %v3178 = vpop.f32.mrb[0].mxu0
        %3179 = vmatprep.mubr.bf16.mxu0 0
        %3180 = vmatmul.mubr.bf16.gmra.mrb[0].mxu0 %v3080
        %v3181 = vpop.f32.mrb[0].mxu0
        %v3182 = vadd.f32 0.0, %v3181
        %v3183 = vpop.f32.mrb[0].mxu0
        %v3184 = vpop.f32.mrb[0].mxu0
        %v3185 = vadd.f32 0.0, %v3184
        %v3186 = vpop.f32.mrb[0].mxu0
        %3187 = vmatprep.mubr.bf16.mxu0 0
        %3188 = vmatmul.mubr.bf16.gmra.mrb[0].mxu0 %v3083
        %v3189 = vpop.f32.mrb[0].mxu0
        %v3190 = vadd.f32 0.0, %v3189
        %v3191 = vpop.f32.mrb[0].mxu0
        %v3192 = vpop.f32.mrb[0].mxu0
        %v3193 = vadd.f32 0.0, %v3192
        %v3194 = vpop.f32.mrb[0].mxu0
        %3195 = vmatprep.mubr.bf16.mxu0 0
        %3196 = vmatmul.mubr.bf16.gmra.mrb[0].mxu0 %v3086
        %v3197 = vpop.f32.mrb[0].mxu0
        %v3198 = vadd.f32 0.0, %v3197
        %v3199 = vpop.f32.mrb[0].mxu0
        %v3200 = vpop.f32.mrb[0].mxu0
        %v3201 = vadd.f32 0.0, %v3200
        %v3202 = vpop.f32.mrb[0].mxu0
        %3203 = vmatprep.mubr.bf16.mxu0 0
        %3204 = vmatmul.mubr.bf16.gmra.mrb[0].mxu0 %v3089
        %v3205 = vpop.f32.mrb[0].mxu0
        %v3206 = vadd.f32 0.0, %v3205
        %v3207 = vpop.f32.mrb[0].mxu0
        %v3208 = vpop.f32.mrb[0].mxu0
        %v3209 = vadd.f32 0.0, %v3208
        %v3210 = vpop.f32.mrb[0].mxu0
        %3211 = vmatprep.mubr.bf16.mxu0 0
        %3212 = vmatmul.mubr.bf16.gmra.mrb[0].mxu0 %v3092
        %v3213 = vpop.f32.mrb[0].mxu0
        %v3214 = vadd.f32 0.0, %v3213
        %v3215 = vpop.f32.mrb[0].mxu0
        %v3216 = vpop.f32.mrb[0].mxu0
        %v3217 = vadd.f32 0.0, %v3216
        %v3218 = vpop.f32.mrb[0].mxu0
        %3219 = vmatprep.mubr.bf16.mxu0 0
        %3220 = vmatmul.mubr.bf16.gmra.mrb[0].mxu0 %v3095
        %v3221 = vpop.f32.mrb[0].mxu0
        %v3222 = vadd.f32 0.0, %v3221
        %v3223 = vpop.f32.mrb[0].mxu0
        %v3224 = vpop.f32.mrb[0].mxu0
        %v3225 = vadd.f32 0.0, %v3224
        %v3226 = vpop.f32.mrb[0].mxu0
        %3227 = vmatprep.mubr.bf16.mxu0 0
        %3228 = vmatmul.mubr.bf16.gmra.mrb[0].mxu0 %v3098
        %v3229 = vpop.f32.mrb[0].mxu0
        %v3230 = vadd.f32 0.0, %v3229
        %v3231 = vpop.f32.mrb[0].mxu0
        %v3232 = vpop.f32.mrb[0].mxu0
        %v3233 = vadd.f32 0.0, %v3232
        %v3234 = vpop.f32.mrb[0].mxu0
        %3235 = vmatprep.mubr.bf16.mxu0 0
        %3236 = vmatmul.mubr.bf16.gmra.mrb[0].mxu0 %v3101
        %v3237 = vpop.f32.mrb[0].mxu0
        %v3238 = vadd.f32 0.0, %v3237
        %v3239 = vpop.f32.mrb[0].mxu0
        %v3240 = vpop.f32.mrb[0].mxu0
        %v3241 = vadd.f32 0.0, %v3240
        %v3242 = vpop.f32.mrb[0].mxu0
        %3243 = vmatprep.mubr.bf16.mxu0 0
        %3244 = vmatmul.mubr.bf16.gmra.mrb[0].mxu0 %v3104
        %v3245 = vpop.f32.mrb[0].mxu0
        %v3246 = vadd.f32 0.0, %v3245
        %v3247 = vpop.f32.mrb[0].mxu0
        %v3248 = vpop.f32.mrb[0].mxu0
        %v3249 = vadd.f32 0.0, %v3248
        %v3250 = vpop.f32.mrb[0].mxu0
        %3251 = vmatprep.mubr.bf16.mxu0 0
        %3252 = vmatmul.mubr.bf16.gmra.mrb[0].mxu0 %v3107
        %v3253 = vpop.f32.mrb[0].mxu0
        %v3254 = vadd.f32 0.0, %v3253
        %v3255 = vpop.f32.mrb[0].mxu0
        %v3256 = vpop.f32.mrb[0].mxu0
        %v3257 = vadd.f32 0.0, %v3256
        %v3258 = vpop.f32.mrb[0].mxu0
        %3259 = vmatprep.mubr.bf16.mxu0 0
        %3260 = vmatmul.mubr.bf16.gmra.mrb[0].mxu0 %v3110
        %v3261 = vpop.f32.mrb[0].mxu0
        %v3262 = vadd.f32 0.0, %v3261
        %v3263 = vpop.f32.mrb[0].mxu0
        %v3264 = vpop.f32.mrb[0].mxu0
        %v3265 = vadd.f32 0.0, %v3264
        %v3266 = vpop.f32.mrb[0].mxu0
        %3267 = vmatprep.mubr.bf16.mxu0 0
        %3268 = vmatmul.mubr.bf16.gmra.mrb[0].mxu0 %v3113
        %v3269 = vpop.f32.mrb[0].mxu0
        %v3270 = vadd.f32 0.0, %v3269
        %v3271 = vpop.f32.mrb[0].mxu0
        %v3272 = vpop.f32.mrb[0].mxu0
        %v3273 = vadd.f32 0.0, %v3272
        %v3274 = vpop.f32.mrb[0].mxu0
        %3275 = vdwg.mxu0
        %v3276 = vadd.f32 %v3018, %v3150
        %v3277 = vadd.f32 %v3019, %v3153
        %v3278 = vadd.f32 %v3020, %v3158
        %v3279 = vadd.f32 %v3021, %v3161
        %v3280 = vadd.f32 %v3022, %v3166
        %v3281 = vadd.f32 %v3023, %v3169
        %v3282 = vadd.f32 %v3024, %v3174
        %v3283 = vadd.f32 %v3025, %v3177
        %v3284 = vadd.f32 %v3026, %v3182
        %v3285 = vadd.f32 %v3027, %v3185
        %v3286 = vadd.f32 %v3028, %v3190
        %v3287 = vadd.f32 %v3029, %v3193
        %v3288 = vadd.f32 %v3030, %v3198
        %v3289 = vadd.f32 %v3031, %v3201
        %v3290 = vadd.f32 %v3032, %v3206
        %v3291 = vadd.f32 %v3033, %v3209
        %v3292 = vadd.f32 %v3034, %v3214
        %v3293 = vadd.f32 %v3035, %v3217
        %v3294 = vadd.f32 %v3036, %v3222
        %v3295 = vadd.f32 %v3037, %v3225
        %v3296 = vadd.f32 %v3038, %v3230
        %v3297 = vadd.f32 %v3039, %v3233
        %v3298 = vadd.f32 %v3040, %v3238
        %v3299 = vadd.f32 %v3041, %v3241
        %v3300 = vadd.f32 %v3042, %v3246
        %v3301 = vadd.f32 %v3043, %v3249
        %v3302 = vadd.f32 %v3044, %v3254
        %v3303 = vadd.f32 %v3045, %v3257
        %v3304 = vadd.f32 %v3046, %v3262
        %v3305 = vadd.f32 %v3047, %v3265
        %v3306 = vadd.f32 %v3048, %v3270
        %v3307 = vadd.f32 %v3049, %v3273
        %3308 = vst.msk [vmem:[#allocation4] sm:$0xff] %vm602, %v3276
        %3309 = vst.msk [vmem:[#allocation4 + $0x8] sm:$0xff] %vm602, %v3277
        %3310 = vst.msk [vmem:[#allocation4 + $0x10] sm:$0xff] %vm602, %v3278
        %3311 = vst.msk [vmem:[#allocation4 + $0x18] sm:$0xff] %vm602, %v3279
        %3312 = vst.msk [vmem:[#allocation4 + $0x20] sm:$0xff] %vm602, %v3280
        %3313 = vst.msk [vmem:[#allocation4 + $0x28] sm:$0xff] %vm602, %v3281
        %3314 = vst.msk [vmem:[#allocation4 + $0x30] sm:$0xff] %vm602, %v3282
        %3315 = vst.msk [vmem:[#allocation4 + $0x38] sm:$0xff] %vm602, %v3283
        %3316 = vst.msk [vmem:[#allocation4 + $0x40] sm:$0xff] %vm602, %v3284
        %3317 = vst.msk [vmem:[#allocation4 + $0x48] sm:$0xff] %vm602, %v3285
        %3318 = vst.msk [vmem:[#allocation4 + $0x50] sm:$0xff] %vm602, %v3286
        %3319 = vst.msk [vmem:[#allocation4 + $0x58] sm:$0xff] %vm602, %v3287
        %3320 = vst.msk [vmem:[#allocation4 + $0x60] sm:$0xff] %vm602, %v3288
        %3321 = vst.msk [vmem:[#allocation4 + $0x68] sm:$0xff] %vm602, %v3289
        %3322 = vst.msk [vmem:[#allocation4 + $0x70] sm:$0xff] %vm602, %v3290
        %3323 = vst.msk [vmem:[#allocation4 + $0x78] sm:$0xff] %vm602, %v3291
        %3324 = vst.msk [vmem:[#allocation4 + $0x80] sm:$0xff] %vm602, %v3292
        %3325 = vst.msk [vmem:[#allocation4 + $0x88] sm:$0xff] %vm602, %v3293
        %3326 = vst.msk [vmem:[#allocation4 + $0x90] sm:$0xff] %vm602, %v3294
        %3327 = vst.msk [vmem:[#allocation4 + $0x98] sm:$0xff] %vm602, %v3295
        %3328 = vst.msk [vmem:[#allocation4 + $0xa0] sm:$0xff] %vm602, %v3296
        %3329 = vst.msk [vmem:[#allocation4 + $0xa8] sm:$0xff] %vm602, %v3297
        %3330 = vst.msk [vmem:[#allocation4 + $0xb0] sm:$0xff] %vm602, %v3298
        %3331 = vst.msk [vmem:[#allocation4 + $0xb8] sm:$0xff] %vm602, %v3299
        %3332 = vst.msk [vmem:[#allocation4 + $0xc0] sm:$0xff] %vm602, %v3300
        %3333 = vst.msk [vmem:[#allocation4 + $0xc8] sm:$0xff] %vm602, %v3301
        %3334 = vst.msk [vmem:[#allocation4 + $0xd0] sm:$0xff] %vm602, %v3302
        %3335 = vst.msk [vmem:[#allocation4 + $0xd8] sm:$0xff] %vm602, %v3303
        %3336 = vst.msk [vmem:[#allocation4 + $0xe0] sm:$0xff] %vm602, %v3304
        %3337 = vst.msk [vmem:[#allocation4 + $0xe8] sm:$0xff] %vm602, %v3305
        %3338 = vst.msk [vmem:[#allocation4 + $0xf0] sm:$0xff] %vm602, %v3306
        %3339 = vst.msk [vmem:[#allocation4 + $0xf8] sm:$0xff] %vm602, %v3307
        %s3340 = scalar_lea.vmem [#allocation3], 736
        %v3341 = vld [vmem:[%s3340] sm:$0xff]
        %v3342 = vld [vmem:[%s3340 + $0x8] sm:$0xff]
        %v3343 = vld [vmem:[%s3340 + $0x10] sm:$0xff]
        %v3344 = vld [vmem:[%s3340 + $0x18] sm:$0xff]
        %v3345 = vld [vmem:[%s3340 + $0x20] sm:$0xff]
        %v3346 = vld [vmem:[%s3340 + $0x28] sm:$0xff]
        %v3347 = vld [vmem:[%s3340 + $0x30] sm:$0xff]
        %v3348 = vld [vmem:[%s3340 + $0x38] sm:$0xff]
        %v3349 = vld [vmem:[%s3340 + $0x40] sm:$0xff]
        %v3350 = vld [vmem:[%s3340 + $0x48] sm:$0xff]
        %v3351 = vld [vmem:[%s3340 + $0x50] sm:$0xff]
        %v3352 = vld [vmem:[%s3340 + $0x58] sm:$0xff]
        %v3353 = vld [vmem:[%s3340 + $0x60] sm:$0xff]
        %v3354 = vld [vmem:[%s3340 + $0x68] sm:$0xff]
        %v3355 = vld [vmem:[%s3340 + $0x70] sm:$0xff]
        %v3356 = vld [vmem:[%s3340 + $0x78] sm:$0xff]
        %v3357 = vld [vmem:[#allocation4] sm:$0xff]
        %v3358 = vld [vmem:[#allocation4 + $0x8] sm:$0xff]
        %v3359 = vld [vmem:[#allocation4 + $0x10] sm:$0xff]
        %v3360 = vld [vmem:[#allocation4 + $0x18] sm:$0xff]
        %v3361 = vld [vmem:[#allocation4 + $0x20] sm:$0xff]
        %v3362 = vld [vmem:[#allocation4 + $0x28] sm:$0xff]
        %v3363 = vld [vmem:[#allocation4 + $0x30] sm:$0xff]
        %v3364 = vld [vmem:[#allocation4 + $0x38] sm:$0xff]
        %v3365 = vld [vmem:[#allocation4 + $0x40] sm:$0xff]
        %v3366 = vld [vmem:[#allocation4 + $0x48] sm:$0xff]
        %v3367 = vld [vmem:[#allocation4 + $0x50] sm:$0xff]
        %v3368 = vld [vmem:[#allocation4 + $0x58] sm:$0xff]
        %v3369 = vld [vmem:[#allocation4 + $0x60] sm:$0xff]
        %v3370 = vld [vmem:[#allocation4 + $0x68] sm:$0xff]
        %v3371 = vld [vmem:[#allocation4 + $0x70] sm:$0xff]
        %v3372 = vld [vmem:[#allocation4 + $0x78] sm:$0xff]
        %v3373 = vld [vmem:[#allocation4 + $0x80] sm:$0xff]
        %v3374 = vld [vmem:[#allocation4 + $0x88] sm:$0xff]
        %v3375 = vld [vmem:[#allocation4 + $0x90] sm:$0xff]
        %v3376 = vld [vmem:[#allocation4 + $0x98] sm:$0xff]
        %v3377 = vld [vmem:[#allocation4 + $0xa0] sm:$0xff]
        %v3378 = vld [vmem:[#allocation4 + $0xa8] sm:$0xff]
        %v3379 = vld [vmem:[#allocation4 + $0xb0] sm:$0xff]
        %v3380 = vld [vmem:[#allocation4 + $0xb8] sm:$0xff]
        %v3381 = vld [vmem:[#allocation4 + $0xc0] sm:$0xff]
        %v3382 = vld [vmem:[#allocation4 + $0xc8] sm:$0xff]
        %v3383 = vld [vmem:[#allocation4 + $0xd0] sm:$0xff]
        %v3384 = vld [vmem:[#allocation4 + $0xd8] sm:$0xff]
        %v3385 = vld [vmem:[#allocation4 + $0xe0] sm:$0xff]
        %v3386 = vld [vmem:[#allocation4 + $0xe8] sm:$0xff]
        %v3387 = vld [vmem:[#allocation4 + $0xf0] sm:$0xff]
        %v3388 = vld [vmem:[#allocation4 + $0xf8] sm:$0xff]
        %s3389 = scalar_lea.vmem [#allocation10], 128
        %v3390 = vld [vmem:[%s3389] sm:$0xf]
        %v3391 = vld [vmem:[%s3389 + $0x4] sm:$0xf]
        %v3392 = vld [vmem:[%s3389 + $0x8] sm:$0xf]
        %v3393 = vld [vmem:[%s3389 + $0xc] sm:$0xf]
        %v3398 = vunpack.c.l.b16 %v3390
        %v3399 = vunpack.c.l.b16 %v3391
        %v3400 = vunpack.c.l.b16 %v3392
        %v3401 = vunpack.c.l.b16 %v3393
        %v3402 = vpack.c.b16 %v3399, %v3398
        %v3403 = vpack.c.b16 %v3401, %v3400
        %v3407 = vsel %vm298, %v3341, 0
        %v3410 = vsel %vm298, %v3342, 0
        %v3413 = vsel %vm298, %v3343, 0
        %v3416 = vsel %vm298, %v3344, 0
        %v3419 = vsel %vm298, %v3345, 0
        %v3422 = vsel %vm298, %v3346, 0
        %v3425 = vsel %vm298, %v3347, 0
        %v3428 = vsel %vm298, %v3348, 0
        %v3431 = vsel %vm298, %v3349, 0
        %v3434 = vsel %vm298, %v3350, 0
        %v3437 = vsel %vm298, %v3351, 0
        %v3440 = vsel %vm298, %v3352, 0
        %v3443 = vsel %vm298, %v3353, 0
        %v3446 = vsel %vm298, %v3354, 0
        %v3449 = vsel %vm298, %v3355, 0
        %v3452 = vsel %vm298, %v3356, 0
        %3454 = vmatprep.subr.bf16.mxu0 0
        %3455 = vmatpush1.bf16.msra.mxu0 %v3402
        %3456 = vmatprep.subr.bf16.mxu0 0
        %3457 = vmatpush1.bf16.msra.mxu0 %v3403
        %3458 = vmatprep.subr.bf16.mxu0 0
        %3459 = vmatpush1.bf16.msra.mxu0 0
        %3460 = vmatprep.subr.bf16.mxu0 0
        %3461 = vmatpush1.bf16.msra.mxu0 0
        %3462 = vmatprep.subr.bf16.mxu0 0
        %3463 = vmatpush1.bf16.msra.mxu0 0
        %3464 = vmatprep.subr.bf16.mxu0 0
        %3465 = vmatpush1.bf16.msra.mxu0 0
        %3466 = vmatprep.subr.bf16.mxu0 0
        %3467 = vmatpush1.bf16.msra.mxu0 0
        %3468 = vmatprep.subr.bf16.mxu0 0
        %3469 = vmatpush1.bf16.msra.mxu0 0
        %3470 = vmatprep.subr.bf16.mxu0 0
        %3471 = vmatpush1.bf16.msra.mxu0 0
        %3472 = vmatprep.subr.bf16.mxu0 0
        %3473 = vmatpush1.bf16.msra.mxu0 0
        %3474 = vmatprep.subr.bf16.mxu0 0
        %3475 = vmatpush1.bf16.msra.mxu0 0
        %3476 = vmatprep.subr.bf16.mxu0 0
        %3477 = vmatpush1.bf16.msra.mxu0 0
        %3478 = vmatprep.subr.bf16.mxu0 0
        %3479 = vmatpush1.bf16.msra.mxu0 0
        %3480 = vmatprep.subr.bf16.mxu0 0
        %3481 = vmatpush1.bf16.msra.mxu0 0
        %3482 = vmatprep.subr.bf16.mxu0 0
        %3483 = vmatpush1.bf16.msra.mxu0 0
        %3484 = vmatprep.subr.bf16.mxu0 0
        %3485 = vmatpush1.bf16.msra.mxu0 0
        %3486 = vmatprep.mubr.bf16.mxu0 0
        %3487 = vmatmul.mubr.bf16.gmra.mrb[0].mxu0 %v3407
        %v3488 = vpop.f32.mrb[0].mxu0
        %v3489 = vadd.f32 0.0, %v3488
        %v3490 = vpop.f32.mrb[0].mxu0
        %v3491 = vpop.f32.mrb[0].mxu0
        %v3492 = vadd.f32 0.0, %v3491
        %v3493 = vpop.f32.mrb[0].mxu0
        %3494 = vmatprep.mubr.bf16.mxu0 0
        %3495 = vmatmul.mubr.bf16.gmra.mrb[0].mxu0 %v3410
        %v3496 = vpop.f32.mrb[0].mxu0
        %v3497 = vadd.f32 0.0, %v3496
        %v3498 = vpop.f32.mrb[0].mxu0
        %v3499 = vpop.f32.mrb[0].mxu0
        %v3500 = vadd.f32 0.0, %v3499
        %v3501 = vpop.f32.mrb[0].mxu0
        %3502 = vmatprep.mubr.bf16.mxu0 0
        %3503 = vmatmul.mubr.bf16.gmra.mrb[0].mxu0 %v3413
        %v3504 = vpop.f32.mrb[0].mxu0
        %v3505 = vadd.f32 0.0, %v3504
        %v3506 = vpop.f32.mrb[0].mxu0
        %v3507 = vpop.f32.mrb[0].mxu0
        %v3508 = vadd.f32 0.0, %v3507
        %v3509 = vpop.f32.mrb[0].mxu0
        %3510 = vmatprep.mubr.bf16.mxu0 0
        %3511 = vmatmul.mubr.bf16.gmra.mrb[0].mxu0 %v3416
        %v3512 = vpop.f32.mrb[0].mxu0
        %v3513 = vadd.f32 0.0, %v3512
        %v3514 = vpop.f32.mrb[0].mxu0
        %v3515 = vpop.f32.mrb[0].mxu0
        %v3516 = vadd.f32 0.0, %v3515
        %v3517 = vpop.f32.mrb[0].mxu0
        %3518 = vmatprep.mubr.bf16.mxu0 0
        %3519 = vmatmul.mubr.bf16.gmra.mrb[0].mxu0 %v3419
        %v3520 = vpop.f32.mrb[0].mxu0
        %v3521 = vadd.f32 0.0, %v3520
        %v3522 = vpop.f32.mrb[0].mxu0
        %v3523 = vpop.f32.mrb[0].mxu0
        %v3524 = vadd.f32 0.0, %v3523
        %v3525 = vpop.f32.mrb[0].mxu0
        %3526 = vmatprep.mubr.bf16.mxu0 0
        %3527 = vmatmul.mubr.bf16.gmra.mrb[0].mxu0 %v3422
        %v3528 = vpop.f32.mrb[0].mxu0
        %v3529 = vadd.f32 0.0, %v3528
        %v3530 = vpop.f32.mrb[0].mxu0
        %v3531 = vpop.f32.mrb[0].mxu0
        %v3532 = vadd.f32 0.0, %v3531
        %v3533 = vpop.f32.mrb[0].mxu0
        %3534 = vmatprep.mubr.bf16.mxu0 0
        %3535 = vmatmul.mubr.bf16.gmra.mrb[0].mxu0 %v3425
        %v3536 = vpop.f32.mrb[0].mxu0
        %v3537 = vadd.f32 0.0, %v3536
        %v3538 = vpop.f32.mrb[0].mxu0
        %v3539 = vpop.f32.mrb[0].mxu0
        %v3540 = vadd.f32 0.0, %v3539
        %v3541 = vpop.f32.mrb[0].mxu0
        %3542 = vmatprep.mubr.bf16.mxu0 0
        %3543 = vmatmul.mubr.bf16.gmra.mrb[0].mxu0 %v3428
        %v3544 = vpop.f32.mrb[0].mxu0
        %v3545 = vadd.f32 0.0, %v3544
        %v3546 = vpop.f32.mrb[0].mxu0
        %v3547 = vpop.f32.mrb[0].mxu0
        %v3548 = vadd.f32 0.0, %v3547
        %v3549 = vpop.f32.mrb[0].mxu0
        %3550 = vmatprep.mubr.bf16.mxu0 0
        %3551 = vmatmul.mubr.bf16.gmra.mrb[0].mxu0 %v3431
        %v3552 = vpop.f32.mrb[0].mxu0
        %v3553 = vadd.f32 0.0, %v3552
        %v3554 = vpop.f32.mrb[0].mxu0
        %v3555 = vpop.f32.mrb[0].mxu0
        %v3556 = vadd.f32 0.0, %v3555
        %v3557 = vpop.f32.mrb[0].mxu0
        %3558 = vmatprep.mubr.bf16.mxu0 0
        %3559 = vmatmul.mubr.bf16.gmra.mrb[0].mxu0 %v3434
        %v3560 = vpop.f32.mrb[0].mxu0
        %v3561 = vadd.f32 0.0, %v3560
        %v3562 = vpop.f32.mrb[0].mxu0
        %v3563 = vpop.f32.mrb[0].mxu0
        %v3564 = vadd.f32 0.0, %v3563
        %v3565 = vpop.f32.mrb[0].mxu0
        %3566 = vmatprep.mubr.bf16.mxu0 0
        %3567 = vmatmul.mubr.bf16.gmra.mrb[0].mxu0 %v3437
        %v3568 = vpop.f32.mrb[0].mxu0
        %v3569 = vadd.f32 0.0, %v3568
        %v3570 = vpop.f32.mrb[0].mxu0
        %v3571 = vpop.f32.mrb[0].mxu0
        %v3572 = vadd.f32 0.0, %v3571
        %v3573 = vpop.f32.mrb[0].mxu0
        %3574 = vmatprep.mubr.bf16.mxu0 0
        %3575 = vmatmul.mubr.bf16.gmra.mrb[0].mxu0 %v3440
        %v3576 = vpop.f32.mrb[0].mxu0
        %v3577 = vadd.f32 0.0, %v3576
        %v3578 = vpop.f32.mrb[0].mxu0
        %v3579 = vpop.f32.mrb[0].mxu0
        %v3580 = vadd.f32 0.0, %v3579
        %v3581 = vpop.f32.mrb[0].mxu0
        %3582 = vmatprep.mubr.bf16.mxu0 0
        %3583 = vmatmul.mubr.bf16.gmra.mrb[0].mxu0 %v3443
        %v3584 = vpop.f32.mrb[0].mxu0
        %v3585 = vadd.f32 0.0, %v3584
        %v3586 = vpop.f32.mrb[0].mxu0
        %v3587 = vpop.f32.mrb[0].mxu0
        %v3588 = vadd.f32 0.0, %v3587
        %v3589 = vpop.f32.mrb[0].mxu0
        %3590 = vmatprep.mubr.bf16.mxu0 0
        %3591 = vmatmul.mubr.bf16.gmra.mrb[0].mxu0 %v3446
        %v3592 = vpop.f32.mrb[0].mxu0
        %v3593 = vadd.f32 0.0, %v3592
        %v3594 = vpop.f32.mrb[0].mxu0
        %v3595 = vpop.f32.mrb[0].mxu0
        %v3596 = vadd.f32 0.0, %v3595
        %v3597 = vpop.f32.mrb[0].mxu0
        %3598 = vmatprep.mubr.bf16.mxu0 0
        %3599 = vmatmul.mubr.bf16.gmra.mrb[0].mxu0 %v3449
        %v3600 = vpop.f32.mrb[0].mxu0
        %v3601 = vadd.f32 0.0, %v3600
        %v3602 = vpop.f32.mrb[0].mxu0
        %v3603 = vpop.f32.mrb[0].mxu0
        %v3604 = vadd.f32 0.0, %v3603
        %v3605 = vpop.f32.mrb[0].mxu0
        %3606 = vmatprep.mubr.bf16.mxu0 0
        %3607 = vmatmul.mubr.bf16.gmra.mrb[0].mxu0 %v3452
        %v3608 = vpop.f32.mrb[0].mxu0
        %v3609 = vadd.f32 0.0, %v3608
        %v3610 = vpop.f32.mrb[0].mxu0
        %v3611 = vpop.f32.mrb[0].mxu0
        %v3612 = vadd.f32 0.0, %v3611
        %v3613 = vpop.f32.mrb[0].mxu0
        %3614 = vdwg.mxu0
        %v3615 = vadd.f32 %v3357, %v3489
        %v3616 = vadd.f32 %v3358, %v3492
        %v3617 = vadd.f32 %v3359, %v3497
        %v3618 = vadd.f32 %v3360, %v3500
        %v3619 = vadd.f32 %v3361, %v3505
        %v3620 = vadd.f32 %v3362, %v3508
        %v3621 = vadd.f32 %v3363, %v3513
        %v3622 = vadd.f32 %v3364, %v3516
        %v3623 = vadd.f32 %v3365, %v3521
        %v3624 = vadd.f32 %v3366, %v3524
        %v3625 = vadd.f32 %v3367, %v3529
        %v3626 = vadd.f32 %v3368, %v3532
        %v3627 = vadd.f32 %v3369, %v3537
        %v3628 = vadd.f32 %v3370, %v3540
        %v3629 = vadd.f32 %v3371, %v3545
        %v3630 = vadd.f32 %v3372, %v3548
        %v3631 = vadd.f32 %v3373, %v3553
        %v3632 = vadd.f32 %v3374, %v3556
        %v3633 = vadd.f32 %v3375, %v3561
        %v3634 = vadd.f32 %v3376, %v3564
        %v3635 = vadd.f32 %v3377, %v3569
        %v3636 = vadd.f32 %v3378, %v3572
        %v3637 = vadd.f32 %v3379, %v3577
        %v3638 = vadd.f32 %v3380, %v3580
        %v3639 = vadd.f32 %v3381, %v3585
        %v3640 = vadd.f32 %v3382, %v3588
        %v3641 = vadd.f32 %v3383, %v3593
        %v3642 = vadd.f32 %v3384, %v3596
        %v3643 = vadd.f32 %v3385, %v3601
        %v3644 = vadd.f32 %v3386, %v3604
        %v3645 = vadd.f32 %v3387, %v3609
        %v3646 = vadd.f32 %v3388, %v3612
        %3647 = vst.msk [vmem:[#allocation4] sm:$0xff] %vm602, %v3615
        %3648 = vst.msk [vmem:[#allocation4 + $0x8] sm:$0xff] %vm602, %v3616
        %3649 = vst.msk [vmem:[#allocation4 + $0x10] sm:$0xff] %vm602, %v3617
        %3650 = vst.msk [vmem:[#allocation4 + $0x18] sm:$0xff] %vm602, %v3618
        %3651 = vst.msk [vmem:[#allocation4 + $0x20] sm:$0xff] %vm602, %v3619
        %3652 = vst.msk [vmem:[#allocation4 + $0x28] sm:$0xff] %vm602, %v3620
        %3653 = vst.msk [vmem:[#allocation4 + $0x30] sm:$0xff] %vm602, %v3621
        %3654 = vst.msk [vmem:[#allocation4 + $0x38] sm:$0xff] %vm602, %v3622
        %3655 = vst.msk [vmem:[#allocation4 + $0x40] sm:$0xff] %vm602, %v3623
        %3656 = vst.msk [vmem:[#allocation4 + $0x48] sm:$0xff] %vm602, %v3624
        %3657 = vst.msk [vmem:[#allocation4 + $0x50] sm:$0xff] %vm602, %v3625
        %3658 = vst.msk [vmem:[#allocation4 + $0x58] sm:$0xff] %vm602, %v3626
        %3659 = vst.msk [vmem:[#allocation4 + $0x60] sm:$0xff] %vm602, %v3627
        %3660 = vst.msk [vmem:[#allocation4 + $0x68] sm:$0xff] %vm602, %v3628
        %3661 = vst.msk [vmem:[#allocation4 + $0x70] sm:$0xff] %vm602, %v3629
        %3662 = vst.msk [vmem:[#allocation4 + $0x78] sm:$0xff] %vm602, %v3630
        %3663 = vst.msk [vmem:[#allocation4 + $0x80] sm:$0xff] %vm602, %v3631
        %3664 = vst.msk [vmem:[#allocation4 + $0x88] sm:$0xff] %vm602, %v3632
        %3665 = vst.msk [vmem:[#allocation4 + $0x90] sm:$0xff] %vm602, %v3633
        %3666 = vst.msk [vmem:[#allocation4 + $0x98] sm:$0xff] %vm602, %v3634
        %3667 = vst.msk [vmem:[#allocation4 + $0xa0] sm:$0xff] %vm602, %v3635
        %3668 = vst.msk [vmem:[#allocation4 + $0xa8] sm:$0xff] %vm602, %v3636
        %3669 = vst.msk [vmem:[#allocation4 + $0xb0] sm:$0xff] %vm602, %v3637
        %3670 = vst.msk [vmem:[#allocation4 + $0xb8] sm:$0xff] %vm602, %v3638
        %3671 = vst.msk [vmem:[#allocation4 + $0xc0] sm:$0xff] %vm602, %v3639
        %3672 = vst.msk [vmem:[#allocation4 + $0xc8] sm:$0xff] %vm602, %v3640
        %3673 = vst.msk [vmem:[#allocation4 + $0xd0] sm:$0xff] %vm602, %v3641
        %3674 = vst.msk [vmem:[#allocation4 + $0xd8] sm:$0xff] %vm602, %v3642
        %3675 = vst.msk [vmem:[#allocation4 + $0xe0] sm:$0xff] %vm602, %v3643
        %3676 = vst.msk [vmem:[#allocation4 + $0xe8] sm:$0xff] %vm602, %v3644
        %3677 = vst.msk [vmem:[#allocation4 + $0xf0] sm:$0xff] %vm602, %v3645
        %3678 = vst.msk [vmem:[#allocation4 + $0xf8] sm:$0xff] %vm602, %v3646
        %v3679 = vld [vmem:[#allocation4] sm:$0xff]
        %v3680 = vld [vmem:[#allocation4 + $0x8] sm:$0xff]
        %v3681 = vld [vmem:[#allocation4 + $0x10] sm:$0xff]
        %v3682 = vld [vmem:[#allocation4 + $0x18] sm:$0xff]
        %v3683 = vld [vmem:[#allocation4 + $0x20] sm:$0xff]
        %v3684 = vld [vmem:[#allocation4 + $0x28] sm:$0xff]
        %v3685 = vld [vmem:[#allocation4 + $0x30] sm:$0xff]
        %v3686 = vld [vmem:[#allocation4 + $0x38] sm:$0xff]
        %v3687 = vld [vmem:[#allocation4 + $0x40] sm:$0xff]
        %v3688 = vld [vmem:[#allocation4 + $0x48] sm:$0xff]
        %v3689 = vld [vmem:[#allocation4 + $0x50] sm:$0xff]
        %v3690 = vld [vmem:[#allocation4 + $0x58] sm:$0xff]
        %v3691 = vld [vmem:[#allocation4 + $0x60] sm:$0xff]
        %v3692 = vld [vmem:[#allocation4 + $0x68] sm:$0xff]
        %v3693 = vld [vmem:[#allocation4 + $0x70] sm:$0xff]
        %v3694 = vld [vmem:[#allocation4 + $0x78] sm:$0xff]
        %v3695 = vld [vmem:[#allocation4 + $0x80] sm:$0xff]
        %v3696 = vld [vmem:[#allocation4 + $0x88] sm:$0xff]
        %v3697 = vld [vmem:[#allocation4 + $0x90] sm:$0xff]
        %v3698 = vld [vmem:[#allocation4 + $0x98] sm:$0xff]
        %v3699 = vld [vmem:[#allocation4 + $0xa0] sm:$0xff]
        %v3700 = vld [vmem:[#allocation4 + $0xa8] sm:$0xff]
        %v3701 = vld [vmem:[#allocation4 + $0xb0] sm:$0xff]
        %v3702 = vld [vmem:[#allocation4 + $0xb8] sm:$0xff]
        %v3703 = vld [vmem:[#allocation4 + $0xc0] sm:$0xff]
        %v3704 = vld [vmem:[#allocation4 + $0xc8] sm:$0xff]
        %v3705 = vld [vmem:[#allocation4 + $0xd0] sm:$0xff]
        %v3706 = vld [vmem:[#allocation4 + $0xd8] sm:$0xff]
        %v3707 = vld [vmem:[#allocation4 + $0xe0] sm:$0xff]
        %v3708 = vld [vmem:[#allocation4 + $0xe8] sm:$0xff]
        %v3709 = vld [vmem:[#allocation4 + $0xf0] sm:$0xff]
        %v3710 = vld [vmem:[#allocation4 + $0xf8] sm:$0xff]
        %v3711 = vld [vmem:[#allocation11] sm:$0x1]
        %v3713 = vlaneseq
        %v3714 = vshrl.u32 %v3713, 7
        %v3715 = vsub.s32 0, %v3714
        %v3716 = vrot.slane %v3711, %v3715
        %v3718 = vmul.f32 %v3679, %v3716
        %v3719 = vmul.f32 %v3680, %v3716
        %v3720 = vmul.f32 %v3681, %v3716
        %v3721 = vmul.f32 %v3682, %v3716
        %v3722 = vmul.f32 %v3683, %v3716
        %v3723 = vmul.f32 %v3684, %v3716
        %v3724 = vmul.f32 %v3685, %v3716
        %v3725 = vmul.f32 %v3686, %v3716
        %v3726 = vmul.f32 %v3687, %v3716
        %v3727 = vmul.f32 %v3688, %v3716
        %v3728 = vmul.f32 %v3689, %v3716
        %v3729 = vmul.f32 %v3690, %v3716
        %v3730 = vmul.f32 %v3691, %v3716
        %v3731 = vmul.f32 %v3692, %v3716
        %v3732 = vmul.f32 %v3693, %v3716
        %v3733 = vmul.f32 %v3694, %v3716
        %v3734 = vmul.f32 %v3695, %v3716
        %v3735 = vmul.f32 %v3696, %v3716
        %v3736 = vmul.f32 %v3697, %v3716
        %v3737 = vmul.f32 %v3698, %v3716
        %v3738 = vmul.f32 %v3699, %v3716
        %v3739 = vmul.f32 %v3700, %v3716
        %v3740 = vmul.f32 %v3701, %v3716
        %v3741 = vmul.f32 %v3702, %v3716
        %v3742 = vmul.f32 %v3703, %v3716
        %v3743 = vmul.f32 %v3704, %v3716
        %v3744 = vmul.f32 %v3705, %v3716
        %v3745 = vmul.f32 %v3706, %v3716
        %v3746 = vmul.f32 %v3707, %v3716
        %v3747 = vmul.f32 %v3708, %v3716
        %v3748 = vmul.f32 %v3709, %v3716
        %v3749 = vmul.f32 %v3710, %v3716
        %v3750 = vld [vmem:[#allocation13] sm:$0x1]
        %v3752 = vlaneseq
        %v3753 = vshrl.u32 %v3752, 7
        %v3754 = vsub.s32 0, %v3753
        %v3755 = vrot.slane %v3750, %v3754
        %v3757 = vadd.f32 %v3718, %v3755
        %v3758 = vadd.f32 %v3719, %v3755
        %v3759 = vadd.f32 %v3720, %v3755
        %v3760 = vadd.f32 %v3721, %v3755
        %v3761 = vadd.f32 %v3722, %v3755
        %v3762 = vadd.f32 %v3723, %v3755
        %v3763 = vadd.f32 %v3724, %v3755
        %v3764 = vadd.f32 %v3725, %v3755
        %v3765 = vadd.f32 %v3726, %v3755
        %v3766 = vadd.f32 %v3727, %v3755
        %v3767 = vadd.f32 %v3728, %v3755
        %v3768 = vadd.f32 %v3729, %v3755
        %v3769 = vadd.f32 %v3730, %v3755
        %v3770 = vadd.f32 %v3731, %v3755
        %v3771 = vadd.f32 %v3732, %v3755
        %v3772 = vadd.f32 %v3733, %v3755
        %v3773 = vadd.f32 %v3734, %v3755
        %v3774 = vadd.f32 %v3735, %v3755
        %v3775 = vadd.f32 %v3736, %v3755
        %v3776 = vadd.f32 %v3737, %v3755
        %v3777 = vadd.f32 %v3738, %v3755
        %v3778 = vadd.f32 %v3739, %v3755
        %v3779 = vadd.f32 %v3740, %v3755
        %v3780 = vadd.f32 %v3741, %v3755
        %v3781 = vadd.f32 %v3742, %v3755
        %v3782 = vadd.f32 %v3743, %v3755
        %v3783 = vadd.f32 %v3744, %v3755
        %v3784 = vadd.f32 %v3745, %v3755
        %v3785 = vadd.f32 %v3746, %v3755
        %v3786 = vadd.f32 %v3747, %v3755
        %v3787 = vadd.f32 %v3748, %v3755
        %v3788 = vadd.f32 %v3749, %v3755
        %v3789 = vmax.f32 %v3757, 0.0
        %v3790 = vmax.f32 %v3758, 0.0
        %v3791 = vmax.f32 %v3759, 0.0
        %v3792 = vmax.f32 %v3760, 0.0
        %v3793 = vmax.f32 %v3761, 0.0
        %v3794 = vmax.f32 %v3762, 0.0
        %v3795 = vmax.f32 %v3763, 0.0
        %v3796 = vmax.f32 %v3764, 0.0
        %v3797 = vmax.f32 %v3765, 0.0
        %v3798 = vmax.f32 %v3766, 0.0
        %v3799 = vmax.f32 %v3767, 0.0
        %v3800 = vmax.f32 %v3768, 0.0
        %v3801 = vmax.f32 %v3769, 0.0
        %v3802 = vmax.f32 %v3770, 0.0
        %v3803 = vmax.f32 %v3771, 0.0
        %v3804 = vmax.f32 %v3772, 0.0
        %v3805 = vmax.f32 %v3773, 0.0
        %v3806 = vmax.f32 %v3774, 0.0
        %v3807 = vmax.f32 %v3775, 0.0
        %v3808 = vmax.f32 %v3776, 0.0
        %v3809 = vmax.f32 %v3777, 0.0
        %v3810 = vmax.f32 %v3778, 0.0
        %v3811 = vmax.f32 %v3779, 0.0
        %v3812 = vmax.f32 %v3780, 0.0
        %v3813 = vmax.f32 %v3781, 0.0
        %v3814 = vmax.f32 %v3782, 0.0
        %v3815 = vmax.f32 %v3783, 0.0
        %v3816 = vmax.f32 %v3784, 0.0
        %v3817 = vmax.f32 %v3785, 0.0
        %v3818 = vmax.f32 %v3786, 0.0
        %v3819 = vmax.f32 %v3787, 0.0
        %v3820 = vmax.f32 %v3788, 0.0
        %v3821 = vpack.c.bf16 %v3790, %v3789
        %v3822 = vpack.c.bf16 %v3792, %v3791
        %v3823 = vpack.c.bf16 %v3794, %v3793
        %v3824 = vpack.c.bf16 %v3796, %v3795
        %v3825 = vpack.c.bf16 %v3798, %v3797
        %v3826 = vpack.c.bf16 %v3800, %v3799
        %v3827 = vpack.c.bf16 %v3802, %v3801
        %v3828 = vpack.c.bf16 %v3804, %v3803
        %v3829 = vpack.c.bf16 %v3806, %v3805
        %v3830 = vpack.c.bf16 %v3808, %v3807
        %v3831 = vpack.c.bf16 %v3810, %v3809
        %v3832 = vpack.c.bf16 %v3812, %v3811
        %v3833 = vpack.c.bf16 %v3814, %v3813
        %v3834 = vpack.c.bf16 %v3816, %v3815
        %v3835 = vpack.c.bf16 %v3818, %v3817
        %v3836 = vpack.c.bf16 %v3820, %v3819
        %v3853 = vunpack.c.l.b16 %v3821
        %v3854 = vunpack.c.h.b16 %v3821
        %v3855 = vunpack.c.l.b16 %v3822
        %v3856 = vunpack.c.h.b16 %v3822
        %v3857 = vunpack.c.l.b16 %v3823
        %v3858 = vunpack.c.h.b16 %v3823
        %v3859 = vunpack.c.l.b16 %v3824
        %v3860 = vunpack.c.h.b16 %v3824
        %v3861 = vunpack.c.l.b16 %v3825
        %v3862 = vunpack.c.h.b16 %v3825
        %v3863 = vunpack.c.l.b16 %v3826
        %v3864 = vunpack.c.h.b16 %v3826
        %v3865 = vunpack.c.l.b16 %v3827
        %v3866 = vunpack.c.h.b16 %v3827
        %v3867 = vunpack.c.l.b16 %v3828
        %v3868 = vunpack.c.h.b16 %v3828
        %v3869 = vunpack.c.l.b16 %v3829
        %v3870 = vunpack.c.h.b16 %v3829
        %v3871 = vunpack.c.l.b16 %v3830
        %v3872 = vunpack.c.h.b16 %v3830
        %v3873 = vunpack.c.l.b16 %v3831
        %v3874 = vunpack.c.h.b16 %v3831
        %v3875 = vunpack.c.l.b16 %v3832
        %v3876 = vunpack.c.h.b16 %v3832
        %v3877 = vunpack.c.l.b16 %v3833
        %v3878 = vunpack.c.h.b16 %v3833
        %v3879 = vunpack.c.l.b16 %v3834
        %v3880 = vunpack.c.h.b16 %v3834
        %v3881 = vunpack.c.l.b16 %v3835
        %v3882 = vunpack.c.h.b16 %v3835
        %v3883 = vunpack.c.l.b16 %v3836
        %v3884 = vunpack.c.h.b16 %v3836
        %v3885 = vpack.c.b16 %v3853, %v3853
        %v3886 = vpack.c.b16 %v3854, %v3854
        %v3887 = vpack.c.b16 %v3855, %v3855
        %v3888 = vpack.c.b16 %v3856, %v3856
        %v3889 = vpack.c.b16 %v3857, %v3857
        %v3890 = vpack.c.b16 %v3858, %v3858
        %v3891 = vpack.c.b16 %v3859, %v3859
        %v3892 = vpack.c.b16 %v3860, %v3860
        %v3893 = vpack.c.b16 %v3861, %v3861
        %v3894 = vpack.c.b16 %v3862, %v3862
        %v3895 = vpack.c.b16 %v3863, %v3863
        %v3896 = vpack.c.b16 %v3864, %v3864
        %v3897 = vpack.c.b16 %v3865, %v3865
        %v3898 = vpack.c.b16 %v3866, %v3866
        %v3899 = vpack.c.b16 %v3867, %v3867
        %v3900 = vpack.c.b16 %v3868, %v3868
        %v3901 = vpack.c.b16 %v3869, %v3869
        %v3902 = vpack.c.b16 %v3870, %v3870
        %v3903 = vpack.c.b16 %v3871, %v3871
        %v3904 = vpack.c.b16 %v3872, %v3872
        %v3905 = vpack.c.b16 %v3873, %v3873
        %v3906 = vpack.c.b16 %v3874, %v3874
        %v3907 = vpack.c.b16 %v3875, %v3875
        %v3908 = vpack.c.b16 %v3876, %v3876
        %v3909 = vpack.c.b16 %v3877, %v3877
        %v3910 = vpack.c.b16 %v3878, %v3878
        %v3911 = vpack.c.b16 %v3879, %v3879
        %v3912 = vpack.c.b16 %v3880, %v3880
        %v3913 = vpack.c.b16 %v3881, %v3881
        %v3914 = vpack.c.b16 %v3882, %v3882
        %v3915 = vpack.c.b16 %v3883, %v3883
        %v3916 = vpack.c.b16 %v3884, %v3884
        %vm3949 = vcmask 60416
        %3950 = vst.msk [vmem:[%s296] sm:$0xf] %vm3949, %v3885
        %3951 = vst.msk [vmem:[%s296 + $0x4] sm:$0xf] %vm3949, %v3886
        %3952 = vst.msk [vmem:[%s296 + $0x8] sm:$0xf] %vm3949, %v3887
        %3953 = vst.msk [vmem:[%s296 + $0xc] sm:$0xf] %vm3949, %v3888
        %3954 = vst.msk [vmem:[%s296 + $0x10] sm:$0xf] %vm3949, %v3889
        %3955 = vst.msk [vmem:[%s296 + $0x14] sm:$0xf] %vm3949, %v3890
        %3956 = vst.msk [vmem:[%s296 + $0x18] sm:$0xf] %vm3949, %v3891
        %3957 = vst.msk [vmem:[%s296 + $0x1c] sm:$0xf] %vm3949, %v3892
        %3958 = vst.msk [vmem:[%s296 + $0x20] sm:$0xf] %vm3949, %v3893
        %3959 = vst.msk [vmem:[%s296 + $0x24] sm:$0xf] %vm3949, %v3894
        %3960 = vst.msk [vmem:[%s296 + $0x28] sm:$0xf] %vm3949, %v3895
        %3961 = vst.msk [vmem:[%s296 + $0x2c] sm:$0xf] %vm3949, %v3896
        %3962 = vst.msk [vmem:[%s296 + $0x30] sm:$0xf] %vm3949, %v3897
        %3963 = vst.msk [vmem:[%s296 + $0x34] sm:$0xf] %vm3949, %v3898
        %3964 = vst.msk [vmem:[%s296 + $0x38] sm:$0xf] %vm3949, %v3899
        %3965 = vst.msk [vmem:[%s296 + $0x3c] sm:$0xf] %vm3949, %v3900
        %3966 = vst.msk [vmem:[%s296 + $0x40] sm:$0xf] %vm3949, %v3901
        %3967 = vst.msk [vmem:[%s296 + $0x44] sm:$0xf] %vm3949, %v3902
        %3968 = vst.msk [vmem:[%s296 + $0x48] sm:$0xf] %vm3949, %v3903
        %3969 = vst.msk [vmem:[%s296 + $0x4c] sm:$0xf] %vm3949, %v3904
        %3970 = vst.msk [vmem:[%s296 + $0x50] sm:$0xf] %vm3949, %v3905
        %3971 = vst.msk [vmem:[%s296 + $0x54] sm:$0xf] %vm3949, %v3906
        %3972 = vst.msk [vmem:[%s296 + $0x58] sm:$0xf] %vm3949, %v3907
        %3973 = vst.msk [vmem:[%s296 + $0x5c] sm:$0xf] %vm3949, %v3908
        %3974 = vst.msk [vmem:[%s296 + $0x60] sm:$0xf] %vm3949, %v3909
        %3975 = vst.msk [vmem:[%s296 + $0x64] sm:$0xf] %vm3949, %v3910
        %3976 = vst.msk [vmem:[%s296 + $0x68] sm:$0xf] %vm3949, %v3911
        %3977 = vst.msk [vmem:[%s296 + $0x6c] sm:$0xf] %vm3949, %v3912
        %3978 = vst.msk [vmem:[%s296 + $0x70] sm:$0xf] %vm3949, %v3913
        %3979 = vst.msk [vmem:[%s296 + $0x74] sm:$0xf] %vm3949, %v3914
        %3980 = vst.msk [vmem:[%s296 + $0x78] sm:$0xf] %vm3949, %v3915
        %3981 = vst.msk [vmem:[%s296 + $0x7c] sm:$0xf] %vm3949, %v3916
        %s3982 = sand.u32 %s142, 1
        %s3983 = scalar_lea.sflag [#allocation7], %s3982
        %s3984 = sand.u32 %s142, 1
        %s3985 = smul.addr %s3984, 128
        %s3986 = scalar_lea.vmem [#allocation14], %s3985
        // Predicated region
        $region83: #{tpu_custom_call.1} parent=39 // pred_check
          %p3987 = pneg %p152
        $region84: #{tpu_custom_call.1} parent=39 // pred_check_branch
          %3989 = sbr.rel (%p3987) target = $region86
        $region85: #{tpu_custom_call.1} parent=39 // pred_region
          %s3991 = ssub.s32 2048, 2048
          %3992 = vsyncadd %s3983, %s3991
          %s3993 = smul.addr %s24, 32
          %s3994 = smul.addr %s3993, 64
          %s3995 = scalar_lea.hbm %s5, %s3994
          %s3996 = sshll.u32 %s3986, 4
          %s3997 = int_to_ptr.vmem [resolvable:$true] %s3996
          %4002 = dma.vmem_to_hbm [thread:$0]  %s3997, 2048, %s3995, %s3983, 64, 64, 4
        $region86: #{tpu_custom_call.1} parent=39 // pred_fallthru
          _
      $region40: #{tpu_custom_call.1} parent=5 // pred_fallthru
        _
      %p4003 = scmp.le.s32.totalorder 2, %s19
      // Predicated region
      $region87: #{tpu_custom_call.1} parent=5 // pred_check
        %p4004 = pneg %p4003
      $region88: #{tpu_custom_call.1} parent=5 // pred_check_branch
        %4006 = sbr.rel (%p4004) target = $region90
      $region89: #{tpu_custom_call.1} parent=5 // pred_region
        %s4007 = ssub.s32 %s19, 2
        // Predicated region
        $region91: #{tpu_custom_call.1} parent=89 // pred_check
          %p4008 = pneg %p158
        $region92: #{tpu_custom_call.1} parent=89 // pred_check_branch
          %4010 = sbr.rel (%p4008) target = $region94
        $region93: #{tpu_custom_call.1} parent=89 // pred_region
          %s4011 = sand.u32 %s143, 1
          %s4012 = scalar_lea.sflag [#allocation7], %s4011
          %s4013 = sand.u32 %s143, 1
          %s4014 = smul.addr %s4013, 128
          %s4015 = scalar_lea.vmem [#allocation14], %s4014
          %4016 = dma.done %s4012, 2048
        $region94: #{tpu_custom_call.1} parent=89 // pred_fallthru
          _
      $region90: #{tpu_custom_call.1} parent=5 // pred_fallthru
        _
    $region6: #{tpu_custom_call.1} parent=1 // loop_footer
      %s23 = sadd.s32 1, %s19
    $region7: #{tpu_custom_call.1} parent=1 // loop_footer_branch
      %18 = sbr.rel target = $region3
    $region8: #{tpu_custom_call.1} parent=1 // loop_exit
      _
    %4017 = vsyncpa [#allocation6], 1
    %s4018 = scalar_lea.sflag [#allocation6], 1
    %4019 = vsyncpa %s4018, 1
    %4020 = vsyncpa [#allocation9], 1
    %4021 = vsyncpa [#allocation12], 1
    %4022 = vsyncpa [#allocation7], 1
    %s4023 = scalar_lea.sflag [#allocation7], 1
    %4024 = vsyncpa %s4023, 1

</llo_original>
